<compile_context>
chip_gen: v7x
topology: tpu7x:2x2x1
jax: 0.10.0
libtpu: 0.0.40
codegen_flags: <defaults>
</compile_context>

<pallas_src>
import jax
import jax.numpy as jnp
from jax import lax
from jax.experimental import pallas as pl
from jax.experimental.pallas import tpu as pltpu


_VMEM_LIMIT = 32 * 1024 * 1024   # sized against v7x (64 MiB physical / 32 MiB scoped)
_TM_MAX = 512                    # rows per tile: ~85% of HBM roofline per Pallas notes


# ----------------------------- small helpers -----------------------------

def _round_up(x, m):
    return (x + m - 1) // m * m


def _choose_tm(m):
    return _TM_MAX if m >= _TM_MAX else _round_up(m, 8)


def _pad_rows(a, mp):
    return a if a.shape[0] == mp else jnp.pad(a, ((0, mp - a.shape[0]), (0, 0)))


def _mosaic_params(semantics):
    return pltpu.CompilerParams(dimension_semantics=semantics,
                                vmem_limit_bytes=_VMEM_LIMIT)


def _im2col(x, k, stride, pad):
    # TODO(synk): im2col is still materialized by XLA; folding the k*k taps into the
    # Pallas kernel with halo-tiled NHWC blocks would cut activation HBM traffic ~k^2.
    b, h, w, c = x.shape
    if pad:
        x = jnp.pad(x, ((0, 0), (pad, pad), (pad, pad), (0, 0)))
    ho = (h + 2 * pad - k) // stride + 1
    wo = (w + 2 * pad - k) // stride + 1
    cols = []
    for i in range(k):
        for j in range(k):
            cols.append(x[:, i:i + (ho - 1) * stride + 1:stride,
                          j:j + (wo - 1) * stride + 1:stride, :][..., None, :])
    patches = jnp.concatenate(cols, axis=3)            # (B, Ho, Wo, k*k, C)
    return patches.reshape(b * ho * wo, k * k * c), (b, ho, wo)


# ----------------------------- fused matmul kernel -----------------------------

def _make_matmul_kernel(relu_out):
    def kernel(x_ref, w_ref, b_ref, o_ref):
        y = jnp.dot(x_ref[...].astype(jnp.bfloat16), w_ref[...],
                    preferred_element_type=jnp.float32)          # bf16 MXU, f32 acc
        y = y + b_ref[...]
        if relu_out:
            y = jnp.maximum(y, 0.0)
        o_ref[...] = y
    return kernel


def matmul_bias_act(x, w, b, relu_out=False):
    """y = [relu]( x @ w + b ), gridded over rows; w: (K, N) bf16, b: (1, N) f32."""
    m, k = x.shape
    n = w.shape[1]
    tm = _choose_tm(m)
    mp = _round_up(m, tm)
    out = pl.pallas_call(
        _make_matmul_kernel(relu_out),
        out_shape=jax.ShapeDtypeStruct((mp, n), jnp.float32),
        grid=(mp // tm,),
        in_specs=[
            pl.BlockSpec((tm, k), lambda i: (i, 0)),
            pl.BlockSpec((k, n), lambda i: (0, 0)),    # resident weight
            pl.BlockSpec((1, n), lambda i: (0, 0)),    # resident bias
        ],
        out_specs=pl.BlockSpec((tm, n), lambda i: (i, 0)),
        compiler_params=_mosaic_params(("parallel",)),
    )(_pad_rows(x, mp), w, b)
    return out[:m] if mp != m else out


def conv2d(x, wmat, bias, k, stride, pad, relu_out=False):
    cols, (b, ho, wo) = _im2col(x, k, stride, pad)
    y = matmul_bias_act(cols, wmat, bias, relu_out=relu_out)
    return y.reshape(b, ho, wo, wmat.shape[1])


def conv_transpose2d(x, wp, bp):
    """ConvTranspose2d(4, stride=2, padding=1) via sub-pixel decomposition: one matmul
    with a packed lane-dense (N = 4*Cout) output, interleaved back to (2H, 2W)."""
    b, h, w, _ = x.shape
    cols, _ = _im2col(x, 3, 1, 1)          # 3x3 neighborhood covers all 4 sub-convs
    cout = wp.shape[1] // 4
    y = matmul_bias_act(cols, wp, bp)      # (B*H*W, 4*Cout)
    y = y.reshape(b, h, w, 2, 2, cout)
    return jnp.transpose(y, (0, 1, 3, 2, 4, 5)).reshape(b, 2 * h, 2 * w, cout)


# ----------------------------- fused ResBlock kernel -----------------------------

def _make_resblock_kernel(relu_out):
    # y = [relu]( conv1x1( relu( conv3x3( relu(x) ) ) ) + x ), both convs as dots.
    def kernel(p_ref, x_ref, w1_ref, b1_ref, w2_ref, b2_ref, o_ref):
        p = jnp.maximum(p_ref[...], 0.0)                          # ReLU before 3x3
        h = jnp.dot(p.astype(jnp.bfloat16), w1_ref[...],
                    preferred_element_type=jnp.float32) + b1_ref[...]
        h = jnp.maximum(h, 0.0)                                   # ReLU before 1x1
        y = jnp.dot(h.astype(jnp.bfloat16), w2_ref[...],
                    preferred_element_type=jnp.float32) + b2_ref[...]
        y = y + x_ref[...]                                        # residual
        if relu_out:
            y = jnp.maximum(y, 0.0)
        o_ref[...] = y
    return kernel


def resblock(x, p, relu_out=False):
    b, h, w, c = x.shape
    patches, _ = _im2col(x, 3, 1, 1)                   # (M, 9C)
    xres = x.reshape(b * h * w, c)
    m, k9 = patches.shape
    r = p['w1'].shape[1]
    tm = _choose_tm(m)
    mp = _round_up(m, tm)
    out = pl.pallas_call(
        _make_resblock_kernel(relu_out),
        out_shape=jax.ShapeDtypeStruct((mp, c), jnp.float32),
        grid=(mp // tm,),
        in_specs=[
            pl.BlockSpec((tm, k9), lambda i: (i, 0)),
            pl.BlockSpec((tm, c), lambda i: (i, 0)),
            pl.BlockSpec((k9, r), lambda i: (0, 0)),
            pl.BlockSpec((1, r), lambda i: (0, 0)),
            pl.BlockSpec((r, c), lambda i: (0, 0)),
            pl.BlockSpec((1, c), lambda i: (0, 0)),
        ],
        out_specs=pl.BlockSpec((tm, c), lambda i: (i, 0)),
        input_output_aliases={1: 0},                   # residual buffer reused for output
        compiler_params=_mosaic_params(("parallel",)),
    )(_pad_rows(patches, mp), _pad_rows(xres, mp),
      p['w1'], p['b1'], p['w2'], p['b2'])
    out = out[:m] if mp != m else out
    return out.reshape(b, h, w, c)


# ----------------------------- fused projection + VQ kernel -----------------------------

def _make_quantize_kernel(tm, m_true, d, n_embed):
    inv = 1.0 / float(m_true * d)

    def kernel(zin_ref, wq_ref, bq_ref, e_ref, q_ref, diff_ref, acc_ref):
        i = pl.program_id(0)

        @pl.when(i == 0)
        def _():
            acc_ref[...] = jnp.zeros_like(acc_ref)

        # projection + distance math kept in f32 so the argmin matches the reference
        z = jnp.dot(zin_ref[...], wq_ref[...],
                    preferred_element_type=jnp.float32) + bq_ref[...]
        e = e_ref[...]                                          # (D, n_embed) resident
        z_sq = jnp.sum(z * z, axis=1, keepdims=True)
        e_sq = jnp.sum(e * e, axis=0, keepdims=True)
        zd = jnp.dot(z, e, preferred_element_type=jnp.float32)
        dist = z_sq - 2.0 * zd + e_sq                           # (TM, n_embed)
        neg = -dist
        mmax = jnp.max(neg, axis=1, keepdims=True)
        iota = lax.broadcasted_iota(jnp.int32, neg.shape, 1)
        idx = jnp.min(jnp.where(neg >= mmax, iota, jnp.int32(n_embed)),
                      axis=1, keepdims=True)                    # argmin, first-index ties
        onehot = (iota == idx).astype(jnp.float32)
        q = lax.dot_general(onehot, e, (((1,), (1,)), ((), ())),
                            preferred_element_type=jnp.float32)  # codebook gather (MXU)
        q_ref[...] = q

        dqz = q - z
        row = i * tm + lax.broadcasted_iota(jnp.int32, (tm, 1), 0)
        valid = (row < m_true).astype(jnp.float32)              # mask padded rows
        acc_ref[...] = acc_ref[...] + jnp.sum(dqz * dqz * valid)

        @pl.when(i == pl.num_programs(0) - 1)
        def _():
            diff_ref[...] = acc_ref[...] * jnp.float32(inv)

    return kernel


def quantize_project(x, wq, bq, embed):
    """Fused 1x1 projection + eval-mode vector quantization. Returns (q NHWC, mse)."""
    b, h, w, cin = x.shape
    m = b * h * w
    d = wq.shape[1]
    n_embed = embed.shape[1]
    tm = _choose_tm(m)
    mp = _round_up(m, tm)
    q, diff = pl.pallas_call(
        _make_quantize_kernel(tm, m, d, n_embed),
        out_shape=(jax.ShapeDtypeStruct((mp, d), jnp.float32),
                   jax.ShapeDtypeStruct((1, 1), jnp.float32)),
        grid=(mp // tm,),
        in_specs=[
            pl.BlockSpec((tm, cin), lambda i: (i, 0)),
            pl.BlockSpec((cin, d), lambda i: (0, 0)),
            pl.BlockSpec((1, d), lambda i: (0, 0)),
            pl.BlockSpec((d, n_embed), lambda i: (0, 0)),
        ],
        out_specs=(pl.BlockSpec((tm, d), lambda i: (i, 0)),
                   pl.BlockSpec((1, 1), lambda i: (0, 0))),
        scratch_shapes=[pltpu.VMEM((1, 1), jnp.float32)],
        # MSE accumulates across the M grid -> sequential ("arbitrary") axis
        compiler_params=_mosaic_params(("arbitrary",)),
    )(_pad_rows(x.reshape(m, cin), mp), wq, bq, embed)
    q = q[:m] if mp != m else q
    # eval-mode Quantize: straight-through estimator is a numeric no-op.
    # TODO(synk): training-only EMA codebook / cluster_size buffer updates not implemented.
    return q.reshape(b, h, w, d), diff[0, 0]


# ----------------------------- HVQEncoder forward -----------------------------

def hvq_encoder_forward(p, x_nchw):
    x = jnp.transpose(x_nchw, (0, 2, 3, 1)).astype(jnp.float32)   # NHWC
    batch = x.shape[0]

    # Encoder bottom (stride=4): conv4s2+ReLU -> conv4s2+ReLU -> conv3 -> res x2 -> ReLU
    pb = p['enc_b']
    h = conv2d(x, pb['c1_w'], pb['c1_b'], 4, 2, 1, relu_out=True)
    h = conv2d(h, pb['c2_w'], pb['c2_b'], 4, 2, 1, relu_out=True)
    h = conv2d(h, pb['c3_w'], pb['c3_b'], 3, 1, 1)
    h = resblock(h, pb['res0'])
    enc_b = resblock(h, pb['res1'], relu_out=True)

    # Encoder top (stride=2): conv4s2+ReLU -> conv3 -> res x2 -> ReLU
    pt = p['enc_t']
    h = conv2d(enc_b, pt['c1_w'], pt['c1_b'], 4, 2, 1, relu_out=True)
    h = conv2d(h, pt['c2_w'], pt['c2_b'], 3, 1, 1)
    h = resblock(h, pt['res0'])
    enc_t = resblock(h, pt['res1'], relu_out=True)

    # top quantization (1x1 projection fused with VQ)
    quant_t, diff_t = quantize_project(enc_t, p['qct_w'], p['qct_b'], p['embed_t'])

    # top decoder: conv3 -> res x2 -> ReLU -> ConvT(4, s2, p1)
    pd = p['dec_t']
    h = conv2d(quant_t, pd['c1_w'], pd['c1_b'], 3, 1, 1)
    h = resblock(h, pd['res0'])
    h = resblock(h, pd['res1'], relu_out=True)
    dec_t = conv_transpose2d(h, pd['ct_w'], pd['ct_b'])

    enc_b_cat = jnp.concatenate([dec_t, enc_b], axis=-1)          # channel cat (NHWC)

    # bottom quantization
    quant_b, diff_b = quantize_project(enc_b_cat, p['qcb_w'], p['qcb_b'], p['embed_b'])

    upsample_t = conv_transpose2d(quant_t, p['up_w'], p['up_b'])
    quant = jnp.concatenate([upsample_t, quant_b], axis=-1)
    quant = jnp.transpose(quant, (0, 3, 1, 2))                    # back to NCHW

    enc_t_flat = jnp.transpose(enc_t, (0, 3, 1, 2)).reshape(batch, -1)
    enc_b_flat = jnp.transpose(enc_b_cat, (0, 3, 1, 2)).reshape(batch, -1)
    enc_feat = jnp.concatenate([enc_t_flat, enc_b_flat], axis=1)

    diff = (diff_b + diff_t).reshape(1)
    return quant, diff, enc_feat


# ----------------------------- params (raw PyTorch layout) -----------------------------

def init_params(key, in_channel=3, channel=32, n_res_channel=16, embed_dim=32, n_embed=64):
    keys = iter(jax.random.split(key, 96))

    def nrm(*shape):
        return 0.05 * jax.random.normal(next(keys), shape, jnp.float32)

    def res(ch):
        return dict(w1=nrm(n_res_channel, ch, 3, 3), b1=nrm(n_res_channel),
                    w2=nrm(ch, n_res_channel, 1, 1), b2=nrm(ch))

    return dict(
        enc_b=dict(
            c1_w=nrm(channel // 2, in_channel, 4, 4), c1_b=nrm(channel // 2),
            c2_w=nrm(channel, channel // 2, 4, 4), c2_b=nrm(channel),
            c3_w=nrm(channel, channel, 3, 3), c3_b=nrm(channel),
            res0=res(channel), res1=res(channel)),
        enc_t=dict(
            c1_w=nrm(channel // 2, channel, 4, 4), c1_b=nrm(channel // 2),
            c2_w=nrm(channel, channel // 2, 3, 3), c2_b=nrm(channel),
            res0=res(channel), res1=res(channel)),
        qct_w=nrm(embed_dim, channel, 1, 1), qct_b=nrm(embed_dim),
        embed_t=jax.random.normal(next(keys), (embed_dim, n_embed), jnp.float32),
        dec_t=dict(
            c1_w=nrm(channel, embed_dim, 3, 3), c1_b=nrm(channel),
            res0=res(channel), res1=res(channel),
            ct_w=nrm(channel, embed_dim, 4, 4), ct_b=nrm(embed_dim)),
        qcb_w=nrm(embed_dim, embed_dim + channel, 1, 1), qcb_b=nrm(embed_dim),
        embed_b=jax.random.normal(next(keys), (embed_dim, n_embed), jnp.float32),
        up_w=nrm(embed_dim, embed_dim, 4, 4), up_b=nrm(embed_dim),
    )


# ----------------------------- one-time weight re-layout -----------------------------

def _conv_wmat(w):
    """PyTorch Conv2d weight (out, in, kh, kw) -> (kh*kw*in, out), bf16 for the MXU."""
    return jnp.transpose(w, (2, 3, 1, 0)).reshape(-1, w.shape[0]).astype(jnp.bfloat16)


def _proj_wmat(w):
    """1x1 quantize-projection weight kept f32 so VQ distances match the reference."""
    return jnp.transpose(w, (2, 3, 1, 0)).reshape(-1, w.shape[0]).astype(jnp.float32)


def _bias(b):
    return b.reshape(1, -1).astype(jnp.float32)


def _convT_packed(w, b):
    """ConvTranspose2d(4, s2, p1) weight (in, out, 4, 4) -> packed sub-pixel matmul
    weight (9*in, 4*out): column group g = 2*rh + rw produces output pixel (2m+rh, 2n+rw)
    from the 3x3 input neighborhood of (m, n); taps a sub-conv doesn't use are zero."""
    ci, co = w.shape[0], w.shape[1]
    # (sub-pixel parity r, tap index t in 0..2 [input offset t-1]) -> transposed-conv k idx
    kmap = {(0, 0): 3, (0, 1): 1, (1, 1): 2, (1, 2): 0}
    wp = jnp.zeros((3, 3, ci, 2, 2, co), jnp.float32)
    for (rh, th), kh in kmap.items():
        for (rw, tw), kw in kmap.items():
            wp = wp.at[th, tw, :, rh, rw, :].set(w[:, :, kh, kw])
    wp = wp.reshape(9 * ci, 4 * co).astype(jnp.bfloat16)
    bp = jnp.concatenate([b] * 4).reshape(1, -1).astype(jnp.float32)
    return wp, bp


def prepare_params(raw):
    """One-time weight re-layout / packing / bf16 cast, hoisted out of the jitted forward."""
    def res(r):
        return dict(w1=_conv_wmat(r['w1']), b1=_bias(r['b1']),
                    w2=_conv_wmat(r['w2']), b2=_bias(r['b2']))

    eb, et, dt = raw['enc_b'], raw['enc_t'], raw['dec_t']
    ct_w, ct_b = _convT_packed(dt['ct_w'], dt['ct_b'])
    up_w, up_b = _convT_packed(raw['up_w'], raw['up_b'])
    return dict(
        enc_b=dict(c1_w=_conv_wmat(eb['c1_w']), c1_b=_bias(eb['c1_b']),
                   c2_w=_conv_wmat(eb['c2_w']), c2_b=_bias(eb['c2_b']),
                   c3_w=_conv_wmat(eb['c3_w']), c3_b=_bias(eb['c3_b']),
                   res0=res(eb['res0']), res1=res(eb['res1'])),
        enc_t=dict(c1_w=_conv_wmat(et['c1_w']), c1_b=_bias(et['c1_b']),
                   c2_w=_conv_wmat(et['c2_w']), c2_b=_bias(et['c2_b']),
                   res0=res(et['res0']), res1=res(et['res1'])),
        qct_w=_proj_wmat(raw['qct_w']), qct_b=_bias(raw['qct_b']),
        embed_t=raw['embed_t'].astype(jnp.float32),
        dec_t=dict(c1_w=_conv_wmat(dt['c1_w']), c1_b=_bias(dt['c1_b']),
                   res0=res(dt['res0']), res1=res(dt['res1']),
                   ct_w=ct_w, ct_b=ct_b),
        qcb_w=_proj_wmat(raw['qcb_w']), qcb_b=_bias(raw['qcb_b']),
        embed_b=raw['embed_b'].astype(jnp.float32),
        up_w=up_w, up_b=up_b,
    )


if __name__ == "__main__":
    key = jax.random.PRNGKey(0)
    pkey, xkey = jax.random.split(key)
    # small config: in_channel=3, channel=32, n_res_block=2, n_res_channel=16,
    #               embed_dim=32, n_embed=64
    raw_params = init_params(pkey)
    params = prepare_params(raw_params)                # one-time layout prep, outside jit
    x = jax.random.normal(xkey, (2, 3, 16, 16), jnp.float32)      # NCHW like PyTorch

    fwd = jax.jit(hvq_encoder_forward)
    quant, diff, enc_feat = fwd(params, x)
    jax.block_until_ready((quant, diff, enc_feat))

    assert quant.shape == (2, 2 * 32, 4, 4)            # (B, embed_dim*2, H/4, W/4)
    assert diff.shape == (1,)
    assert enc_feat.shape == (2, 32 * 2 * 2 + (32 + 32) * 4 * 4)
    print("KERNEL_OK")
</pallas_src>

<mosaic_0001>
module attributes {stable_mosaic.version = 11 : i64} {
  func.func @kernel(%arg0: i32, %arg1: memref<128x48xf32, #tpu.memory_space<vmem>>, %arg2: memref<48x16xbf16, #tpu.memory_space<vmem>>, %arg3: memref<1x16xf32, #tpu.memory_space<vmem>>, %arg4: memref<128x16xf32, #tpu.memory_space<vmem>>) attributes {dimension_semantics = [#tpu.dimension_semantics<parallel>], iteration_bounds = array<i64: 1>, scalar_prefetch = 0 : i64, scratch_operands = 0 : i64, tpu.core_type = #tpu.core_type<tc>, window_params = [{transform_indices = @transform_0, window_bounds = array<i64: 128, 48>}, {pipeline_mode = #tpu.pipeline_mode<synchronous>, transform_indices = @transform_1, window_bounds = array<i64: 48, 16>}, {pipeline_mode = #tpu.pipeline_mode<synchronous>, transform_indices = @transform_2, window_bounds = array<i64: 1, 16>}, {transform_indices = @transform_3, window_bounds = array<i64: 128, 16>}]} {
    %c0 = arith.constant 0 : index
    %c0_0 = arith.constant 0 : index
    %0 = vector.load %arg1[%c0, %c0_0] : memref<128x48xf32, #tpu.memory_space<vmem>>, vector<128x48xf32>
    %1 = arith.truncf %0 : vector<128x48xf32> to vector<128x48xbf16>
    %c0_1 = arith.constant 0 : index
    %c0_2 = arith.constant 0 : index
    %2 = vector.load %arg2[%c0_1, %c0_2] : memref<48x16xbf16, #tpu.memory_space<vmem>>, vector<48x16xbf16>
    %cst = arith.constant dense<0.000000e+00> : vector<128x16xf32>
    %3 = tpu.matmul %1, %2, %cst {dimension_numbers = #tpu.dot_dimension_numbers<[1], [0], [0], [1], [0, 0, 1, 1], [], []>} : vector<128x48xbf16>, vector<48x16xbf16>, vector<128x16xf32> -> vector<128x16xf32>
    %c0_3 = arith.constant 0 : index
    %c0_4 = arith.constant 0 : index
    %4 = vector.load %arg3[%c0_3, %c0_4] : memref<1x16xf32, #tpu.memory_space<vmem>>, vector<1x16xf32>
    %5 = vector.broadcast %4 : vector<1x16xf32> to vector<128x16xf32>
    %6 = arith.addf %3, %5 : vector<128x16xf32>
    %cst_5 = arith.constant 0.000000e+00 : f32
    %7 = vector.broadcast %cst_5 : f32 to vector<128x16xf32>
    %8 = arith.maximumf %6, %7 : vector<128x16xf32>
    %c0_6 = arith.constant 0 : index
    %c0_7 = arith.constant 0 : index
    %9 = vector.load %arg4[%c0_6, %c0_7] : memref<128x16xf32, #tpu.memory_space<vmem>>, vector<128x16xf32>
    tpu.vector_store %arg4[%c0_6, %c0_7], %8 {strides = array<i32>} : memref<128x16xf32, #tpu.memory_space<vmem>>, vector<128x16xf32>,
    return
  }
  func.func @transform_0(%arg0: i32) -> (i32, i32) {
    %c0_i32 = arith.constant 0 : i32
    %c0_i32_0 = arith.constant 0 : i32
    return %arg0, %c0_i32 : i32, i32
  }
  func.func @transform_1(%arg0: i32) -> (i32, i32) {
    %c0_i32 = arith.constant 0 : i32
    %c0_i32_0 = arith.constant 0 : i32
    %c0_i32_1 = arith.constant 0 : i32
    return %c0_i32, %c0_i32_0 : i32, i32
  }
  func.func @transform_2(%arg0: i32) -> (i32, i32) {
    %c0_i32 = arith.constant 0 : i32
    %c0_i32_0 = arith.constant 0 : i32
    %c0_i32_1 = arith.constant 0 : i32
    return %c0_i32, %c0_i32_0 : i32, i32
  }
  func.func @transform_3(%arg0: i32) -> (i32, i32) {
    %c0_i32 = arith.constant 0 : i32
    %c0_i32_0 = arith.constant 0 : i32
    return %arg0, %c0_i32 : i32, i32
  }
}

module attributes {stable_mosaic.version = 11 : i64} {
  func.func @kernel(%arg0: i32, %arg1: memref<32x256xf32, #tpu.memory_space<vmem>>, %arg2: memref<256x32xbf16, #tpu.memory_space<vmem>>, %arg3: memref<1x32xf32, #tpu.memory_space<vmem>>, %arg4: memref<32x32xf32, #tpu.memory_space<vmem>>) attributes {dimension_semantics = [#tpu.dimension_semantics<parallel>], iteration_bounds = array<i64: 1>, scalar_prefetch = 0 : i64, scratch_operands = 0 : i64, tpu.core_type = #tpu.core_type<tc>, window_params = [{transform_indices = @transform_0, window_bounds = array<i64: 32, 256>}, {pipeline_mode = #tpu.pipeline_mode<synchronous>, transform_indices = @transform_1, window_bounds = array<i64: 256, 32>}, {pipeline_mode = #tpu.pipeline_mode<synchronous>, transform_indices = @transform_2, window_bounds = array<i64: 1, 32>}, {transform_indices = @transform_3, window_bounds = array<i64: 32, 32>}]} {
    %c0 = arith.constant 0 : index
    %c0_0 = arith.constant 0 : index
    %0 = vector.load %arg1[%c0, %c0_0] : memref<32x256xf32, #tpu.memory_space<vmem>>, vector<32x256xf32>
    %1 = arith.truncf %0 : vector<32x256xf32> to vector<32x256xbf16>
    %c0_1 = arith.constant 0 : index
    %c0_2 = arith.constant 0 : index
    %2 = vector.load %arg2[%c0_1, %c0_2] : memref<256x32xbf16, #tpu.memory_space<vmem>>, vector<256x32xbf16>
    %cst = arith.constant dense<0.000000e+00> : vector<32x32xf32>
    %3 = tpu.matmul %1, %2, %cst {dimension_numbers = #tpu.dot_dimension_numbers<[1], [0], [0], [1], [0, 0, 1, 1], [], []>} : vector<32x256xbf16>, vector<256x32xbf16>, vector<32x32xf32> -> vector<32x32xf32>
    %c0_3 = arith.constant 0 : index
    %c0_4 = arith.constant 0 : index
    %4 = vector.load %arg3[%c0_3, %c0_4] : memref<1x32xf32, #tpu.memory_space<vmem>>, vector<1x32xf32>
    %5 = vector.broadcast %4 : vector<1x32xf32> to vector<32x32xf32>
    %6 = arith.addf %3, %5 : vector<32x32xf32>
    %cst_5 = arith.constant 0.000000e+00 : f32
    %7 = vector.broadcast %cst_5 : f32 to vector<32x32xf32>
    %8 = arith.maximumf %6, %7 : vector<32x32xf32>
    %c0_6 = arith.constant 0 : index
    %c0_7 = arith.constant 0 : index
    %9 = vector.load %arg4[%c0_6, %c0_7] : memref<32x32xf32, #tpu.memory_space<vmem>>, vector<32x32xf32>
    tpu.vector_store %arg4[%c0_6, %c0_7], %8 {strides = array<i32>} : memref<32x32xf32, #tpu.memory_space<vmem>>, vector<32x32xf32>,
    return
  }
  func.func @transform_0(%arg0: i32) -> (i32, i32) {
    %c0_i32 = arith.constant 0 : i32
    %c0_i32_0 = arith.constant 0 : i32
    return %arg0, %c0_i32 : i32, i32
  }
  func.func @transform_1(%arg0: i32) -> (i32, i32) {
    %c0_i32 = arith.constant 0 : i32
    %c0_i32_0 = arith.constant 0 : i32
    %c0_i32_1 = arith.constant 0 : i32
    return %c0_i32, %c0_i32_0 : i32, i32
  }
  func.func @transform_2(%arg0: i32) -> (i32, i32) {
    %c0_i32 = arith.constant 0 : i32
    %c0_i32_0 = arith.constant 0 : i32
    %c0_i32_1 = arith.constant 0 : i32
    return %c0_i32, %c0_i32_0 : i32, i32
  }
  func.func @transform_3(%arg0: i32) -> (i32, i32) {
    %c0_i32 = arith.constant 0 : i32
    %c0_i32_0 = arith.constant 0 : i32
    return %arg0, %c0_i32 : i32, i32
  }
}

module attributes {stable_mosaic.version = 11 : i64} {
  func.func @kernel(%arg0: i32, %arg1: memref<32x288xf32, #tpu.memory_space<vmem>>, %arg2: memref<288x32xbf16, #tpu.memory_space<vmem>>, %arg3: memref<1x32xf32, #tpu.memory_space<vmem>>, %arg4: memref<32x32xf32, #tpu.memory_space<vmem>>) attributes {dimension_semantics = [#tpu.dimension_semantics<parallel>], iteration_bounds = array<i64: 1>, scalar_prefetch = 0 : i64, scratch_operands = 0 : i64, tpu.core_type = #tpu.core_type<tc>, window_params = [{transform_indices = @transform_0, window_bounds = array<i64: 32, 288>}, {pipeline_mode = #tpu.pipeline_mode<synchronous>, transform_indices = @transform_1, window_bounds = array<i64: 288, 32>}, {pipeline_mode = #tpu.pipeline_mode<synchronous>, transform_indices = @transform_2, window_bounds = array<i64: 1, 32>}, {transform_indices = @transform_3, window_bounds = array<i64: 32, 32>}]} {
    %c0 = arith.constant 0 : index
    %c0_0 = arith.constant 0 : index
    %0 = vector.load %arg1[%c0, %c0_0] : memref<32x288xf32, #tpu.memory_space<vmem>>, vector<32x288xf32>
    %1 = arith.truncf %0 : vector<32x288xf32> to vector<32x288xbf16>
    %c0_1 = arith.constant 0 : index
    %c0_2 = arith.constant 0 : index
    %2 = vector.load %arg2[%c0_1, %c0_2] : memref<288x32xbf16, #tpu.memory_space<vmem>>, vector<288x32xbf16>
    %cst = arith.constant dense<0.000000e+00> : vector<32x32xf32>
    %3 = tpu.matmul %1, %2, %cst {dimension_numbers = #tpu.dot_dimension_numbers<[1], [0], [0], [1], [0, 0, 1, 1], [], []>} : vector<32x288xbf16>, vector<288x32xbf16>, vector<32x32xf32> -> vector<32x32xf32>
    %c0_3 = arith.constant 0 : index
    %c0_4 = arith.constant 0 : index
    %4 = vector.load %arg3[%c0_3, %c0_4] : memref<1x32xf32, #tpu.memory_space<vmem>>, vector<1x32xf32>
    %5 = vector.broadcast %4 : vector<1x32xf32> to vector<32x32xf32>
    %6 = arith.addf %3, %5 : vector<32x32xf32>
    %c0_5 = arith.constant 0 : index
    %c0_6 = arith.constant 0 : index
    %7 = vector.load %arg4[%c0_5, %c0_6] : memref<32x32xf32, #tpu.memory_space<vmem>>, vector<32x32xf32>
    tpu.vector_store %arg4[%c0_5, %c0_6], %6 {strides = array<i32>} : memref<32x32xf32, #tpu.memory_space<vmem>>, vector<32x32xf32>,
    return
  }
  func.func @transform_0(%arg0: i32) -> (i32, i32) {
    %c0_i32 = arith.constant 0 : i32
    %c0_i32_0 = arith.constant 0 : i32
    return %arg0, %c0_i32 : i32, i32
  }
  func.func @transform_1(%arg0: i32) -> (i32, i32) {
    %c0_i32 = arith.constant 0 : i32
    %c0_i32_0 = arith.constant 0 : i32
    %c0_i32_1 = arith.constant 0 : i32
    return %c0_i32, %c0_i32_0 : i32, i32
  }
  func.func @transform_2(%arg0: i32) -> (i32, i32) {
    %c0_i32 = arith.constant 0 : i32
    %c0_i32_0 = arith.constant 0 : i32
    %c0_i32_1 = arith.constant 0 : i32
    return %c0_i32, %c0_i32_0 : i32, i32
  }
  func.func @transform_3(%arg0: i32) -> (i32, i32) {
    %c0_i32 = arith.constant 0 : i32
    %c0_i32_0 = arith.constant 0 : i32
    return %arg0, %c0_i32 : i32, i32
  }
}

module attributes {stable_mosaic.version = 11 : i64} {
  func.func @kernel(%arg0: i32, %arg1: memref<32x288xf32, #tpu.memory_space<vmem>>, %arg2: memref<32x32xf32, #tpu.memory_space<vmem>>, %arg3: memref<288x16xbf16, #tpu.memory_space<vmem>>, %arg4: memref<1x16xf32, #tpu.memory_space<vmem>>, %arg5: memref<16x32xbf16, #tpu.memory_space<vmem>>, %arg6: memref<1x32xf32, #tpu.memory_space<vmem>>, %arg7: memref<32x32xf32, #tpu.memory_space<vmem>>) attributes {dimension_semantics = [#tpu.dimension_semantics<parallel>], iteration_bounds = array<i64: 1>, scalar_prefetch = 0 : i64, scratch_operands = 0 : i64, tpu.core_type = #tpu.core_type<tc>, window_params = [{transform_indices = @transform_0, window_bounds = array<i64: 32, 288>}, {transform_indices = @transform_1, window_bounds = array<i64: 32, 32>}, {pipeline_mode = #tpu.pipeline_mode<synchronous>, transform_indices = @transform_2, window_bounds = array<i64: 288, 16>}, {pipeline_mode = #tpu.pipeline_mode<synchronous>, transform_indices = @transform_3, window_bounds = array<i64: 1, 16>}, {pipeline_mode = #tpu.pipeline_mode<synchronous>, transform_indices = @transform_4, window_bounds = array<i64: 16, 32>}, {pipeline_mode = #tpu.pipeline_mode<synchronous>, transform_indices = @transform_5, window_bounds = array<i64: 1, 32>}, {transform_indices = @transform_6, window_bounds = array<i64: 32, 32>}]} {
    %c0 = arith.constant 0 : index
    %c0_0 = arith.constant 0 : index
    %0 = vector.load %arg1[%c0, %c0_0] : memref<32x288xf32, #tpu.memory_space<vmem>>, vector<32x288xf32>
    %cst = arith.constant 0.000000e+00 : f32
    %1 = vector.broadcast %cst : f32 to vector<32x288xf32>
    %2 = arith.maximumf %0, %1 : vector<32x288xf32>
    %3 = arith.truncf %2 : vector<32x288xf32> to vector<32x288xbf16>
    %c0_1 = arith.constant 0 : index
    %c0_2 = arith.constant 0 : index
    %4 = vector.load %arg3[%c0_1, %c0_2] : memref<288x16xbf16, #tpu.memory_space<vmem>>, vector<288x16xbf16>
    %cst_3 = arith.constant dense<0.000000e+00> : vector<32x16xf32>
    %5 = tpu.matmul %3, %4, %cst_3 {dimension_numbers = #tpu.dot_dimension_numbers<[1], [0], [0], [1], [0, 0, 1, 1], [], []>} : vector<32x288xbf16>, vector<288x16xbf16>, vector<32x16xf32> -> vector<32x16xf32>
    %c0_4 = arith.constant 0 : index
    %c0_5 = arith.constant 0 : index
    %6 = vector.load %arg4[%c0_4, %c0_5] : memref<1x16xf32, #tpu.memory_space<vmem>>, vector<1x16xf32>
    %7 = vector.broadcast %6 : vector<1x16xf32> to vector<32x16xf32>
    %8 = arith.addf %5, %7 : vector<32x16xf32>
    %cst_6 = arith.constant 0.000000e+00 : f32
    %9 = vector.broadcast %cst_6 : f32 to vector<32x16xf32>
    %10 = arith.maximumf %8, %9 : vector<32x16xf32>
    %11 = arith.truncf %10 : vector<32x16xf32> to vector<32x16xbf16>
    %c0_7 = arith.constant 0 : index
    %c0_8 = arith.constant 0 : index
    %12 = vector.load %arg5[%c0_7, %c0_8] : memref<16x32xbf16, #tpu.memory_space<vmem>>, vector<16x32xbf16>
    %cst_9 = arith.constant dense<0.000000e+00> : vector<32x32xf32>
    %13 = tpu.matmul %11, %12, %cst_9 {dimension_numbers = #tpu.dot_dimension_numbers<[1], [0], [0], [1], [0, 0, 1, 1], [], []>} : vector<32x16xbf16>, vector<16x32xbf16>, vector<32x32xf32> -> vector<32x32xf32>
    %c0_10 = arith.constant 0 : index
    %c0_11 = arith.constant 0 : index
    %14 = vector.load %arg6[%c0_10, %c0_11] : memref<1x32xf32, #tpu.memory_space<vmem>>, vector<1x32xf32>
    %15 = vector.broadcast %14 : vector<1x32xf32> to vector<32x32xf32>
    %16 = arith.addf %13, %15 : vector<32x32xf32>
    %c0_12 = arith.constant 0 : index
    %c0_13 = arith.constant 0 : index
    %17 = vector.load %arg2[%c0_12, %c0_13] : memref<32x32xf32, #tpu.memory_space<vmem>>, vector<32x32xf32>
    %18 = arith.addf %16, %17 : vector<32x32xf32>
    %c0_14 = arith.constant 0 : index
    %c0_15 = arith.constant 0 : index
    %19 = vector.load %arg7[%c0_14, %c0_15] : memref<32x32xf32, #tpu.memory_space<vmem>>, vector<32x32xf32>
    tpu.vector_store %arg7[%c0_14, %c0_15], %18 {strides = array<i32>} : memref<32x32xf32, #tpu.memory_space<vmem>>, vector<32x32xf32>,
    return
  }
  func.func @transform_0(%arg0: i32) -> (i32, i32) {
    %c0_i32 = arith.constant 0 : i32
    %c0_i32_0 = arith.constant 0 : i32
    return %arg0, %c0_i32 : i32, i32
  }
  func.func @transform_1(%arg0: i32) -> (i32, i32) {
    %c0_i32 = arith.constant 0 : i32
    %c0_i32_0 = arith.constant 0 : i32
    return %arg0, %c0_i32 : i32, i32
  }
  func.func @transform_2(%arg0: i32) -> (i32, i32) {
    %c0_i32 = arith.constant 0 : i32
    %c0_i32_0 = arith.constant 0 : i32
    %c0_i32_1 = arith.constant 0 : i32
    return %c0_i32, %c0_i32_0 : i32, i32
  }
  func.func @transform_3(%arg0: i32) -> (i32, i32) {
    %c0_i32 = arith.constant 0 : i32
    %c0_i32_0 = arith.constant 0 : i32
    %c0_i32_1 = arith.constant 0 : i32
    return %c0_i32, %c0_i32_0 : i32, i32
  }
  func.func @transform_4(%arg0: i32) -> (i32, i32) {
    %c0_i32 = arith.constant 0 : i32
    %c0_i32_0 = arith.constant 0 : i32
    %c0_i32_1 = arith.constant 0 : i32
    return %c0_i32, %c0_i32_0 : i32, i32
  }
  func.func @transform_5(%arg0: i32) -> (i32, i32) {
    %c0_i32 = arith.constant 0 : i32
    %c0_i32_0 = arith.constant 0 : i32
    %c0_i32_1 = arith.constant 0 : i32
    return %c0_i32, %c0_i32_0 : i32, i32
  }
  func.func @transform_6(%arg0: i32) -> (i32, i32) {
    %c0_i32 = arith.constant 0 : i32
    %c0_i32_0 = arith.constant 0 : i32
    return %arg0, %c0_i32 : i32, i32
  }
}

module attributes {stable_mosaic.version = 11 : i64} {
  func.func @kernel(%arg0: i32, %arg1: memref<32x288xf32, #tpu.memory_space<vmem>>, %arg2: memref<32x32xf32, #tpu.memory_space<vmem>>, %arg3: memref<288x16xbf16, #tpu.memory_space<vmem>>, %arg4: memref<1x16xf32, #tpu.memory_space<vmem>>, %arg5: memref<16x32xbf16, #tpu.memory_space<vmem>>, %arg6: memref<1x32xf32, #tpu.memory_space<vmem>>, %arg7: memref<32x32xf32, #tpu.memory_space<vmem>>) attributes {dimension_semantics = [#tpu.dimension_semantics<parallel>], iteration_bounds = array<i64: 1>, scalar_prefetch = 0 : i64, scratch_operands = 0 : i64, tpu.core_type = #tpu.core_type<tc>, window_params = [{transform_indices = @transform_0, window_bounds = array<i64: 32, 288>}, {transform_indices = @transform_1, window_bounds = array<i64: 32, 32>}, {pipeline_mode = #tpu.pipeline_mode<synchronous>, transform_indices = @transform_2, window_bounds = array<i64: 288, 16>}, {pipeline_mode = #tpu.pipeline_mode<synchronous>, transform_indices = @transform_3, window_bounds = array<i64: 1, 16>}, {pipeline_mode = #tpu.pipeline_mode<synchronous>, transform_indices = @transform_4, window_bounds = array<i64: 16, 32>}, {pipeline_mode = #tpu.pipeline_mode<synchronous>, transform_indices = @transform_5, window_bounds = array<i64: 1, 32>}, {transform_indices = @transform_6, window_bounds = array<i64: 32, 32>}]} {
    %c0 = arith.constant 0 : index
    %c0_0 = arith.constant 0 : index
    %0 = vector.load %arg1[%c0, %c0_0] : memref<32x288xf32, #tpu.memory_space<vmem>>, vector<32x288xf32>
    %cst = arith.constant 0.000000e+00 : f32
    %1 = vector.broadcast %cst : f32 to vector<32x288xf32>
    %2 = arith.maximumf %0, %1 : vector<32x288xf32>
    %3 = arith.truncf %2 : vector<32x288xf32> to vector<32x288xbf16>
    %c0_1 = arith.constant 0 : index
    %c0_2 = arith.constant 0 : index
    %4 = vector.load %arg3[%c0_1, %c0_2] : memref<288x16xbf16, #tpu.memory_space<vmem>>, vector<288x16xbf16>
    %cst_3 = arith.constant dense<0.000000e+00> : vector<32x16xf32>
    %5 = tpu.matmul %3, %4, %cst_3 {dimension_numbers = #tpu.dot_dimension_numbers<[1], [0], [0], [1], [0, 0, 1, 1], [], []>} : vector<32x288xbf16>, vector<288x16xbf16>, vector<32x16xf32> -> vector<32x16xf32>
    %c0_4 = arith.constant 0 : index
    %c0_5 = arith.constant 0 : index
    %6 = vector.load %arg4[%c0_4, %c0_5] : memref<1x16xf32, #tpu.memory_space<vmem>>, vector<1x16xf32>
    %7 = vector.broadcast %6 : vector<1x16xf32> to vector<32x16xf32>
    %8 = arith.addf %5, %7 : vector<32x16xf32>
    %cst_6 = arith.constant 0.000000e+00 : f32
    %9 = vector.broadcast %cst_6 : f32 to vector<32x16xf32>
    %10 = arith.maximumf %8, %9 : vector<32x16xf32>
    %11 = arith.truncf %10 : vector<32x16xf32> to vector<32x16xbf16>
    %c0_7 = arith.constant 0 : index
    %c0_8 = arith.constant 0 : index
    %12 = vector.load %arg5[%c0_7, %c0_8] : memref<16x32xbf16, #tpu.memory_space<vmem>>, vector<16x32xbf16>
    %cst_9 = arith.constant dense<0.000000e+00> : vector<32x32xf32>
    %13 = tpu.matmul %11, %12, %cst_9 {dimension_numbers = #tpu.dot_dimension_numbers<[1], [0], [0], [1], [0, 0, 1, 1], [], []>} : vector<32x16xbf16>, vector<16x32xbf16>, vector<32x32xf32> -> vector<32x32xf32>
    %c0_10 = arith.constant 0 : index
    %c0_11 = arith.constant 0 : index
    %14 = vector.load %arg6[%c0_10, %c0_11] : memref<1x32xf32, #tpu.memory_space<vmem>>, vector<1x32xf32>
    %15 = vector.broadcast %14 : vector<1x32xf32> to vector<32x32xf32>
    %16 = arith.addf %13, %15 : vector<32x32xf32>
    %c0_12 = arith.constant 0 : index
    %c0_13 = arith.constant 0 : index
    %17 = vector.load %arg2[%c0_12, %c0_13] : memref<32x32xf32, #tpu.memory_space<vmem>>, vector<32x32xf32>
    %18 = arith.addf %16, %17 : vector<32x32xf32>
    %cst_14 = arith.constant 0.000000e+00 : f32
    %19 = vector.broadcast %cst_14 : f32 to vector<32x32xf32>
    %20 = arith.maximumf %18, %19 : vector<32x32xf32>
    %c0_15 = arith.constant 0 : index
    %c0_16 = arith.constant 0 : index
    %21 = vector.load %arg7[%c0_15, %c0_16] : memref<32x32xf32, #tpu.memory_space<vmem>>, vector<32x32xf32>
    tpu.vector_store %arg7[%c0_15, %c0_16], %20 {strides = array<i32>} : memref<32x32xf32, #tpu.memory_space<vmem>>, vector<32x32xf32>,
    return
  }
  func.func @transform_0(%arg0: i32) -> (i32, i32) {
    %c0_i32 = arith.constant 0 : i32
    %c0_i32_0 = arith.constant 0 : i32
    return %arg0, %c0_i32 : i32, i32
  }
  func.func @transform_1(%arg0: i32) -> (i32, i32) {
    %c0_i32 = arith.constant 0 : i32
    %c0_i32_0 = arith.constant 0 : i32
    return %arg0, %c0_i32 : i32, i32
  }
  func.func @transform_2(%arg0: i32) -> (i32, i32) {
    %c0_i32 = arith.constant 0 : i32
    %c0_i32_0 = arith.constant 0 : i32
    %c0_i32_1 = arith.constant 0 : i32
    return %c0_i32, %c0_i32_0 : i32, i32
  }
  func.func @transform_3(%arg0: i32) -> (i32, i32) {
    %c0_i32 = arith.constant 0 : i32
    %c0_i32_0 = arith.constant 0 : i32
    %c0_i32_1 = arith.constant 0 : i32
    return %c0_i32, %c0_i32_0 : i32, i32
  }
  func.func @transform_4(%arg0: i32) -> (i32, i32) {
    %c0_i32 = arith.constant 0 : i32
    %c0_i32_0 = arith.constant 0 : i32
    %c0_i32_1 = arith.constant 0 : i32
    return %c0_i32, %c0_i32_0 : i32, i32
  }
  func.func @transform_5(%arg0: i32) -> (i32, i32) {
    %c0_i32 = arith.constant 0 : i32
    %c0_i32_0 = arith.constant 0 : i32
    %c0_i32_1 = arith.constant 0 : i32
    return %c0_i32, %c0_i32_0 : i32, i32
  }
  func.func @transform_6(%arg0: i32) -> (i32, i32) {
    %c0_i32 = arith.constant 0 : i32
    %c0_i32_0 = arith.constant 0 : i32
    return %arg0, %c0_i32 : i32, i32
  }
}

module attributes {stable_mosaic.version = 11 : i64} {
  func.func @kernel(%arg0: i32, %arg1: memref<8x512xf32, #tpu.memory_space<vmem>>, %arg2: memref<512x16xbf16, #tpu.memory_space<vmem>>, %arg3: memref<1x16xf32, #tpu.memory_space<vmem>>, %arg4: memref<8x16xf32, #tpu.memory_space<vmem>>) attributes {dimension_semantics = [#tpu.dimension_semantics<parallel>], iteration_bounds = array<i64: 1>, scalar_prefetch = 0 : i64, scratch_operands = 0 : i64, tpu.core_type = #tpu.core_type<tc>, window_params = [{transform_indices = @transform_0, window_bounds = array<i64: 8, 512>}, {pipeline_mode = #tpu.pipeline_mode<synchronous>, transform_indices = @transform_1, window_bounds = array<i64: 512, 16>}, {pipeline_mode = #tpu.pipeline_mode<synchronous>, transform_indices = @transform_2, window_bounds = array<i64: 1, 16>}, {transform_indices = @transform_3, window_bounds = array<i64: 8, 16>}]} {
    %c0 = arith.constant 0 : index
    %c0_0 = arith.constant 0 : index
    %0 = vector.load %arg1[%c0, %c0_0] : memref<8x512xf32, #tpu.memory_space<vmem>>, vector<8x512xf32>
    %1 = arith.truncf %0 : vector<8x512xf32> to vector<8x512xbf16>
    %c0_1 = arith.constant 0 : index
    %c0_2 = arith.constant 0 : index
    %2 = vector.load %arg2[%c0_1, %c0_2] : memref<512x16xbf16, #tpu.memory_space<vmem>>, vector<512x16xbf16>
    %cst = arith.constant dense<0.000000e+00> : vector<8x16xf32>
    %3 = tpu.matmul %1, %2, %cst {dimension_numbers = #tpu.dot_dimension_numbers<[1], [0], [0], [1], [0, 0, 1, 1], [], []>} : vector<8x512xbf16>, vector<512x16xbf16>, vector<8x16xf32> -> vector<8x16xf32>
    %c0_3 = arith.constant 0 : index
    %c0_4 = arith.constant 0 : index
    %4 = vector.load %arg3[%c0_3, %c0_4] : memref<1x16xf32, #tpu.memory_space<vmem>>, vector<1x16xf32>
    %5 = vector.broadcast %4 : vector<1x16xf32> to vector<8x16xf32>
    %6 = arith.addf %3, %5 : vector<8x16xf32>
    %cst_5 = arith.constant 0.000000e+00 : f32
    %7 = vector.broadcast %cst_5 : f32 to vector<8x16xf32>
    %8 = arith.maximumf %6, %7 : vector<8x16xf32>
    %c0_6 = arith.constant 0 : index
    %c0_7 = arith.constant 0 : index
    %9 = vector.load %arg4[%c0_6, %c0_7] : memref<8x16xf32, #tpu.memory_space<vmem>>, vector<8x16xf32>
    tpu.vector_store %arg4[%c0_6, %c0_7], %8 {strides = array<i32>} : memref<8x16xf32, #tpu.memory_space<vmem>>, vector<8x16xf32>,
    return
  }
  func.func @transform_0(%arg0: i32) -> (i32, i32) {
    %c0_i32 = arith.constant 0 : i32
    %c0_i32_0 = arith.constant 0 : i32
    return %arg0, %c0_i32 : i32, i32
  }
  func.func @transform_1(%arg0: i32) -> (i32, i32) {
    %c0_i32 = arith.constant 0 : i32
    %c0_i32_0 = arith.constant 0 : i32
    %c0_i32_1 = arith.constant 0 : i32
    return %c0_i32, %c0_i32_0 : i32, i32
  }
  func.func @transform_2(%arg0: i32) -> (i32, i32) {
    %c0_i32 = arith.constant 0 : i32
    %c0_i32_0 = arith.constant 0 : i32
    %c0_i32_1 = arith.constant 0 : i32
    return %c0_i32, %c0_i32_0 : i32, i32
  }
  func.func @transform_3(%arg0: i32) -> (i32, i32) {
    %c0_i32 = arith.constant 0 : i32
    %c0_i32_0 = arith.constant 0 : i32
    return %arg0, %c0_i32 : i32, i32
  }
}

module attributes {stable_mosaic.version = 11 : i64} {
  func.func @kernel(%arg0: i32, %arg1: memref<8x144xf32, #tpu.memory_space<vmem>>, %arg2: memref<144x32xbf16, #tpu.memory_space<vmem>>, %arg3: memref<1x32xf32, #tpu.memory_space<vmem>>, %arg4: memref<8x32xf32, #tpu.memory_space<vmem>>) attributes {dimension_semantics = [#tpu.dimension_semantics<parallel>], iteration_bounds = array<i64: 1>, scalar_prefetch = 0 : i64, scratch_operands = 0 : i64, tpu.core_type = #tpu.core_type<tc>, window_params = [{transform_indices = @transform_0, window_bounds = array<i64: 8, 144>}, {pipeline_mode = #tpu.pipeline_mode<synchronous>, transform_indices = @transform_1, window_bounds = array<i64: 144, 32>}, {pipeline_mode = #tpu.pipeline_mode<synchronous>, transform_indices = @transform_2, window_bounds = array<i64: 1, 32>}, {transform_indices = @transform_3, window_bounds = array<i64: 8, 32>}]} {
    %c0 = arith.constant 0 : index
    %c0_0 = arith.constant 0 : index
    %0 = vector.load %arg1[%c0, %c0_0] : memref<8x144xf32, #tpu.memory_space<vmem>>, vector<8x144xf32>
    %1 = arith.truncf %0 : vector<8x144xf32> to vector<8x144xbf16>
    %c0_1 = arith.constant 0 : index
    %c0_2 = arith.constant 0 : index
    %2 = vector.load %arg2[%c0_1, %c0_2] : memref<144x32xbf16, #tpu.memory_space<vmem>>, vector<144x32xbf16>
    %cst = arith.constant dense<0.000000e+00> : vector<8x32xf32>
    %3 = tpu.matmul %1, %2, %cst {dimension_numbers = #tpu.dot_dimension_numbers<[1], [0], [0], [1], [0, 0, 1, 1], [], []>} : vector<8x144xbf16>, vector<144x32xbf16>, vector<8x32xf32> -> vector<8x32xf32>
    %c0_3 = arith.constant 0 : index
    %c0_4 = arith.constant 0 : index
    %4 = vector.load %arg3[%c0_3, %c0_4] : memref<1x32xf32, #tpu.memory_space<vmem>>, vector<1x32xf32>
    %5 = vector.broadcast %4 : vector<1x32xf32> to vector<8x32xf32>
    %6 = arith.addf %3, %5 : vector<8x32xf32>
    %c0_5 = arith.constant 0 : index
    %c0_6 = arith.constant 0 : index
    %7 = vector.load %arg4[%c0_5, %c0_6] : memref<8x32xf32, #tpu.memory_space<vmem>>, vector<8x32xf32>
    tpu.vector_store %arg4[%c0_5, %c0_6], %6 {strides = array<i32>} : memref<8x32xf32, #tpu.memory_space<vmem>>, vector<8x32xf32>,
    return
  }
  func.func @transform_0(%arg0: i32) -> (i32, i32) {
    %c0_i32 = arith.constant 0 : i32
    %c0_i32_0 = arith.constant 0 : i32
    return %arg0, %c0_i32 : i32, i32
  }
  func.func @transform_1(%arg0: i32) -> (i32, i32) {
    %c0_i32 = arith.constant 0 : i32
    %c0_i32_0 = arith.constant 0 : i32
    %c0_i32_1 = arith.constant 0 : i32
    return %c0_i32, %c0_i32_0 : i32, i32
  }
  func.func @transform_2(%arg0: i32) -> (i32, i32) {
    %c0_i32 = arith.constant 0 : i32
    %c0_i32_0 = arith.constant 0 : i32
    %c0_i32_1 = arith.constant 0 : i32
    return %c0_i32, %c0_i32_0 : i32, i32
  }
  func.func @transform_3(%arg0: i32) -> (i32, i32) {
    %c0_i32 = arith.constant 0 : i32
    %c0_i32_0 = arith.constant 0 : i32
    return %arg0, %c0_i32 : i32, i32
  }
}

module attributes {stable_mosaic.version = 11 : i64} {
  func.func @kernel(%arg0: i32, %arg1: memref<8x32xf32, #tpu.memory_space<vmem>>, %arg2: memref<32x32xf32, #tpu.memory_space<vmem>>, %arg3: memref<1x32xf32, #tpu.memory_space<vmem>>, %arg4: memref<32x64xf32, #tpu.memory_space<vmem>>, %arg5: memref<8x32xf32, #tpu.memory_space<vmem>>, %arg6: memref<1x1xf32, #tpu.memory_space<vmem>>, %arg7: memref<1x1xf32, #tpu.memory_space<vmem>>) attributes {dimension_semantics = [#tpu.dimension_semantics<arbitrary>], iteration_bounds = array<i64: 1>, scalar_prefetch = 0 : i64, scratch_operands = 1 : i64, tpu.core_type = #tpu.core_type<tc>, window_params = [{transform_indices = @transform_0, window_bounds = array<i64: 8, 32>}, {pipeline_mode = #tpu.pipeline_mode<synchronous>, transform_indices = @transform_1, window_bounds = array<i64: 32, 32>}, {pipeline_mode = #tpu.pipeline_mode<synchronous>, transform_indices = @transform_2, window_bounds = array<i64: 1, 32>}, {pipeline_mode = #tpu.pipeline_mode<synchronous>, transform_indices = @transform_3, window_bounds = array<i64: 32, 64>}, {transform_indices = @transform_4, window_bounds = array<i64: 8, 32>}, {pipeline_mode = #tpu.pipeline_mode<synchronous>, transform_indices = @transform_5, window_bounds = array<i64: 1, 1>}]} {
    %c0_i32 = arith.constant 0 : i32
    %0 = arith.cmpi eq, %arg0, %c0_i32 : i32
    %1 = arith.extui %0 : i1 to i32
    %c0_i32_0 = arith.constant 0 : i32
    %2 = arith.cmpi ne, %1, %c0_i32_0 : i32
    scf.if %2 {
      %cst_26 = arith.constant 0.000000e+00 : f32
      %63 = vector.broadcast %cst_26 : f32 to vector<1x1xf32>
      %c0_27 = arith.constant 0 : index
      %c0_28 = arith.constant 0 : index
      %64 = vector.load %arg7[%c0_27, %c0_28] : memref<1x1xf32, #tpu.memory_space<vmem>>, vector<1x1xf32>
      tpu.vector_store %arg7[%c0_27, %c0_28], %63 {strides = array<i32>} : memref<1x1xf32, #tpu.memory_space<vmem>>, vector<1x1xf32>,
    } else {
    }
    %c0 = arith.constant 0 : index
    %c0_1 = arith.constant 0 : index
    %3 = vector.load %arg1[%c0, %c0_1] : memref<8x32xf32, #tpu.memory_space<vmem>>, vector<8x32xf32>
    %c0_2 = arith.constant 0 : index
    %c0_3 = arith.constant 0 : index
    %4 = vector.load %arg2[%c0_2, %c0_3] : memref<32x32xf32, #tpu.memory_space<vmem>>, vector<32x32xf32>
    %cst = arith.constant dense<0.000000e+00> : vector<8x32xf32>
    %5 = tpu.matmul %3, %4, %cst {dimension_numbers = #tpu.dot_dimension_numbers<[1], [0], [0], [1], [0, 0, 1, 1], [], []>} : vector<8x32xf32>, vector<32x32xf32>, vector<8x32xf32> -> vector<8x32xf32>
    %c0_4 = arith.constant 0 : index
    %c0_5 = arith.constant 0 : index
    %6 = vector.load %arg3[%c0_4, %c0_5] : memref<1x32xf32, #tpu.memory_space<vmem>>, vector<1x32xf32>
    %7 = vector.broadcast %6 : vector<1x32xf32> to vector<8x32xf32>
    %8 = arith.addf %5, %7 : vector<8x32xf32>
    %c0_6 = arith.constant 0 : index
    %c0_7 = arith.constant 0 : index
    %9 = vector.load %arg4[%c0_6, %c0_7] : memref<32x64xf32, #tpu.memory_space<vmem>>, vector<32x64xf32>
    %10 = arith.mulf %8, %8 : vector<8x32xf32>
    %cst_8 = arith.constant dense<0.000000e+00> : vector<8xf32>
    %11 = vector.multi_reduction <add>, %10, %cst_8 [1] : vector<8x32xf32> to vector<8xf32>
    %12 = vector.shape_cast %11 : vector<8xf32> to vector<8x1xf32>
    %13 = arith.mulf %9, %9 : vector<32x64xf32>
    %cst_9 = arith.constant dense<0.000000e+00> : vector<64xf32>
    %14 = vector.multi_reduction <add>, %13, %cst_9 [0] : vector<32x64xf32> to vector<64xf32>
    %15 = vector.shape_cast %14 : vector<64xf32> to vector<1x64xf32>
    %cst_10 = arith.constant dense<0.000000e+00> : vector<8x64xf32>
    %16 = tpu.matmul %8, %9, %cst_10 {dimension_numbers = #tpu.dot_dimension_numbers<[1], [0], [0], [1], [0, 0, 1, 1], [], []>} : vector<8x32xf32>, vector<32x64xf32>, vector<8x64xf32> -> vector<8x64xf32>
    %cst_11 = arith.constant 2.000000e+00 : f32
    %17 = vector.broadcast %cst_11 : f32 to vector<8x64xf32>
    %18 = arith.mulf %17, %16 : vector<8x64xf32>
    %19 = vector.broadcast %12 : vector<8x1xf32> to vector<8x64xf32>
    %20 = arith.subf %19, %18 : vector<8x64xf32>
    %21 = vector.broadcast %15 : vector<1x64xf32> to vector<8x64xf32>
    %22 = arith.addf %20, %21 : vector<8x64xf32>
    %cst_12 = arith.constant 0.000000e+00 : f32
    %23 = vector.broadcast %cst_12 : f32 to vector<8x64xf32>
    %24 = arith.subf %23, %22 : vector<8x64xf32>
    %cst_13 = arith.constant dense<0xFF800000> : vector<8xf32>
    %25 = vector.multi_reduction <maximumf>, %24, %cst_13 [1] : vector<8x64xf32> to vector<8xf32>
    %26 = vector.shape_cast %25 : vector<8xf32> to vector<8x1xf32>
    %27 = tpu.iota {dimensions = array<i32: 1>} : vector<8x64xi32>
    %28 = vector.broadcast %26 : vector<8x1xf32> to vector<8x64xf32>
    %29 = arith.cmpf oge, %24, %28 : vector<8x64xf32>
    %c64_i32 = arith.constant 64 : i32
    %30 = vector.broadcast %c64_i32 : i32 to vector<8x64xi32>
    %31 = arith.select %29, %27, %30 : vector<8x64xi1>, vector<8x64xi32>
    %cst_14 = arith.constant dense<2147483647> : vector<8xi32>
    %32 = vector.multi_reduction <minsi>, %31, %cst_14 [1] : vector<8x64xi32> to vector<8xi32>
    %33 = vector.shape_cast %32 : vector<8xi32> to vector<8x1xi32>
    %34 = vector.broadcast %33 : vector<8x1xi32> to vector<8x64xi32>
    %35 = arith.cmpi eq, %27, %34 : vector<8x64xi32>
    %36 = arith.extui %35 : vector<8x64xi1> to vector<8x64xi32>
    %37 = arith.sitofp %36 : vector<8x64xi32> to vector<8x64xf32>
    %cst_15 = arith.constant dense<0.000000e+00> : vector<8x32xf32>
    %38 = tpu.matmul %37, %9, %cst_15 {dimension_numbers = #tpu.dot_dimension_numbers<[1], [1], [0], [0], [0, 0, 1, 0], [], []>} : vector<8x64xf32>, vector<32x64xf32>, vector<8x32xf32> -> vector<8x32xf32>
    %c0_16 = arith.constant 0 : index
    %c0_17 = arith.constant 0 : index
    %39 = vector.load %arg5[%c0_16, %c0_17] : memref<8x32xf32, #tpu.memory_space<vmem>>, vector<8x32xf32>
    tpu.vector_store %arg5[%c0_16, %c0_17], %38 {strides = array<i32>} : memref<8x32xf32, #tpu.memory_space<vmem>>, vector<8x32xf32>,
    %40 = arith.subf %38, %8 : vector<8x32xf32>
    %c8_i32 = arith.constant 8 : i32
    %41 = arith.muli %arg0, %c8_i32 : i32
    %42 = tpu.iota {dimensions = array<i32: 0>} : vector<8x1xi32>
    %43 = vector.broadcast %41 : i32 to vector<8x1xi32>
    %44 = arith.addi %43, %42 : vector<8x1xi32>
    %c8_i32_18 = arith.constant 8 : i32
    %45 = vector.broadcast %c8_i32_18 : i32 to vector<8x1xi32>
    %46 = arith.cmpi slt, %44, %45 : vector<8x1xi32>
    %47 = arith.extui %46 : vector<8x1xi1> to vector<8x1xi32>
    %48 = arith.sitofp %47 : vector<8x1xi32> to vector<8x1xf32>
    %c0_19 = arith.constant 0 : index
    %c0_20 = arith.constant 0 : index
    %49 = vector.load %arg7[%c0_19, %c0_20] : memref<1x1xf32, #tpu.memory_space<vmem>>, vector<1x1xf32>
    %50 = arith.mulf %40, %40 : vector<8x32xf32>
    %51 = vector.broadcast %48 : vector<8x1xf32> to vector<8x32xf32>
    %52 = arith.mulf %50, %51 : vector<8x32xf32>
    %53 = vector.shape_cast %52 : vector<8x32xf32> to vector<1x8x32xf32>
    %cst_21 = arith.constant dense<0.000000e+00> : vector<1xf32>
    %54 = vector.multi_reduction <add>, %53, %cst_21 [1, 2] : vector<1x8x32xf32> to vector<1xf32>
    %55 = vector.shape_cast %54 : vector<1xf32> to vector<1x1x1xf32>
    %56 = vector.extract %55[0, 0, 0] : f32 from vector<1x1x1xf32>
    %57 = vector.broadcast %56 : f32 to vector<1x1xf32>
    %58 = arith.addf %49, %57 : vector<1x1xf32>
    %c0_22 = arith.constant 0 : index
    %c0_23 = arith.constant 0 : index
    %59 = vector.load %arg7[%c0_22, %c0_23] : memref<1x1xf32, #tpu.memory_space<vmem>>, vector<1x1xf32>
    tpu.vector_store %arg7[%c0_22, %c0_23], %58 {strides = array<i32>} : memref<1x1xf32, #tpu.memory_space<vmem>>, vector<1x1xf32>,
    %c0_i32_24 = arith.constant 0 : i32
    %60 = arith.cmpi eq, %arg0, %c0_i32_24 : i32
    %61 = arith.extui %60 : i1 to i32
    %c0_i32_25 = arith.constant 0 : i32
    %62 = arith.cmpi ne, %61, %c0_i32_25 : i32
    scf.if %62 {
      %c0_26 = arith.constant 0 : index
      %c0_27 = arith.constant 0 : index
      %63 = vector.load %arg7[%c0_26, %c0_27] : memref<1x1xf32, #tpu.memory_space<vmem>>, vector<1x1xf32>
      %cst_28 = arith.constant 3.906250e-03 : f32
      %64 = vector.broadcast %cst_28 : f32 to vector<1x1xf32>
      %65 = arith.mulf %63, %64 : vector<1x1xf32>
      %c0_29 = arith.constant 0 : index
      %c0_30 = arith.constant 0 : index
      %66 = vector.load %arg6[%c0_29, %c0_30] : memref<1x1xf32, #tpu.memory_space<vmem>>, vector<1x1xf32>
      tpu.vector_store %arg6[%c0_29, %c0_30], %65 {strides = array<i32>} : memref<1x1xf32, #tpu.memory_space<vmem>>, vector<1x1xf32>,
    } else {
    }
    return
  }
  func.func @transform_0(%arg0: i32) -> (i32, i32) {
    %c0_i32 = arith.constant 0 : i32
    %c0_i32_0 = arith.constant 0 : i32
    return %arg0, %c0_i32 : i32, i32
  }
  func.func @transform_1(%arg0: i32) -> (i32, i32) {
    %c0_i32 = arith.constant 0 : i32
    %c0_i32_0 = arith.constant 0 : i32
    %c0_i32_1 = arith.constant 0 : i32
    return %c0_i32, %c0_i32_0 : i32, i32
  }
  func.func @transform_2(%arg0: i32) -> (i32, i32) {
    %c0_i32 = arith.constant 0 : i32
    %c0_i32_0 = arith.constant 0 : i32
    %c0_i32_1 = arith.constant 0 : i32
    return %c0_i32, %c0_i32_0 : i32, i32
  }
  func.func @transform_3(%arg0: i32) -> (i32, i32) {
    %c0_i32 = arith.constant 0 : i32
    %c0_i32_0 = arith.constant 0 : i32
    %c0_i32_1 = arith.constant 0 : i32
    return %c0_i32, %c0_i32_0 : i32, i32
  }
  func.func @transform_4(%arg0: i32) -> (i32, i32) {
    %c0_i32 = arith.constant 0 : i32
    %c0_i32_0 = arith.constant 0 : i32
    return %arg0, %c0_i32 : i32, i32
  }
  func.func @transform_5(%arg0: i32) -> (i32, i32) {
    %c0_i32 = arith.constant 0 : i32
    %c0_i32_0 = arith.constant 0 : i32
    %c0_i32_1 = arith.constant 0 : i32
    return %c0_i32, %c0_i32_0 : i32, i32
  }
}

module attributes {stable_mosaic.version = 11 : i64} {
  func.func @kernel(%arg0: i32, %arg1: memref<8x288xf32, #tpu.memory_space<vmem>>, %arg2: memref<8x32xf32, #tpu.memory_space<vmem>>, %arg3: memref<288x16xbf16, #tpu.memory_space<vmem>>, %arg4: memref<1x16xf32, #tpu.memory_space<vmem>>, %arg5: memref<16x32xbf16, #tpu.memory_space<vmem>>, %arg6: memref<1x32xf32, #tpu.memory_space<vmem>>, %arg7: memref<8x32xf32, #tpu.memory_space<vmem>>) attributes {dimension_semantics = [#tpu.dimension_semantics<parallel>], iteration_bounds = array<i64: 1>, scalar_prefetch = 0 : i64, scratch_operands = 0 : i64, tpu.core_type = #tpu.core_type<tc>, window_params = [{transform_indices = @transform_0, window_bounds = array<i64: 8, 288>}, {transform_indices = @transform_1, window_bounds = array<i64: 8, 32>}, {pipeline_mode = #tpu.pipeline_mode<synchronous>, transform_indices = @transform_2, window_bounds = array<i64: 288, 16>}, {pipeline_mode = #tpu.pipeline_mode<synchronous>, transform_indices = @transform_3, window_bounds = array<i64: 1, 16>}, {pipeline_mode = #tpu.pipeline_mode<synchronous>, transform_indices = @transform_4, window_bounds = array<i64: 16, 32>}, {pipeline_mode = #tpu.pipeline_mode<synchronous>, transform_indices = @transform_5, window_bounds = array<i64: 1, 32>}, {transform_indices = @transform_6, window_bounds = array<i64: 8, 32>}]} {
    %c0 = arith.constant 0 : index
    %c0_0 = arith.constant 0 : index
    %0 = vector.load %arg1[%c0, %c0_0] : memref<8x288xf32, #tpu.memory_space<vmem>>, vector<8x288xf32>
    %cst = arith.constant 0.000000e+00 : f32
    %1 = vector.broadcast %cst : f32 to vector<8x288xf32>
    %2 = arith.maximumf %0, %1 : vector<8x288xf32>
    %3 = arith.truncf %2 : vector<8x288xf32> to vector<8x288xbf16>
    %c0_1 = arith.constant 0 : index
    %c0_2 = arith.constant 0 : index
    %4 = vector.load %arg3[%c0_1, %c0_2] : memref<288x16xbf16, #tpu.memory_space<vmem>>, vector<288x16xbf16>
    %cst_3 = arith.constant dense<0.000000e+00> : vector<8x16xf32>
    %5 = tpu.matmul %3, %4, %cst_3 {dimension_numbers = #tpu.dot_dimension_numbers<[1], [0], [0], [1], [0, 0, 1, 1], [], []>} : vector<8x288xbf16>, vector<288x16xbf16>, vector<8x16xf32> -> vector<8x16xf32>
    %c0_4 = arith.constant 0 : index
    %c0_5 = arith.constant 0 : index
    %6 = vector.load %arg4[%c0_4, %c0_5] : memref<1x16xf32, #tpu.memory_space<vmem>>, vector<1x16xf32>
    %7 = vector.broadcast %6 : vector<1x16xf32> to vector<8x16xf32>
    %8 = arith.addf %5, %7 : vector<8x16xf32>
    %cst_6 = arith.constant 0.000000e+00 : f32
    %9 = vector.broadcast %cst_6 : f32 to vector<8x16xf32>
    %10 = arith.maximumf %8, %9 : vector<8x16xf32>
    %11 = arith.truncf %10 : vector<8x16xf32> to vector<8x16xbf16>
    %c0_7 = arith.constant 0 : index
    %c0_8 = arith.constant 0 : index
    %12 = vector.load %arg5[%c0_7, %c0_8] : memref<16x32xbf16, #tpu.memory_space<vmem>>, vector<16x32xbf16>
    %cst_9 = arith.constant dense<0.000000e+00> : vector<8x32xf32>
    %13 = tpu.matmul %11, %12, %cst_9 {dimension_numbers = #tpu.dot_dimension_numbers<[1], [0], [0], [1], [0, 0, 1, 1], [], []>} : vector<8x16xbf16>, vector<16x32xbf16>, vector<8x32xf32> -> vector<8x32xf32>
    %c0_10 = arith.constant 0 : index
    %c0_11 = arith.constant 0 : index
    %14 = vector.load %arg6[%c0_10, %c0_11] : memref<1x32xf32, #tpu.memory_space<vmem>>, vector<1x32xf32>
    %15 = vector.broadcast %14 : vector<1x32xf32> to vector<8x32xf32>
    %16 = arith.addf %13, %15 : vector<8x32xf32>
    %c0_12 = arith.constant 0 : index
    %c0_13 = arith.constant 0 : index
    %17 = vector.load %arg2[%c0_12, %c0_13] : memref<8x32xf32, #tpu.memory_space<vmem>>, vector<8x32xf32>
    %18 = arith.addf %16, %17 : vector<8x32xf32>
    %c0_14 = arith.constant 0 : index
    %c0_15 = arith.constant 0 : index
    %19 = vector.load %arg7[%c0_14, %c0_15] : memref<8x32xf32, #tpu.memory_space<vmem>>, vector<8x32xf32>
    tpu.vector_store %arg7[%c0_14, %c0_15], %18 {strides = array<i32>} : memref<8x32xf32, #tpu.memory_space<vmem>>, vector<8x32xf32>,
    return
  }
  func.func @transform_0(%arg0: i32) -> (i32, i32) {
    %c0_i32 = arith.constant 0 : i32
    %c0_i32_0 = arith.constant 0 : i32
    return %arg0, %c0_i32 : i32, i32
  }
  func.func @transform_1(%arg0: i32) -> (i32, i32) {
    %c0_i32 = arith.constant 0 : i32
    %c0_i32_0 = arith.constant 0 : i32
    return %arg0, %c0_i32 : i32, i32
  }
  func.func @transform_2(%arg0: i32) -> (i32, i32) {
    %c0_i32 = arith.constant 0 : i32
    %c0_i32_0 = arith.constant 0 : i32
    %c0_i32_1 = arith.constant 0 : i32
    return %c0_i32, %c0_i32_0 : i32, i32
  }
  func.func @transform_3(%arg0: i32) -> (i32, i32) {
    %c0_i32 = arith.constant 0 : i32
    %c0_i32_0 = arith.constant 0 : i32
    %c0_i32_1 = arith.constant 0 : i32
    return %c0_i32, %c0_i32_0 : i32, i32
  }
  func.func @transform_4(%arg0: i32) -> (i32, i32) {
    %c0_i32 = arith.constant 0 : i32
    %c0_i32_0 = arith.constant 0 : i32
    %c0_i32_1 = arith.constant 0 : i32
    return %c0_i32, %c0_i32_0 : i32, i32
  }
  func.func @transform_5(%arg0: i32) -> (i32, i32) {
    %c0_i32 = arith.constant 0 : i32
    %c0_i32_0 = arith.constant 0 : i32
    %c0_i32_1 = arith.constant 0 : i32
    return %c0_i32, %c0_i32_0 : i32, i32
  }
  func.func @transform_6(%arg0: i32) -> (i32, i32) {
    %c0_i32 = arith.constant 0 : i32
    %c0_i32_0 = arith.constant 0 : i32
    return %arg0, %c0_i32 : i32, i32
  }
}

module attributes {stable_mosaic.version = 11 : i64} {
  func.func @kernel(%arg0: i32, %arg1: memref<8x288xf32, #tpu.memory_space<vmem>>, %arg2: memref<8x32xf32, #tpu.memory_space<vmem>>, %arg3: memref<288x16xbf16, #tpu.memory_space<vmem>>, %arg4: memref<1x16xf32, #tpu.memory_space<vmem>>, %arg5: memref<16x32xbf16, #tpu.memory_space<vmem>>, %arg6: memref<1x32xf32, #tpu.memory_space<vmem>>, %arg7: memref<8x32xf32, #tpu.memory_space<vmem>>) attributes {dimension_semantics = [#tpu.dimension_semantics<parallel>], iteration_bounds = array<i64: 1>, scalar_prefetch = 0 : i64, scratch_operands = 0 : i64, tpu.core_type = #tpu.core_type<tc>, window_params = [{transform_indices = @transform_0, window_bounds = array<i64: 8, 288>}, {transform_indices = @transform_1, window_bounds = array<i64: 8, 32>}, {pipeline_mode = #tpu.pipeline_mode<synchronous>, transform_indices = @transform_2, window_bounds = array<i64: 288, 16>}, {pipeline_mode = #tpu.pipeline_mode<synchronous>, transform_indices = @transform_3, window_bounds = array<i64: 1, 16>}, {pipeline_mode = #tpu.pipeline_mode<synchronous>, transform_indices = @transform_4, window_bounds = array<i64: 16, 32>}, {pipeline_mode = #tpu.pipeline_mode<synchronous>, transform_indices = @transform_5, window_bounds = array<i64: 1, 32>}, {transform_indices = @transform_6, window_bounds = array<i64: 8, 32>}]} {
    %c0 = arith.constant 0 : index
    %c0_0 = arith.constant 0 : index
    %0 = vector.load %arg1[%c0, %c0_0] : memref<8x288xf32, #tpu.memory_space<vmem>>, vector<8x288xf32>
    %cst = arith.constant 0.000000e+00 : f32
    %1 = vector.broadcast %cst : f32 to vector<8x288xf32>
    %2 = arith.maximumf %0, %1 : vector<8x288xf32>
    %3 = arith.truncf %2 : vector<8x288xf32> to vector<8x288xbf16>
    %c0_1 = arith.constant 0 : index
    %c0_2 = arith.constant 0 : index
    %4 = vector.load %arg3[%c0_1, %c0_2] : memref<288x16xbf16, #tpu.memory_space<vmem>>, vector<288x16xbf16>
    %cst_3 = arith.constant dense<0.000000e+00> : vector<8x16xf32>
    %5 = tpu.matmul %3, %4, %cst_3 {dimension_numbers = #tpu.dot_dimension_numbers<[1], [0], [0], [1], [0, 0, 1, 1], [], []>} : vector<8x288xbf16>, vector<288x16xbf16>, vector<8x16xf32> -> vector<8x16xf32>
    %c0_4 = arith.constant 0 : index
    %c0_5 = arith.constant 0 : index
    %6 = vector.load %arg4[%c0_4, %c0_5] : memref<1x16xf32, #tpu.memory_space<vmem>>, vector<1x16xf32>
    %7 = vector.broadcast %6 : vector<1x16xf32> to vector<8x16xf32>
    %8 = arith.addf %5, %7 : vector<8x16xf32>
    %cst_6 = arith.constant 0.000000e+00 : f32
    %9 = vector.broadcast %cst_6 : f32 to vector<8x16xf32>
    %10 = arith.maximumf %8, %9 : vector<8x16xf32>
    %11 = arith.truncf %10 : vector<8x16xf32> to vector<8x16xbf16>
    %c0_7 = arith.constant 0 : index
    %c0_8 = arith.constant 0 : index
    %12 = vector.load %arg5[%c0_7, %c0_8] : memref<16x32xbf16, #tpu.memory_space<vmem>>, vector<16x32xbf16>
    %cst_9 = arith.constant dense<0.000000e+00> : vector<8x32xf32>
    %13 = tpu.matmul %11, %12, %cst_9 {dimension_numbers = #tpu.dot_dimension_numbers<[1], [0], [0], [1], [0, 0, 1, 1], [], []>} : vector<8x16xbf16>, vector<16x32xbf16>, vector<8x32xf32> -> vector<8x32xf32>
    %c0_10 = arith.constant 0 : index
    %c0_11 = arith.constant 0 : index
    %14 = vector.load %arg6[%c0_10, %c0_11] : memref<1x32xf32, #tpu.memory_space<vmem>>, vector<1x32xf32>
    %15 = vector.broadcast %14 : vector<1x32xf32> to vector<8x32xf32>
    %16 = arith.addf %13, %15 : vector<8x32xf32>
    %c0_12 = arith.constant 0 : index
    %c0_13 = arith.constant 0 : index
    %17 = vector.load %arg2[%c0_12, %c0_13] : memref<8x32xf32, #tpu.memory_space<vmem>>, vector<8x32xf32>
    %18 = arith.addf %16, %17 : vector<8x32xf32>
    %cst_14 = arith.constant 0.000000e+00 : f32
    %19 = vector.broadcast %cst_14 : f32 to vector<8x32xf32>
    %20 = arith.maximumf %18, %19 : vector<8x32xf32>
    %c0_15 = arith.constant 0 : index
    %c0_16 = arith.constant 0 : index
    %21 = vector.load %arg7[%c0_15, %c0_16] : memref<8x32xf32, #tpu.memory_space<vmem>>, vector<8x32xf32>
    tpu.vector_store %arg7[%c0_15, %c0_16], %20 {strides = array<i32>} : memref<8x32xf32, #tpu.memory_space<vmem>>, vector<8x32xf32>,
    return
  }
  func.func @transform_0(%arg0: i32) -> (i32, i32) {
    %c0_i32 = arith.constant 0 : i32
    %c0_i32_0 = arith.constant 0 : i32
    return %arg0, %c0_i32 : i32, i32
  }
  func.func @transform_1(%arg0: i32) -> (i32, i32) {
    %c0_i32 = arith.constant 0 : i32
    %c0_i32_0 = arith.constant 0 : i32
    return %arg0, %c0_i32 : i32, i32
  }
  func.func @transform_2(%arg0: i32) -> (i32, i32) {
    %c0_i32 = arith.constant 0 : i32
    %c0_i32_0 = arith.constant 0 : i32
    %c0_i32_1 = arith.constant 0 : i32
    return %c0_i32, %c0_i32_0 : i32, i32
  }
  func.func @transform_3(%arg0: i32) -> (i32, i32) {
    %c0_i32 = arith.constant 0 : i32
    %c0_i32_0 = arith.constant 0 : i32
    %c0_i32_1 = arith.constant 0 : i32
    return %c0_i32, %c0_i32_0 : i32, i32
  }
  func.func @transform_4(%arg0: i32) -> (i32, i32) {
    %c0_i32 = arith.constant 0 : i32
    %c0_i32_0 = arith.constant 0 : i32
    %c0_i32_1 = arith.constant 0 : i32
    return %c0_i32, %c0_i32_0 : i32, i32
  }
  func.func @transform_5(%arg0: i32) -> (i32, i32) {
    %c0_i32 = arith.constant 0 : i32
    %c0_i32_0 = arith.constant 0 : i32
    %c0_i32_1 = arith.constant 0 : i32
    return %c0_i32, %c0_i32_0 : i32, i32
  }
  func.func @transform_6(%arg0: i32) -> (i32, i32) {
    %c0_i32 = arith.constant 0 : i32
    %c0_i32_0 = arith.constant 0 : i32
    return %arg0, %c0_i32 : i32, i32
  }
}

module attributes {stable_mosaic.version = 11 : i64} {
  func.func @kernel(%arg0: i32, %arg1: memref<8x288xf32, #tpu.memory_space<vmem>>, %arg2: memref<288x32xbf16, #tpu.memory_space<vmem>>, %arg3: memref<1x32xf32, #tpu.memory_space<vmem>>, %arg4: memref<8x32xf32, #tpu.memory_space<vmem>>) attributes {dimension_semantics = [#tpu.dimension_semantics<parallel>], iteration_bounds = array<i64: 1>, scalar_prefetch = 0 : i64, scratch_operands = 0 : i64, tpu.core_type = #tpu.core_type<tc>, window_params = [{transform_indices = @transform_0, window_bounds = array<i64: 8, 288>}, {pipeline_mode = #tpu.pipeline_mode<synchronous>, transform_indices = @transform_1, window_bounds = array<i64: 288, 32>}, {pipeline_mode = #tpu.pipeline_mode<synchronous>, transform_indices = @transform_2, window_bounds = array<i64: 1, 32>}, {transform_indices = @transform_3, window_bounds = array<i64: 8, 32>}]} {
    %c0 = arith.constant 0 : index
    %c0_0 = arith.constant 0 : index
    %0 = vector.load %arg1[%c0, %c0_0] : memref<8x288xf32, #tpu.memory_space<vmem>>, vector<8x288xf32>
    %1 = arith.truncf %0 : vector<8x288xf32> to vector<8x288xbf16>
    %c0_1 = arith.constant 0 : index
    %c0_2 = arith.constant 0 : index
    %2 = vector.load %arg2[%c0_1, %c0_2] : memref<288x32xbf16, #tpu.memory_space<vmem>>, vector<288x32xbf16>
    %cst = arith.constant dense<0.000000e+00> : vector<8x32xf32>
    %3 = tpu.matmul %1, %2, %cst {dimension_numbers = #tpu.dot_dimension_numbers<[1], [0], [0], [1], [0, 0, 1, 1], [], []>} : vector<8x288xbf16>, vector<288x32xbf16>, vector<8x32xf32> -> vector<8x32xf32>
    %c0_3 = arith.constant 0 : index
    %c0_4 = arith.constant 0 : index
    %4 = vector.load %arg3[%c0_3, %c0_4] : memref<1x32xf32, #tpu.memory_space<vmem>>, vector<1x32xf32>
    %5 = vector.broadcast %4 : vector<1x32xf32> to vector<8x32xf32>
    %6 = arith.addf %3, %5 : vector<8x32xf32>
    %c0_5 = arith.constant 0 : index
    %c0_6 = arith.constant 0 : index
    %7 = vector.load %arg4[%c0_5, %c0_6] : memref<8x32xf32, #tpu.memory_space<vmem>>, vector<8x32xf32>
    tpu.vector_store %arg4[%c0_5, %c0_6], %6 {strides = array<i32>} : memref<8x32xf32, #tpu.memory_space<vmem>>, vector<8x32xf32>,
    return
  }
  func.func @transform_0(%arg0: i32) -> (i32, i32) {
    %c0_i32 = arith.constant 0 : i32
    %c0_i32_0 = arith.constant 0 : i32
    return %arg0, %c0_i32 : i32, i32
  }
  func.func @transform_1(%arg0: i32) -> (i32, i32) {
    %c0_i32 = arith.constant 0 : i32
    %c0_i32_0 = arith.constant 0 : i32
    %c0_i32_1 = arith.constant 0 : i32
    return %c0_i32, %c0_i32_0 : i32, i32
  }
  func.func @transform_2(%arg0: i32) -> (i32, i32) {
    %c0_i32 = arith.constant 0 : i32
    %c0_i32_0 = arith.constant 0 : i32
    %c0_i32_1 = arith.constant 0 : i32
    return %c0_i32, %c0_i32_0 : i32, i32
  }
  func.func @transform_3(%arg0: i32) -> (i32, i32) {
    %c0_i32 = arith.constant 0 : i32
    %c0_i32_0 = arith.constant 0 : i32
    return %arg0, %c0_i32 : i32, i32
  }
}

module attributes {stable_mosaic.version = 11 : i64} {
  func.func @kernel(%arg0: i32, %arg1: memref<8x288xf32, #tpu.memory_space<vmem>>, %arg2: memref<288x128xbf16, #tpu.memory_space<vmem>>, %arg3: memref<1x128xf32, #tpu.memory_space<vmem>>, %arg4: memref<8x128xf32, #tpu.memory_space<vmem>>) attributes {dimension_semantics = [#tpu.dimension_semantics<parallel>], iteration_bounds = array<i64: 1>, scalar_prefetch = 0 : i64, scratch_operands = 0 : i64, tpu.core_type = #tpu.core_type<tc>, window_params = [{transform_indices = @transform_0, window_bounds = array<i64: 8, 288>}, {pipeline_mode = #tpu.pipeline_mode<synchronous>, transform_indices = @transform_1, window_bounds = array<i64: 288, 128>}, {pipeline_mode = #tpu.pipeline_mode<synchronous>, transform_indices = @transform_2, window_bounds = array<i64: 1, 128>}, {transform_indices = @transform_3, window_bounds = array<i64: 8, 128>}]} {
    %c0 = arith.constant 0 : index
    %c0_0 = arith.constant 0 : index
    %0 = vector.load %arg1[%c0, %c0_0] : memref<8x288xf32, #tpu.memory_space<vmem>>, vector<8x288xf32>
    %1 = arith.truncf %0 : vector<8x288xf32> to vector<8x288xbf16>
    %c0_1 = arith.constant 0 : index
    %c0_2 = arith.constant 0 : index
    %2 = vector.load %arg2[%c0_1, %c0_2] : memref<288x128xbf16, #tpu.memory_space<vmem>>, vector<288x128xbf16>
    %cst = arith.constant dense<0.000000e+00> : vector<8x128xf32>
    %3 = tpu.matmul %1, %2, %cst {dimension_numbers = #tpu.dot_dimension_numbers<[1], [0], [0], [1], [0, 0, 1, 1], [], []>} : vector<8x288xbf16>, vector<288x128xbf16>, vector<8x128xf32> -> vector<8x128xf32>
    %c0_3 = arith.constant 0 : index
    %c0_4 = arith.constant 0 : index
    %4 = vector.load %arg3[%c0_3, %c0_4] : memref<1x128xf32, #tpu.memory_space<vmem>>, vector<1x128xf32>
    %5 = vector.broadcast %4 : vector<1x128xf32> to vector<8x128xf32>
    %6 = arith.addf %3, %5 : vector<8x128xf32>
    %c0_5 = arith.constant 0 : index
    %c0_6 = arith.constant 0 : index
    %7 = vector.load %arg4[%c0_5, %c0_6] : memref<8x128xf32, #tpu.memory_space<vmem>>, vector<8x128xf32>
    tpu.vector_store %arg4[%c0_5, %c0_6], %6 {strides = array<i32>} : memref<8x128xf32, #tpu.memory_space<vmem>>, vector<8x128xf32>,
    return
  }
  func.func @transform_0(%arg0: i32) -> (i32, i32) {
    %c0_i32 = arith.constant 0 : i32
    %c0_i32_0 = arith.constant 0 : i32
    return %arg0, %c0_i32 : i32, i32
  }
  func.func @transform_1(%arg0: i32) -> (i32, i32) {
    %c0_i32 = arith.constant 0 : i32
    %c0_i32_0 = arith.constant 0 : i32
    %c0_i32_1 = arith.constant 0 : i32
    return %c0_i32, %c0_i32_0 : i32, i32
  }
  func.func @transform_2(%arg0: i32) -> (i32, i32) {
    %c0_i32 = arith.constant 0 : i32
    %c0_i32_0 = arith.constant 0 : i32
    %c0_i32_1 = arith.constant 0 : i32
    return %c0_i32, %c0_i32_0 : i32, i32
  }
  func.func @transform_3(%arg0: i32) -> (i32, i32) {
    %c0_i32 = arith.constant 0 : i32
    %c0_i32_0 = arith.constant 0 : i32
    return %arg0, %c0_i32 : i32, i32
  }
}

module attributes {stable_mosaic.version = 11 : i64} {
  func.func @kernel(%arg0: i32, %arg1: memref<32x64xf32, #tpu.memory_space<vmem>>, %arg2: memref<64x32xf32, #tpu.memory_space<vmem>>, %arg3: memref<1x32xf32, #tpu.memory_space<vmem>>, %arg4: memref<32x64xf32, #tpu.memory_space<vmem>>, %arg5: memref<32x32xf32, #tpu.memory_space<vmem>>, %arg6: memref<1x1xf32, #tpu.memory_space<vmem>>, %arg7: memref<1x1xf32, #tpu.memory_space<vmem>>) attributes {dimension_semantics = [#tpu.dimension_semantics<arbitrary>], iteration_bounds = array<i64: 1>, scalar_prefetch = 0 : i64, scratch_operands = 1 : i64, tpu.core_type = #tpu.core_type<tc>, window_params = [{transform_indices = @transform_0, window_bounds = array<i64: 32, 64>}, {pipeline_mode = #tpu.pipeline_mode<synchronous>, transform_indices = @transform_1, window_bounds = array<i64: 64, 32>}, {pipeline_mode = #tpu.pipeline_mode<synchronous>, transform_indices = @transform_2, window_bounds = array<i64: 1, 32>}, {pipeline_mode = #tpu.pipeline_mode<synchronous>, transform_indices = @transform_3, window_bounds = array<i64: 32, 64>}, {transform_indices = @transform_4, window_bounds = array<i64: 32, 32>}, {pipeline_mode = #tpu.pipeline_mode<synchronous>, transform_indices = @transform_5, window_bounds = array<i64: 1, 1>}]} {
    %c0_i32 = arith.constant 0 : i32
    %0 = arith.cmpi eq, %arg0, %c0_i32 : i32
    %1 = arith.extui %0 : i1 to i32
    %c0_i32_0 = arith.constant 0 : i32
    %2 = arith.cmpi ne, %1, %c0_i32_0 : i32
    scf.if %2 {
      %cst_26 = arith.constant 0.000000e+00 : f32
      %63 = vector.broadcast %cst_26 : f32 to vector<1x1xf32>
      %c0_27 = arith.constant 0 : index
      %c0_28 = arith.constant 0 : index
      %64 = vector.load %arg7[%c0_27, %c0_28] : memref<1x1xf32, #tpu.memory_space<vmem>>, vector<1x1xf32>
      tpu.vector_store %arg7[%c0_27, %c0_28], %63 {strides = array<i32>} : memref<1x1xf32, #tpu.memory_space<vmem>>, vector<1x1xf32>,
    } else {
    }
    %c0 = arith.constant 0 : index
    %c0_1 = arith.constant 0 : index
    %3 = vector.load %arg1[%c0, %c0_1] : memref<32x64xf32, #tpu.memory_space<vmem>>, vector<32x64xf32>
    %c0_2 = arith.constant 0 : index
    %c0_3 = arith.constant 0 : index
    %4 = vector.load %arg2[%c0_2, %c0_3] : memref<64x32xf32, #tpu.memory_space<vmem>>, vector<64x32xf32>
    %cst = arith.constant dense<0.000000e+00> : vector<32x32xf32>
    %5 = tpu.matmul %3, %4, %cst {dimension_numbers = #tpu.dot_dimension_numbers<[1], [0], [0], [1], [0, 0, 1, 1], [], []>} : vector<32x64xf32>, vector<64x32xf32>, vector<32x32xf32> -> vector<32x32xf32>
    %c0_4 = arith.constant 0 : index
    %c0_5 = arith.constant 0 : index
    %6 = vector.load %arg3[%c0_4, %c0_5] : memref<1x32xf32, #tpu.memory_space<vmem>>, vector<1x32xf32>
    %7 = vector.broadcast %6 : vector<1x32xf32> to vector<32x32xf32>
    %8 = arith.addf %5, %7 : vector<32x32xf32>
    %c0_6 = arith.constant 0 : index
    %c0_7 = arith.constant 0 : index
    %9 = vector.load %arg4[%c0_6, %c0_7] : memref<32x64xf32, #tpu.memory_space<vmem>>, vector<32x64xf32>
    %10 = arith.mulf %8, %8 : vector<32x32xf32>
    %cst_8 = arith.constant dense<0.000000e+00> : vector<32xf32>
    %11 = vector.multi_reduction <add>, %10, %cst_8 [1] : vector<32x32xf32> to vector<32xf32>
    %12 = vector.shape_cast %11 : vector<32xf32> to vector<32x1xf32>
    %13 = arith.mulf %9, %9 : vector<32x64xf32>
    %cst_9 = arith.constant dense<0.000000e+00> : vector<64xf32>
    %14 = vector.multi_reduction <add>, %13, %cst_9 [0] : vector<32x64xf32> to vector<64xf32>
    %15 = vector.shape_cast %14 : vector<64xf32> to vector<1x64xf32>
    %cst_10 = arith.constant dense<0.000000e+00> : vector<32x64xf32>
    %16 = tpu.matmul %8, %9, %cst_10 {dimension_numbers = #tpu.dot_dimension_numbers<[1], [0], [0], [1], [0, 0, 1, 1], [], []>} : vector<32x32xf32>, vector<32x64xf32>, vector<32x64xf32> -> vector<32x64xf32>
    %cst_11 = arith.constant 2.000000e+00 : f32
    %17 = vector.broadcast %cst_11 : f32 to vector<32x64xf32>
    %18 = arith.mulf %17, %16 : vector<32x64xf32>
    %19 = vector.broadcast %12 : vector<32x1xf32> to vector<32x64xf32>
    %20 = arith.subf %19, %18 : vector<32x64xf32>
    %21 = vector.broadcast %15 : vector<1x64xf32> to vector<32x64xf32>
    %22 = arith.addf %20, %21 : vector<32x64xf32>
    %cst_12 = arith.constant 0.000000e+00 : f32
    %23 = vector.broadcast %cst_12 : f32 to vector<32x64xf32>
    %24 = arith.subf %23, %22 : vector<32x64xf32>
    %cst_13 = arith.constant dense<0xFF800000> : vector<32xf32>
    %25 = vector.multi_reduction <maximumf>, %24, %cst_13 [1] : vector<32x64xf32> to vector<32xf32>
    %26 = vector.shape_cast %25 : vector<32xf32> to vector<32x1xf32>
    %27 = tpu.iota {dimensions = array<i32: 1>} : vector<32x64xi32>
    %28 = vector.broadcast %26 : vector<32x1xf32> to vector<32x64xf32>
    %29 = arith.cmpf oge, %24, %28 : vector<32x64xf32>
    %c64_i32 = arith.constant 64 : i32
    %30 = vector.broadcast %c64_i32 : i32 to vector<32x64xi32>
    %31 = arith.select %29, %27, %30 : vector<32x64xi1>, vector<32x64xi32>
    %cst_14 = arith.constant dense<2147483647> : vector<32xi32>
    %32 = vector.multi_reduction <minsi>, %31, %cst_14 [1] : vector<32x64xi32> to vector<32xi32>
    %33 = vector.shape_cast %32 : vector<32xi32> to vector<32x1xi32>
    %34 = vector.broadcast %33 : vector<32x1xi32> to vector<32x64xi32>
    %35 = arith.cmpi eq, %27, %34 : vector<32x64xi32>
    %36 = arith.extui %35 : vector<32x64xi1> to vector<32x64xi32>
    %37 = arith.sitofp %36 : vector<32x64xi32> to vector<32x64xf32>
    %cst_15 = arith.constant dense<0.000000e+00> : vector<32x32xf32>
    %38 = tpu.matmul %37, %9, %cst_15 {dimension_numbers = #tpu.dot_dimension_numbers<[1], [1], [0], [0], [0, 0, 1, 0], [], []>} : vector<32x64xf32>, vector<32x64xf32>, vector<32x32xf32> -> vector<32x32xf32>
    %c0_16 = arith.constant 0 : index
    %c0_17 = arith.constant 0 : index
    %39 = vector.load %arg5[%c0_16, %c0_17] : memref<32x32xf32, #tpu.memory_space<vmem>>, vector<32x32xf32>
    tpu.vector_store %arg5[%c0_16, %c0_17], %38 {strides = array<i32>} : memref<32x32xf32, #tpu.memory_space<vmem>>, vector<32x32xf32>,
    %40 = arith.subf %38, %8 : vector<32x32xf32>
    %c32_i32 = arith.constant 32 : i32
    %41 = arith.muli %arg0, %c32_i32 : i32
    %42 = tpu.iota {dimensions = array<i32: 0>} : vector<32x1xi32>
    %43 = vector.broadcast %41 : i32 to vector<32x1xi32>
    %44 = arith.addi %43, %42 : vector<32x1xi32>
    %c32_i32_18 = arith.constant 32 : i32
    %45 = vector.broadcast %c32_i32_18 : i32 to vector<32x1xi32>
    %46 = arith.cmpi slt, %44, %45 : vector<32x1xi32>
    %47 = arith.extui %46 : vector<32x1xi1> to vector<32x1xi32>
    %48 = arith.sitofp %47 : vector<32x1xi32> to vector<32x1xf32>
    %c0_19 = arith.constant 0 : index
    %c0_20 = arith.constant 0 : index
    %49 = vector.load %arg7[%c0_19, %c0_20] : memref<1x1xf32, #tpu.memory_space<vmem>>, vector<1x1xf32>
    %50 = arith.mulf %40, %40 : vector<32x32xf32>
    %51 = vector.broadcast %48 : vector<32x1xf32> to vector<32x32xf32>
    %52 = arith.mulf %50, %51 : vector<32x32xf32>
    %53 = vector.shape_cast %52 : vector<32x32xf32> to vector<1x32x32xf32>
    %cst_21 = arith.constant dense<0.000000e+00> : vector<1xf32>
    %54 = vector.multi_reduction <add>, %53, %cst_21 [1, 2] : vector<1x32x32xf32> to vector<1xf32>
    %55 = vector.shape_cast %54 : vector<1xf32> to vector<1x1x1xf32>
    %56 = vector.extract %55[0, 0, 0] : f32 from vector<1x1x1xf32>
    %57 = vector.broadcast %56 : f32 to vector<1x1xf32>
    %58 = arith.addf %49, %57 : vector<1x1xf32>
    %c0_22 = arith.constant 0 : index
    %c0_23 = arith.constant 0 : index
    %59 = vector.load %arg7[%c0_22, %c0_23] : memref<1x1xf32, #tpu.memory_space<vmem>>, vector<1x1xf32>
    tpu.vector_store %arg7[%c0_22, %c0_23], %58 {strides = array<i32>} : memref<1x1xf32, #tpu.memory_space<vmem>>, vector<1x1xf32>,
    %c0_i32_24 = arith.constant 0 : i32
    %60 = arith.cmpi eq, %arg0, %c0_i32_24 : i32
    %61 = arith.extui %60 : i1 to i32
    %c0_i32_25 = arith.constant 0 : i32
    %62 = arith.cmpi ne, %61, %c0_i32_25 : i32
    scf.if %62 {
      %c0_26 = arith.constant 0 : index
      %c0_27 = arith.constant 0 : index
      %63 = vector.load %arg7[%c0_26, %c0_27] : memref<1x1xf32, #tpu.memory_space<vmem>>, vector<1x1xf32>
      %cst_28 = arith.constant 9.765625E-4 : f32
      %64 = vector.broadcast %cst_28 : f32 to vector<1x1xf32>
      %65 = arith.mulf %63, %64 : vector<1x1xf32>
      %c0_29 = arith.constant 0 : index
      %c0_30 = arith.constant 0 : index
      %66 = vector.load %arg6[%c0_29, %c0_30] : memref<1x1xf32, #tpu.memory_space<vmem>>, vector<1x1xf32>
      tpu.vector_store %arg6[%c0_29, %c0_30], %65 {strides = array<i32>} : memref<1x1xf32, #tpu.memory_space<vmem>>, vector<1x1xf32>,
    } else {
    }
    return
  }
  func.func @transform_0(%arg0: i32) -> (i32, i32) {
    %c0_i32 = arith.constant 0 : i32
    %c0_i32_0 = arith.constant 0 : i32
    return %arg0, %c0_i32 : i32, i32
  }
  func.func @transform_1(%arg0: i32) -> (i32, i32) {
    %c0_i32 = arith.constant 0 : i32
    %c0_i32_0 = arith.constant 0 : i32
    %c0_i32_1 = arith.constant 0 : i32
    return %c0_i32, %c0_i32_0 : i32, i32
  }
  func.func @transform_2(%arg0: i32) -> (i32, i32) {
    %c0_i32 = arith.constant 0 : i32
    %c0_i32_0 = arith.constant 0 : i32
    %c0_i32_1 = arith.constant 0 : i32
    return %c0_i32, %c0_i32_0 : i32, i32
  }
  func.func @transform_3(%arg0: i32) -> (i32, i32) {
    %c0_i32 = arith.constant 0 : i32
    %c0_i32_0 = arith.constant 0 : i32
    %c0_i32_1 = arith.constant 0 : i32
    return %c0_i32, %c0_i32_0 : i32, i32
  }
  func.func @transform_4(%arg0: i32) -> (i32, i32) {
    %c0_i32 = arith.constant 0 : i32
    %c0_i32_0 = arith.constant 0 : i32
    return %arg0, %c0_i32 : i32, i32
  }
  func.func @transform_5(%arg0: i32) -> (i32, i32) {
    %c0_i32 = arith.constant 0 : i32
    %c0_i32_0 = arith.constant 0 : i32
    %c0_i32_1 = arith.constant 0 : i32
    return %c0_i32, %c0_i32_0 : i32, i32
  }
}

</mosaic_0001>

<llo_original>
// kernel: hvq_encoder_forward.16
$region0: #{hvq_encoder_forward.16}
  #allocation0 [shape = 'u32[]', space=smem, size = 0x4, offset = 0x4, fixed_abs, tag = 'smem constant byte address 0x4 - core index']
  #allocation1 [shape = 'u32[144,128]{1,0:T(1,128)}', space=vmem, size = 0x12000, scoped, tag = 'internal scratch']
  %s0 = inlined_call_operand.vmem [shape: f32[128,48], index: 0, kind: input, shape index: {}]
  %s1 = inlined_call_operand.vmem [shape: bf16[48,16], index: 1, kind: input, shape index: {}]
  %s2 = inlined_call_operand.vmem [shape: f32[1,16], index: 2, kind: input, shape index: {}]
  %s3 = inlined_call_operand.vmem [shape: f32[128,16], index: 3, kind: output, shape index: {}]
  %s4 = sld [smem:[#allocation0]]
  $region22: #{hvq_encoder_forward.16} parent=0
    _
  %s6 = ssub.s32 1, %s4
  %s7 = scalar_select 0, %s6, %s4
  // Predicated region
  $region2: #{hvq_encoder_forward.16} parent=0 // pred_check
    _
  $region3: #{hvq_encoder_forward.16} parent=0 // pred_check_branch
    %9 = sbr.rel (0) target = $region5
  $region4: #{hvq_encoder_forward.16} parent=0 // pred_region
    _
  $region5: #{hvq_encoder_forward.16} parent=0 // pred_fallthru
    _
  // Predicated region
  $region6: #{hvq_encoder_forward.16} parent=0 // pred_check
    _
  $region7: #{hvq_encoder_forward.16} parent=0 // pred_check_branch
    %11 = sbr.rel (0) target = $region9
  $region8: #{hvq_encoder_forward.16} parent=0 // pred_region
    _
  $region9: #{hvq_encoder_forward.16} parent=0 // pred_fallthru
    _
  // Predicated region
  $region10: #{hvq_encoder_forward.16} parent=0 // pred_check
    _
  $region11: #{hvq_encoder_forward.16} parent=0 // pred_check_branch
    %13 = sbr.rel (0) target = $region13
  $region12: #{hvq_encoder_forward.16} parent=0 // pred_region
    _
  $region13: #{hvq_encoder_forward.16} parent=0 // pred_fallthru
    _
  %v15 = vld [vmem:[%s0] sm:$0xff]
  %v16 = vld [vmem:[%s0 + $0x8] sm:$0xff]
  %v17 = vld [vmem:[%s0 + $0x10] sm:$0xff]
  %v18 = vld [vmem:[%s0 + $0x18] sm:$0xff]
  %v19 = vld [vmem:[%s0 + $0x20] sm:$0xff]
  %v20 = vld [vmem:[%s0 + $0x28] sm:$0xff]
  %v21 = vld [vmem:[%s0 + $0x30] sm:$0xff]
  %v22 = vld [vmem:[%s0 + $0x38] sm:$0xff]
  %v23 = vld [vmem:[%s0 + $0x40] sm:$0xff]
  %v24 = vld [vmem:[%s0 + $0x48] sm:$0xff]
  %v25 = vld [vmem:[%s0 + $0x50] sm:$0xff]
  %v26 = vld [vmem:[%s0 + $0x58] sm:$0xff]
  %v27 = vld [vmem:[%s0 + $0x60] sm:$0xff]
  %v28 = vld [vmem:[%s0 + $0x68] sm:$0xff]
  %v29 = vld [vmem:[%s0 + $0x70] sm:$0xff]
  %v30 = vld [vmem:[%s0 + $0x78] sm:$0xff]
  %v31 = vpack.c.bf16 %v16, %v15
  %v32 = vpack.c.bf16 %v18, %v17
  %v33 = vpack.c.bf16 %v20, %v19
  %v34 = vpack.c.bf16 %v22, %v21
  %v35 = vpack.c.bf16 %v24, %v23
  %v36 = vpack.c.bf16 %v26, %v25
  %v37 = vpack.c.bf16 %v28, %v27
  %v38 = vpack.c.bf16 %v30, %v29
  %v39 = vld [vmem:[%s1] sm:$0xf]
  %v40 = vld [vmem:[%s1 + $0x4] sm:$0xf]
  %v41 = vld [vmem:[%s1 + $0x8] sm:$0xf]
  %v42 = vld [vmem:[%s1 + $0xc] sm:$0xf]
  %v43 = vld [vmem:[%s1 + $0x10] sm:$0xf]
  %v44 = vld [vmem:[%s1 + $0x14] sm:$0xf]
  %v45 = vld [vmem:[%s2] sm:$0x1]
  %v47 = vlaneseq
  %v48 = vshrl.u32 %v47, 7
  %v49 = vsub.s32 0, %v48
  %v50 = vrot.slane %v45, %v49
  %v58 = vunpack.c.l.b16 %v39
  %v59 = vunpack.c.l.b16 %v40
  %v60 = vunpack.c.l.b16 %v41
  %v61 = vunpack.c.l.b16 %v42
  %v62 = vunpack.c.l.b16 %v43
  %v63 = vunpack.c.l.b16 %v44
  %v64 = vpack.c.b16 %v59, %v58
  %v65 = vpack.c.b16 %v61, %v60
  %v66 = vpack.c.b16 %v63, %v62
  %vm70 = vcmask 392192
  %v72 = vsel %vm70, %v31, 0
  %v75 = vsel %vm70, %v32, 0
  %v78 = vsel %vm70, %v33, 0
  %v81 = vsel %vm70, %v34, 0
  %v84 = vsel %vm70, %v35, 0
  %v87 = vsel %vm70, %v36, 0
  %v90 = vsel %vm70, %v37, 0
  %v93 = vsel %vm70, %v38, 0
  %95 = vmatprep.subr.bf16.mxu0 0
  %96 = vmatpush1.bf16.msra.mxu0 %v64
  %97 = vmatprep.subr.bf16.mxu0 0
  %98 = vmatpush1.bf16.msra.mxu0 %v65
  %99 = vmatprep.subr.bf16.mxu0 0
  %100 = vmatpush1.bf16.msra.mxu0 %v66
  %101 = vmatprep.subr.bf16.mxu0 0
  %102 = vmatpush1.bf16.msra.mxu0 0
  %103 = vmatprep.subr.bf16.mxu0 0
  %104 = vmatpush1.bf16.msra.mxu0 0
  %105 = vmatprep.subr.bf16.mxu0 0
  %106 = vmatpush1.bf16.msra.mxu0 0
  %107 = vmatprep.subr.bf16.mxu0 0
  %108 = vmatpush1.bf16.msra.mxu0 0
  %109 = vmatprep.subr.bf16.mxu0 0
  %110 = vmatpush1.bf16.msra.mxu0 0
  %111 = vmatprep.subr.bf16.mxu0 0
  %112 = vmatpush1.bf16.msra.mxu0 0
  %113 = vmatprep.subr.bf16.mxu0 0
  %114 = vmatpush1.bf16.msra.mxu0 0
  %115 = vmatprep.subr.bf16.mxu0 0
  %116 = vmatpush1.bf16.msra.mxu0 0
  %117 = vmatprep.subr.bf16.mxu0 0
  %118 = vmatpush1.bf16.msra.mxu0 0
  %119 = vmatprep.subr.bf16.mxu0 0
  %120 = vmatpush1.bf16.msra.mxu0 0
  %121 = vmatprep.subr.bf16.mxu0 0
  %122 = vmatpush1.bf16.msra.mxu0 0
  %123 = vmatprep.subr.bf16.mxu0 0
  %124 = vmatpush1.bf16.msra.mxu0 0
  %125 = vmatprep.subr.bf16.mxu0 0
  %126 = vmatpush1.bf16.msra.mxu0 0
  %127 = vmatprep.mubr.bf16.mxu0 0
  %128 = vmatmul.mubr.bf16.gmra.mrb[0].mxu0 %v72
  %v129 = vpop.f32.mrb[0].mxu0
  %v130 = vadd.f32 %v50, %v129
  %v131 = vpop.f32.mrb[0].mxu0
  %v132 = vpop.f32.mrb[0].mxu0
  %v133 = vadd.f32 %v50, %v132
  %v134 = vpop.f32.mrb[0].mxu0
  %135 = vmatprep.mubr.bf16.mxu0 0
  %136 = vmatmul.mubr.bf16.gmra.mrb[0].mxu0 %v75
  %v137 = vpop.f32.mrb[0].mxu0
  %v138 = vadd.f32 %v50, %v137
  %v139 = vpop.f32.mrb[0].mxu0
  %v140 = vpop.f32.mrb[0].mxu0
  %v141 = vadd.f32 %v50, %v140
  %v142 = vpop.f32.mrb[0].mxu0
  %143 = vmatprep.mubr.bf16.mxu0 0
  %144 = vmatmul.mubr.bf16.gmra.mrb[0].mxu0 %v78
  %v145 = vpop.f32.mrb[0].mxu0
  %v146 = vadd.f32 %v50, %v145
  %v147 = vpop.f32.mrb[0].mxu0
  %v148 = vpop.f32.mrb[0].mxu0
  %v149 = vadd.f32 %v50, %v148
  %v150 = vpop.f32.mrb[0].mxu0
  %151 = vmatprep.mubr.bf16.mxu0 0
  %152 = vmatmul.mubr.bf16.gmra.mrb[0].mxu0 %v81
  %v153 = vpop.f32.mrb[0].mxu0
  %v154 = vadd.f32 %v50, %v153
  %v155 = vpop.f32.mrb[0].mxu0
  %v156 = vpop.f32.mrb[0].mxu0
  %v157 = vadd.f32 %v50, %v156
  %v158 = vpop.f32.mrb[0].mxu0
  %159 = vmatprep.mubr.bf16.mxu0 0
  %160 = vmatmul.mubr.bf16.gmra.mrb[0].mxu0 %v84
  %v161 = vpop.f32.mrb[0].mxu0
  %v162 = vadd.f32 %v50, %v161
  %v163 = vpop.f32.mrb[0].mxu0
  %v164 = vpop.f32.mrb[0].mxu0
  %v165 = vadd.f32 %v50, %v164
  %v166 = vpop.f32.mrb[0].mxu0
  %167 = vmatprep.mubr.bf16.mxu0 0
  %168 = vmatmul.mubr.bf16.gmra.mrb[0].mxu0 %v87
  %v169 = vpop.f32.mrb[0].mxu0
  %v170 = vadd.f32 %v50, %v169
  %v171 = vpop.f32.mrb[0].mxu0
  %v172 = vpop.f32.mrb[0].mxu0
  %v173 = vadd.f32 %v50, %v172
  %v174 = vpop.f32.mrb[0].mxu0
  %175 = vmatprep.mubr.bf16.mxu0 0
  %176 = vmatmul.mubr.bf16.gmra.mrb[0].mxu0 %v90
  %v177 = vpop.f32.mrb[0].mxu0
  %v178 = vadd.f32 %v50, %v177
  %v179 = vpop.f32.mrb[0].mxu0
  %v180 = vpop.f32.mrb[0].mxu0
  %v181 = vadd.f32 %v50, %v180
  %v182 = vpop.f32.mrb[0].mxu0
  %183 = vmatprep.mubr.bf16.mxu0 0
  %184 = vmatmul.mubr.bf16.gmra.mrb[0].mxu0 %v93
  %v185 = vpop.f32.mrb[0].mxu0
  %v186 = vadd.f32 %v50, %v185
  %v187 = vpop.f32.mrb[0].mxu0
  %v188 = vpop.f32.mrb[0].mxu0
  %v189 = vadd.f32 %v50, %v188
  %v190 = vpop.f32.mrb[0].mxu0
  %191 = vdwg.mxu0
  %v192 = vmax.f32 %v130, 0.0
  %v193 = vmax.f32 %v133, 0.0
  %v194 = vmax.f32 %v138, 0.0
  %v195 = vmax.f32 %v141, 0.0
  %v196 = vmax.f32 %v146, 0.0
  %v197 = vmax.f32 %v149, 0.0
  %v198 = vmax.f32 %v154, 0.0
  %v199 = vmax.f32 %v157, 0.0
  %v200 = vmax.f32 %v162, 0.0
  %v201 = vmax.f32 %v165, 0.0
  %v202 = vmax.f32 %v170, 0.0
  %v203 = vmax.f32 %v173, 0.0
  %v204 = vmax.f32 %v178, 0.0
  %v205 = vmax.f32 %v181, 0.0
  %v206 = vmax.f32 %v186, 0.0
  %v207 = vmax.f32 %v189, 0.0
  %vm208 = vcmask 130048
  %209 = vst.msk [vmem:[%s3] sm:$0xff] %vm208, %v192
  %210 = vst.msk [vmem:[%s3 + $0x8] sm:$0xff] %vm208, %v193
  %211 = vst.msk [vmem:[%s3 + $0x10] sm:$0xff] %vm208, %v194
  %212 = vst.msk [vmem:[%s3 + $0x18] sm:$0xff] %vm208, %v195
  %213 = vst.msk [vmem:[%s3 + $0x20] sm:$0xff] %vm208, %v196
  %214 = vst.msk [vmem:[%s3 + $0x28] sm:$0xff] %vm208, %v197
  %215 = vst.msk [vmem:[%s3 + $0x30] sm:$0xff] %vm208, %v198
  %216 = vst.msk [vmem:[%s3 + $0x38] sm:$0xff] %vm208, %v199
  %217 = vst.msk [vmem:[%s3 + $0x40] sm:$0xff] %vm208, %v200
  %218 = vst.msk [vmem:[%s3 + $0x48] sm:$0xff] %vm208, %v201
  %219 = vst.msk [vmem:[%s3 + $0x50] sm:$0xff] %vm208, %v202
  %220 = vst.msk [vmem:[%s3 + $0x58] sm:$0xff] %vm208, %v203
  %221 = vst.msk [vmem:[%s3 + $0x60] sm:$0xff] %vm208, %v204
  %222 = vst.msk [vmem:[%s3 + $0x68] sm:$0xff] %vm208, %v205
  %223 = vst.msk [vmem:[%s3 + $0x70] sm:$0xff] %vm208, %v206
  %224 = vst.msk [vmem:[%s3 + $0x78] sm:$0xff] %vm208, %v207
  // Predicated region
  $region14: #{hvq_encoder_forward.16} parent=0 // pred_check
    _
  $region15: #{hvq_encoder_forward.16} parent=0 // pred_check_branch
    %226 = sbr.rel (0) target = $region17
  $region16: #{hvq_encoder_forward.16} parent=0 // pred_region
    _
  $region17: #{hvq_encoder_forward.16} parent=0 // pred_fallthru
    _
  // Predicated region
  $region18: #{hvq_encoder_forward.16} parent=0 // pred_check
    _
  $region19: #{hvq_encoder_forward.16} parent=0 // pred_check_branch
    %228 = sbr.rel (0) target = $region21
  $region20: #{hvq_encoder_forward.16} parent=0 // pred_region
    _
  $region21: #{hvq_encoder_forward.16} parent=0 // pred_fallthru
    _

// kernel: hvq_encoder_forward.17
$region0: #{hvq_encoder_forward.17}
  #allocation0 [shape = 'u32[]', space=smem, size = 0x4, offset = 0x4, fixed_abs, tag = 'smem constant byte address 0x4 - core index']
  #allocation1 [shape = 'u32[144,128]{1,0:T(1,128)}', space=vmem, size = 0x12000, scoped, tag = 'internal scratch']
  %s0 = inlined_call_operand.vmem [shape: f32[32,256], index: 0, kind: input, shape index: {}]
  %s1 = inlined_call_operand.vmem [shape: bf16[256,32], index: 1, kind: input, shape index: {}]
  %s2 = inlined_call_operand.vmem [shape: f32[1,32], index: 2, kind: input, shape index: {}]
  %s3 = inlined_call_operand.vmem [shape: f32[32,32], index: 3, kind: output, shape index: {}]
  %s4 = sld [smem:[#allocation0]]
  $region22: #{hvq_encoder_forward.17} parent=0
    _
  %s6 = ssub.s32 1, %s4
  %s7 = scalar_select 0, %s6, %s4
  // Predicated region
  $region2: #{hvq_encoder_forward.17} parent=0 // pred_check
    _
  $region3: #{hvq_encoder_forward.17} parent=0 // pred_check_branch
    %9 = sbr.rel (0) target = $region5
  $region4: #{hvq_encoder_forward.17} parent=0 // pred_region
    _
  $region5: #{hvq_encoder_forward.17} parent=0 // pred_fallthru
    _
  // Predicated region
  $region6: #{hvq_encoder_forward.17} parent=0 // pred_check
    _
  $region7: #{hvq_encoder_forward.17} parent=0 // pred_check_branch
    %11 = sbr.rel (0) target = $region9
  $region8: #{hvq_encoder_forward.17} parent=0 // pred_region
    _
  $region9: #{hvq_encoder_forward.17} parent=0 // pred_fallthru
    _
  // Predicated region
  $region10: #{hvq_encoder_forward.17} parent=0 // pred_check
    _
  $region11: #{hvq_encoder_forward.17} parent=0 // pred_check_branch
    %13 = sbr.rel (0) target = $region13
  $region12: #{hvq_encoder_forward.17} parent=0 // pred_region
    _
  $region13: #{hvq_encoder_forward.17} parent=0 // pred_fallthru
    _
  %v15 = vld [vmem:[%s0] sm:$0xff]
  %v16 = vld [vmem:[%s0 + $0x8] sm:$0xff]
  %v17 = vld [vmem:[%s0 + $0x10] sm:$0xff]
  %v18 = vld [vmem:[%s0 + $0x18] sm:$0xff]
  %v19 = vld [vmem:[%s0 + $0x20] sm:$0xff]
  %v20 = vld [vmem:[%s0 + $0x28] sm:$0xff]
  %v21 = vld [vmem:[%s0 + $0x30] sm:$0xff]
  %v22 = vld [vmem:[%s0 + $0x38] sm:$0xff]
  %v23 = vpack.c.bf16 %v17, %v15
  %v24 = vpack.c.bf16 %v18, %v16
  %v25 = vpack.c.bf16 %v21, %v19
  %v26 = vpack.c.bf16 %v22, %v20
  %v27 = vld [vmem:[%s1] sm:$0xf]
  %v28 = vld [vmem:[%s1 + $0x4] sm:$0xf]
  %v29 = vld [vmem:[%s1 + $0x8] sm:$0xf]
  %v30 = vld [vmem:[%s1 + $0xc] sm:$0xf]
  %v31 = vld [vmem:[%s1 + $0x10] sm:$0xf]
  %v32 = vld [vmem:[%s1 + $0x14] sm:$0xf]
  %v33 = vld [vmem:[%s1 + $0x18] sm:$0xf]
  %v34 = vld [vmem:[%s1 + $0x1c] sm:$0xf]
  %v35 = vld [vmem:[%s1 + $0x20] sm:$0xf]
  %v36 = vld [vmem:[%s1 + $0x24] sm:$0xf]
  %v37 = vld [vmem:[%s1 + $0x28] sm:$0xf]
  %v38 = vld [vmem:[%s1 + $0x2c] sm:$0xf]
  %v39 = vld [vmem:[%s1 + $0x30] sm:$0xf]
  %v40 = vld [vmem:[%s1 + $0x34] sm:$0xf]
  %v41 = vld [vmem:[%s1 + $0x38] sm:$0xf]
  %v42 = vld [vmem:[%s1 + $0x3c] sm:$0xf]
  %v43 = vld [vmem:[%s1 + $0x40] sm:$0xf]
  %v44 = vld [vmem:[%s1 + $0x44] sm:$0xf]
  %v45 = vld [vmem:[%s1 + $0x48] sm:$0xf]
  %v46 = vld [vmem:[%s1 + $0x4c] sm:$0xf]
  %v47 = vld [vmem:[%s1 + $0x50] sm:$0xf]
  %v48 = vld [vmem:[%s1 + $0x54] sm:$0xf]
  %v49 = vld [vmem:[%s1 + $0x58] sm:$0xf]
  %v50 = vld [vmem:[%s1 + $0x5c] sm:$0xf]
  %v51 = vld [vmem:[%s1 + $0x60] sm:$0xf]
  %v52 = vld [vmem:[%s1 + $0x64] sm:$0xf]
  %v53 = vld [vmem:[%s1 + $0x68] sm:$0xf]
  %v54 = vld [vmem:[%s1 + $0x6c] sm:$0xf]
  %v55 = vld [vmem:[%s1 + $0x70] sm:$0xf]
  %v56 = vld [vmem:[%s1 + $0x74] sm:$0xf]
  %v57 = vld [vmem:[%s1 + $0x78] sm:$0xf]
  %v58 = vld [vmem:[%s1 + $0x7c] sm:$0xf]
  %v59 = vld [vmem:[%s2] sm:$0x1]
  %v61 = vlaneseq
  %v62 = vshrl.u32 %v61, 7
  %v63 = vsub.s32 0, %v62
  %v64 = vrot.slane %v59, %v63
  %v98 = vunpack.c.l.b16 %v27
  %v99 = vunpack.c.l.b16 %v28
  %v100 = vunpack.c.l.b16 %v29
  %v101 = vunpack.c.l.b16 %v30
  %v102 = vunpack.c.l.b16 %v31
  %v103 = vunpack.c.l.b16 %v32
  %v104 = vunpack.c.l.b16 %v33
  %v105 = vunpack.c.l.b16 %v34
  %v106 = vunpack.c.l.b16 %v35
  %v107 = vunpack.c.l.b16 %v36
  %v108 = vunpack.c.l.b16 %v37
  %v109 = vunpack.c.l.b16 %v38
  %v110 = vunpack.c.l.b16 %v39
  %v111 = vunpack.c.l.b16 %v40
  %v112 = vunpack.c.l.b16 %v41
  %v113 = vunpack.c.l.b16 %v42
  %v114 = vunpack.c.l.b16 %v43
  %v115 = vunpack.c.l.b16 %v44
  %v116 = vunpack.c.l.b16 %v45
  %v117 = vunpack.c.l.b16 %v46
  %v118 = vunpack.c.l.b16 %v47
  %v119 = vunpack.c.l.b16 %v48
  %v120 = vunpack.c.l.b16 %v49
  %v121 = vunpack.c.l.b16 %v50
  %v122 = vunpack.c.l.b16 %v51
  %v123 = vunpack.c.l.b16 %v52
  %v124 = vunpack.c.l.b16 %v53
  %v125 = vunpack.c.l.b16 %v54
  %v126 = vunpack.c.l.b16 %v55
  %v127 = vunpack.c.l.b16 %v56
  %v128 = vunpack.c.l.b16 %v57
  %v129 = vunpack.c.l.b16 %v58
  %v130 = vpack.c.b16 %v99, %v98
  %v131 = vpack.c.b16 %v101, %v100
  %v132 = vpack.c.b16 %v103, %v102
  %v133 = vpack.c.b16 %v105, %v104
  %v134 = vpack.c.b16 %v107, %v106
  %v135 = vpack.c.b16 %v109, %v108
  %v136 = vpack.c.b16 %v111, %v110
  %v137 = vpack.c.b16 %v113, %v112
  %v138 = vpack.c.b16 %v115, %v114
  %v139 = vpack.c.b16 %v117, %v116
  %v140 = vpack.c.b16 %v119, %v118
  %v141 = vpack.c.b16 %v121, %v120
  %v142 = vpack.c.b16 %v123, %v122
  %v143 = vpack.c.b16 %v125, %v124
  %v144 = vpack.c.b16 %v127, %v126
  %v145 = vpack.c.b16 %v129, %v128
  %162 = vmatprep.subr.bf16.mxu0 0
  %163 = vmatpush1.bf16.msra.mxu0 %v130
  %164 = vmatprep.subr.bf16.mxu0 0
  %165 = vmatpush1.bf16.msra.mxu0 %v131
  %166 = vmatprep.subr.bf16.mxu0 0
  %167 = vmatpush1.bf16.msra.mxu0 %v132
  %168 = vmatprep.subr.bf16.mxu0 0
  %169 = vmatpush1.bf16.msra.mxu0 %v133
  %170 = vmatprep.subr.bf16.mxu0 0
  %171 = vmatpush1.bf16.msra.mxu0 %v134
  %172 = vmatprep.subr.bf16.mxu0 0
  %173 = vmatpush1.bf16.msra.mxu0 %v135
  %174 = vmatprep.subr.bf16.mxu0 0
  %175 = vmatpush1.bf16.msra.mxu0 %v136
  %176 = vmatprep.subr.bf16.mxu0 0
  %177 = vmatpush1.bf16.msra.mxu0 %v137
  %178 = vmatprep.subr.bf16.mxu0 0
  %179 = vmatpush1.bf16.msra.mxu0 %v138
  %180 = vmatprep.subr.bf16.mxu0 0
  %181 = vmatpush1.bf16.msra.mxu0 %v139
  %182 = vmatprep.subr.bf16.mxu0 0
  %183 = vmatpush1.bf16.msra.mxu0 %v140
  %184 = vmatprep.subr.bf16.mxu0 0
  %185 = vmatpush1.bf16.msra.mxu0 %v141
  %186 = vmatprep.subr.bf16.mxu0 0
  %187 = vmatpush1.bf16.msra.mxu0 %v142
  %188 = vmatprep.subr.bf16.mxu0 0
  %189 = vmatpush1.bf16.msra.mxu0 %v143
  %190 = vmatprep.subr.bf16.mxu0 0
  %191 = vmatpush1.bf16.msra.mxu0 %v144
  %192 = vmatprep.subr.bf16.mxu0 0
  %193 = vmatpush1.bf16.msra.mxu0 %v145
  %194 = vmatprep.mubr.bf16.mxu0 %v24
  %195 = vmatmul.mubr.bf16.gmra.mrb[0].mxu0 %v23
  %v196 = vpop.f32.mrb[0].mxu0
  %v197 = vadd.f32 %v64, %v196
  %v198 = vpop.f32.mrb[0].mxu0
  %v199 = vpop.f32.mrb[0].mxu0
  %v200 = vadd.f32 %v64, %v199
  %v201 = vpop.f32.mrb[0].mxu0
  %202 = vmatprep.mubr.bf16.mxu0 %v26
  %203 = vmatmul.mubr.bf16.gmra.mrb[0].mxu0 %v25
  %v204 = vpop.f32.mrb[0].mxu0
  %v205 = vadd.f32 %v64, %v204
  %v206 = vpop.f32.mrb[0].mxu0
  %v207 = vpop.f32.mrb[0].mxu0
  %v208 = vadd.f32 %v64, %v207
  %v209 = vpop.f32.mrb[0].mxu0
  %210 = vdwg.mxu0
  %v211 = vmax.f32 %v197, 0.0
  %v212 = vmax.f32 %v200, 0.0
  %v213 = vmax.f32 %v205, 0.0
  %v214 = vmax.f32 %v208, 0.0
  %vm215 = vcmask 261120
  %216 = vst.msk [vmem:[%s3] sm:$0xff] %vm215, %v211
  %217 = vst.msk [vmem:[%s3 + $0x8] sm:$0xff] %vm215, %v212
  %218 = vst.msk [vmem:[%s3 + $0x10] sm:$0xff] %vm215, %v213
  %219 = vst.msk [vmem:[%s3 + $0x18] sm:$0xff] %vm215, %v214
  // Predicated region
  $region14: #{hvq_encoder_forward.17} parent=0 // pred_check
    _
  $region15: #{hvq_encoder_forward.17} parent=0 // pred_check_branch
    %221 = sbr.rel (0) target = $region17
  $region16: #{hvq_encoder_forward.17} parent=0 // pred_region
    _
  $region17: #{hvq_encoder_forward.17} parent=0 // pred_fallthru
    _
  // Predicated region
  $region18: #{hvq_encoder_forward.17} parent=0 // pred_check
    _
  $region19: #{hvq_encoder_forward.17} parent=0 // pred_check_branch
    %223 = sbr.rel (0) target = $region21
  $region20: #{hvq_encoder_forward.17} parent=0 // pred_region
    _
  $region21: #{hvq_encoder_forward.17} parent=0 // pred_fallthru
    _

// kernel: hvq_encoder_forward.18
$region0: #{hvq_encoder_forward.18}
  #allocation0 [shape = 'u32[]', space=smem, size = 0x4, offset = 0x4, fixed_abs, tag = 'smem constant byte address 0x4 - core index']
  #allocation1 [shape = 'u32[144,128]{1,0:T(1,128)}', space=vmem, size = 0x12000, scoped, tag = 'internal scratch']
  %s0 = inlined_call_operand.vmem [shape: f32[32,288], index: 0, kind: input, shape index: {}]
  %s1 = inlined_call_operand.vmem [shape: bf16[288,32], index: 1, kind: input, shape index: {}]
  %s2 = inlined_call_operand.vmem [shape: f32[1,32], index: 2, kind: input, shape index: {}]
  %s3 = inlined_call_operand.vmem [shape: f32[32,32], index: 3, kind: output, shape index: {}]
  %s4 = sld [smem:[#allocation0]]
  $region22: #{hvq_encoder_forward.18} parent=0
    _
  %s6 = ssub.s32 1, %s4
  %s7 = scalar_select 0, %s6, %s4
  // Predicated region
  $region2: #{hvq_encoder_forward.18} parent=0 // pred_check
    _
  $region3: #{hvq_encoder_forward.18} parent=0 // pred_check_branch
    %9 = sbr.rel (0) target = $region5
  $region4: #{hvq_encoder_forward.18} parent=0 // pred_region
    _
  $region5: #{hvq_encoder_forward.18} parent=0 // pred_fallthru
    _
  // Predicated region
  $region6: #{hvq_encoder_forward.18} parent=0 // pred_check
    _
  $region7: #{hvq_encoder_forward.18} parent=0 // pred_check_branch
    %11 = sbr.rel (0) target = $region9
  $region8: #{hvq_encoder_forward.18} parent=0 // pred_region
    _
  $region9: #{hvq_encoder_forward.18} parent=0 // pred_fallthru
    _
  // Predicated region
  $region10: #{hvq_encoder_forward.18} parent=0 // pred_check
    _
  $region11: #{hvq_encoder_forward.18} parent=0 // pred_check_branch
    %13 = sbr.rel (0) target = $region13
  $region12: #{hvq_encoder_forward.18} parent=0 // pred_region
    _
  $region13: #{hvq_encoder_forward.18} parent=0 // pred_fallthru
    _
  %v15 = vld [vmem:[%s0] sm:$0xff]
  %v16 = vld [vmem:[%s0 + $0x8] sm:$0xff]
  %v17 = vld [vmem:[%s0 + $0x10] sm:$0xff]
  %v18 = vld [vmem:[%s0 + $0x18] sm:$0xff]
  %v19 = vld [vmem:[%s0 + $0x20] sm:$0xff]
  %v20 = vld [vmem:[%s0 + $0x28] sm:$0xff]
  %v21 = vld [vmem:[%s0 + $0x30] sm:$0xff]
  %v22 = vld [vmem:[%s0 + $0x38] sm:$0xff]
  %v23 = vld [vmem:[%s0 + $0x40] sm:$0xff]
  %v24 = vld [vmem:[%s0 + $0x48] sm:$0xff]
  %v25 = vld [vmem:[%s0 + $0x50] sm:$0xff]
  %v26 = vld [vmem:[%s0 + $0x58] sm:$0xff]
  %v27 = vpack.c.bf16 %v18, %v15
  %v28 = vpack.c.bf16 %v19, %v16
  %v29 = vpack.c.bf16 %v20, %v17
  %v30 = vpack.c.bf16 %v24, %v21
  %v31 = vpack.c.bf16 %v25, %v22
  %v32 = vpack.c.bf16 %v26, %v23
  %v33 = vld [vmem:[%s1] sm:$0xf]
  %v34 = vld [vmem:[%s1 + $0x4] sm:$0xf]
  %v35 = vld [vmem:[%s1 + $0x8] sm:$0xf]
  %v36 = vld [vmem:[%s1 + $0xc] sm:$0xf]
  %v37 = vld [vmem:[%s1 + $0x10] sm:$0xf]
  %v38 = vld [vmem:[%s1 + $0x14] sm:$0xf]
  %v39 = vld [vmem:[%s1 + $0x18] sm:$0xf]
  %v40 = vld [vmem:[%s1 + $0x1c] sm:$0xf]
  %v41 = vld [vmem:[%s1 + $0x20] sm:$0xf]
  %v42 = vld [vmem:[%s1 + $0x24] sm:$0xf]
  %v43 = vld [vmem:[%s1 + $0x28] sm:$0xf]
  %v44 = vld [vmem:[%s1 + $0x2c] sm:$0xf]
  %v45 = vld [vmem:[%s1 + $0x30] sm:$0xf]
  %v46 = vld [vmem:[%s1 + $0x34] sm:$0xf]
  %v47 = vld [vmem:[%s1 + $0x38] sm:$0xf]
  %v48 = vld [vmem:[%s1 + $0x3c] sm:$0xf]
  %v49 = vld [vmem:[%s1 + $0x40] sm:$0xf]
  %v50 = vld [vmem:[%s1 + $0x44] sm:$0xf]
  %v51 = vld [vmem:[%s1 + $0x48] sm:$0xf]
  %v52 = vld [vmem:[%s1 + $0x4c] sm:$0xf]
  %v53 = vld [vmem:[%s1 + $0x50] sm:$0xf]
  %v54 = vld [vmem:[%s1 + $0x54] sm:$0xf]
  %v55 = vld [vmem:[%s1 + $0x58] sm:$0xf]
  %v56 = vld [vmem:[%s1 + $0x5c] sm:$0xf]
  %v57 = vld [vmem:[%s1 + $0x60] sm:$0xf]
  %v58 = vld [vmem:[%s1 + $0x64] sm:$0xf]
  %v59 = vld [vmem:[%s1 + $0x68] sm:$0xf]
  %v60 = vld [vmem:[%s1 + $0x6c] sm:$0xf]
  %v61 = vld [vmem:[%s1 + $0x70] sm:$0xf]
  %v62 = vld [vmem:[%s1 + $0x74] sm:$0xf]
  %v63 = vld [vmem:[%s1 + $0x78] sm:$0xf]
  %v64 = vld [vmem:[%s1 + $0x7c] sm:$0xf]
  %v65 = vld [vmem:[%s1 + $0x80] sm:$0xf]
  %v66 = vld [vmem:[%s1 + $0x84] sm:$0xf]
  %v67 = vld [vmem:[%s1 + $0x88] sm:$0xf]
  %v68 = vld [vmem:[%s1 + $0x8c] sm:$0xf]
  %v69 = vld [vmem:[%s2] sm:$0x1]
  %v71 = vlaneseq
  %v72 = vshrl.u32 %v71, 7
  %v73 = vsub.s32 0, %v72
  %v74 = vrot.slane %v69, %v73
  %v112 = vunpack.c.l.b16 %v33
  %v113 = vunpack.c.l.b16 %v34
  %v114 = vunpack.c.l.b16 %v35
  %v115 = vunpack.c.l.b16 %v36
  %v116 = vunpack.c.l.b16 %v37
  %v117 = vunpack.c.l.b16 %v38
  %v118 = vunpack.c.l.b16 %v39
  %v119 = vunpack.c.l.b16 %v40
  %v120 = vunpack.c.l.b16 %v41
  %v121 = vunpack.c.l.b16 %v42
  %v122 = vunpack.c.l.b16 %v43
  %v123 = vunpack.c.l.b16 %v44
  %v124 = vunpack.c.l.b16 %v45
  %v125 = vunpack.c.l.b16 %v46
  %v126 = vunpack.c.l.b16 %v47
  %v127 = vunpack.c.l.b16 %v48
  %v128 = vunpack.c.l.b16 %v49
  %v129 = vunpack.c.l.b16 %v50
  %v130 = vunpack.c.l.b16 %v51
  %v131 = vunpack.c.l.b16 %v52
  %v132 = vunpack.c.l.b16 %v53
  %v133 = vunpack.c.l.b16 %v54
  %v134 = vunpack.c.l.b16 %v55
  %v135 = vunpack.c.l.b16 %v56
  %v136 = vunpack.c.l.b16 %v57
  %v137 = vunpack.c.l.b16 %v58
  %v138 = vunpack.c.l.b16 %v59
  %v139 = vunpack.c.l.b16 %v60
  %v140 = vunpack.c.l.b16 %v61
  %v141 = vunpack.c.l.b16 %v62
  %v142 = vunpack.c.l.b16 %v63
  %v143 = vunpack.c.l.b16 %v64
  %v144 = vunpack.c.l.b16 %v65
  %v145 = vunpack.c.l.b16 %v66
  %v146 = vunpack.c.l.b16 %v67
  %v147 = vunpack.c.l.b16 %v68
  %v148 = vpack.c.b16 %v113, %v112
  %v149 = vpack.c.b16 %v115, %v114
  %v150 = vpack.c.b16 %v117, %v116
  %v151 = vpack.c.b16 %v119, %v118
  %v152 = vpack.c.b16 %v121, %v120
  %v153 = vpack.c.b16 %v123, %v122
  %v154 = vpack.c.b16 %v125, %v124
  %v155 = vpack.c.b16 %v127, %v126
  %v156 = vpack.c.b16 %v129, %v128
  %v157 = vpack.c.b16 %v131, %v130
  %v158 = vpack.c.b16 %v133, %v132
  %v159 = vpack.c.b16 %v135, %v134
  %v160 = vpack.c.b16 %v137, %v136
  %v161 = vpack.c.b16 %v139, %v138
  %v162 = vpack.c.b16 %v141, %v140
  %v163 = vpack.c.b16 %v143, %v142
  %v164 = vpack.c.b16 %v145, %v144
  %v165 = vpack.c.b16 %v147, %v146
  %vm184 = vcmask 261120
  %v186 = vsel %vm184, %v29, 0
  %v189 = vsel %vm184, %v32, 0
  %191 = vmatprep.subr.bf16.mxu0 0
  %192 = vmatpush1.bf16.msra.mxu0 %v148
  %193 = vmatprep.subr.bf16.mxu0 0
  %194 = vmatpush1.bf16.msra.mxu0 %v149
  %195 = vmatprep.subr.bf16.mxu0 0
  %196 = vmatpush1.bf16.msra.mxu0 %v150
  %197 = vmatprep.subr.bf16.mxu0 0
  %198 = vmatpush1.bf16.msra.mxu0 %v151
  %199 = vmatprep.subr.bf16.mxu0 0
  %200 = vmatpush1.bf16.msra.mxu0 %v152
  %201 = vmatprep.subr.bf16.mxu0 0
  %202 = vmatpush1.bf16.msra.mxu0 %v153
  %203 = vmatprep.subr.bf16.mxu0 0
  %204 = vmatpush1.bf16.msra.mxu0 %v154
  %205 = vmatprep.subr.bf16.mxu0 0
  %206 = vmatpush1.bf16.msra.mxu0 %v155
  %207 = vmatprep.subr.bf16.mxu0 0
  %208 = vmatpush1.bf16.msra.mxu0 %v156
  %209 = vmatprep.subr.bf16.mxu0 0
  %210 = vmatpush1.bf16.msra.mxu0 %v157
  %211 = vmatprep.subr.bf16.mxu0 0
  %212 = vmatpush1.bf16.msra.mxu0 %v158
  %213 = vmatprep.subr.bf16.mxu0 0
  %214 = vmatpush1.bf16.msra.mxu0 %v159
  %215 = vmatprep.subr.bf16.mxu0 0
  %216 = vmatpush1.bf16.msra.mxu0 %v160
  %217 = vmatprep.subr.bf16.mxu0 0
  %218 = vmatpush1.bf16.msra.mxu0 %v161
  %219 = vmatprep.subr.bf16.mxu0 0
  %220 = vmatpush1.bf16.msra.mxu0 %v162
  %221 = vmatprep.subr.bf16.mxu0 0
  %222 = vmatpush1.bf16.msra.mxu0 %v163
  %223 = vmatprep.mubr.bf16.mxu0 %v28
  %224 = vmatmul.mubr.bf16.gmra.mrb[0].mxu0 %v27
  %v225 = vpop.f32.mrb[0].mxu0
  %v226 = vadd.f32 %v74, %v225
  %v227 = vpop.f32.mrb[0].mxu0
  %v228 = vpop.f32.mrb[0].mxu0
  %v229 = vadd.f32 %v74, %v228
  %v230 = vpop.f32.mrb[0].mxu0
  %231 = vmatprep.mubr.bf16.mxu0 %v31
  %232 = vmatmul.mubr.bf16.gmra.mrb[0].mxu0 %v30
  %v233 = vpop.f32.mrb[0].mxu0
  %v234 = vadd.f32 %v74, %v233
  %v235 = vpop.f32.mrb[0].mxu0
  %v236 = vpop.f32.mrb[0].mxu0
  %v237 = vadd.f32 %v74, %v236
  %v238 = vpop.f32.mrb[0].mxu0
  %239 = vdwg.mxu0
  %240 = vmatprep.subr.bf16.mxu0 0
  %241 = vmatpush1.bf16.msra.mxu0 %v164
  %242 = vmatprep.subr.bf16.mxu0 0
  %243 = vmatpush1.bf16.msra.mxu0 %v165
  %244 = vmatprep.subr.bf16.mxu0 0
  %245 = vmatpush1.bf16.msra.mxu0 0
  %246 = vmatprep.subr.bf16.mxu0 0
  %247 = vmatpush1.bf16.msra.mxu0 0
  %248 = vmatprep.subr.bf16.mxu0 0
  %249 = vmatpush1.bf16.msra.mxu0 0
  %250 = vmatprep.subr.bf16.mxu0 0
  %251 = vmatpush1.bf16.msra.mxu0 0
  %252 = vmatprep.subr.bf16.mxu0 0
  %253 = vmatpush1.bf16.msra.mxu0 0
  %254 = vmatprep.subr.bf16.mxu0 0
  %255 = vmatpush1.bf16.msra.mxu0 0
  %256 = vmatprep.subr.bf16.mxu0 0
  %257 = vmatpush1.bf16.msra.mxu0 0
  %258 = vmatprep.subr.bf16.mxu0 0
  %259 = vmatpush1.bf16.msra.mxu0 0
  %260 = vmatprep.subr.bf16.mxu0 0
  %261 = vmatpush1.bf16.msra.mxu0 0
  %262 = vmatprep.subr.bf16.mxu0 0
  %263 = vmatpush1.bf16.msra.mxu0 0
  %264 = vmatprep.subr.bf16.mxu0 0
  %265 = vmatpush1.bf16.msra.mxu0 0
  %266 = vmatprep.subr.bf16.mxu0 0
  %267 = vmatpush1.bf16.msra.mxu0 0
  %268 = vmatprep.subr.bf16.mxu0 0
  %269 = vmatpush1.bf16.msra.mxu0 0
  %270 = vmatprep.subr.bf16.mxu0 0
  %271 = vmatpush1.bf16.msra.mxu0 0
  %272 = vmatprep.mubr.bf16.mxu0 0
  %273 = vmatmul.mubr.bf16.gmra.mrb[0].mxu0 %v186
  %v274 = vpop.f32.mrb[0].mxu0
  %v275 = vadd.f32 %v226, %v274
  %v276 = vpop.f32.mrb[0].mxu0
  %v277 = vpop.f32.mrb[0].mxu0
  %v278 = vadd.f32 %v229, %v277
  %v279 = vpop.f32.mrb[0].mxu0
  %280 = vmatprep.mubr.bf16.mxu0 0
  %281 = vmatmul.mubr.bf16.gmra.mrb[0].mxu0 %v189
  %v282 = vpop.f32.mrb[0].mxu0
  %v283 = vadd.f32 %v234, %v282
  %v284 = vpop.f32.mrb[0].mxu0
  %v285 = vpop.f32.mrb[0].mxu0
  %v286 = vadd.f32 %v237, %v285
  %v287 = vpop.f32.mrb[0].mxu0
  %288 = vdwg.mxu0
  %289 = vst.msk [vmem:[%s3] sm:$0xff] %vm184, %v275
  %290 = vst.msk [vmem:[%s3 + $0x8] sm:$0xff] %vm184, %v278
  %291 = vst.msk [vmem:[%s3 + $0x10] sm:$0xff] %vm184, %v283
  %292 = vst.msk [vmem:[%s3 + $0x18] sm:$0xff] %vm184, %v286
  // Predicated region
  $region14: #{hvq_encoder_forward.18} parent=0 // pred_check
    _
  $region15: #{hvq_encoder_forward.18} parent=0 // pred_check_branch
    %294 = sbr.rel (0) target = $region17
  $region16: #{hvq_encoder_forward.18} parent=0 // pred_region
    _
  $region17: #{hvq_encoder_forward.18} parent=0 // pred_fallthru
    _
  // Predicated region
  $region18: #{hvq_encoder_forward.18} parent=0 // pred_check
    _
  $region19: #{hvq_encoder_forward.18} parent=0 // pred_check_branch
    %296 = sbr.rel (0) target = $region21
  $region20: #{hvq_encoder_forward.18} parent=0 // pred_region
    _
  $region21: #{hvq_encoder_forward.18} parent=0 // pred_fallthru
    _

// kernel: hvq_encoder_forward.19
$region0: #{hvq_encoder_forward.19}
  #allocation0 [shape = 'u32[]', space=smem, size = 0x4, offset = 0x4, fixed_abs, tag = 'smem constant byte address 0x4 - core index']
  #allocation1 [shape = 'u32[144,128]{1,0:T(1,128)}', space=vmem, size = 0x12000, scoped, tag = 'internal scratch']
  %s0 = inlined_call_operand.vmem [shape: f32[32,288], index: 0, kind: input, shape index: {}]
  %s1 = inlined_call_operand.vmem [shape: f32[32,32], index: 1, kind: input, shape index: {}, may-alias: {1,6}]
  %s2 = inlined_call_operand.vmem [shape: bf16[288,16], index: 2, kind: input, shape index: {}]
  %s3 = inlined_call_operand.vmem [shape: f32[1,16], index: 3, kind: input, shape index: {}]
  %s4 = inlined_call_operand.vmem [shape: bf16[16,32], index: 4, kind: input, shape index: {}]
  %s5 = inlined_call_operand.vmem [shape: f32[1,32], index: 5, kind: input, shape index: {}]
  %s6 = inlined_call_operand.vmem [shape: f32[32,32], index: 6, kind: output, shape index: {}, may-alias: {1,6}]
  %s7 = sld [smem:[#allocation0]]
  $region34: #{hvq_encoder_forward.19} parent=0
    _
  %s9 = ssub.s32 1, %s7
  %s10 = scalar_select 0, %s9, %s7
  // Predicated region
  $region2: #{hvq_encoder_forward.19} parent=0 // pred_check
    _
  $region3: #{hvq_encoder_forward.19} parent=0 // pred_check_branch
    %12 = sbr.rel (0) target = $region5
  $region4: #{hvq_encoder_forward.19} parent=0 // pred_region
    _
  $region5: #{hvq_encoder_forward.19} parent=0 // pred_fallthru
    _
  // Predicated region
  $region6: #{hvq_encoder_forward.19} parent=0 // pred_check
    _
  $region7: #{hvq_encoder_forward.19} parent=0 // pred_check_branch
    %14 = sbr.rel (0) target = $region9
  $region8: #{hvq_encoder_forward.19} parent=0 // pred_region
    _
  $region9: #{hvq_encoder_forward.19} parent=0 // pred_fallthru
    _
  // Predicated region
  $region10: #{hvq_encoder_forward.19} parent=0 // pred_check
    _
  $region11: #{hvq_encoder_forward.19} parent=0 // pred_check_branch
    %16 = sbr.rel (0) target = $region13
  $region12: #{hvq_encoder_forward.19} parent=0 // pred_region
    _
  $region13: #{hvq_encoder_forward.19} parent=0 // pred_fallthru
    _
  // Predicated region
  $region14: #{hvq_encoder_forward.19} parent=0 // pred_check
    _
  $region15: #{hvq_encoder_forward.19} parent=0 // pred_check_branch
    %18 = sbr.rel (0) target = $region17
  $region16: #{hvq_encoder_forward.19} parent=0 // pred_region
    _
  $region17: #{hvq_encoder_forward.19} parent=0 // pred_fallthru
    _
  // Predicated region
  $region18: #{hvq_encoder_forward.19} parent=0 // pred_check
    _
  $region19: #{hvq_encoder_forward.19} parent=0 // pred_check_branch
    %20 = sbr.rel (0) target = $region21
  $region20: #{hvq_encoder_forward.19} parent=0 // pred_region
    _
  $region21: #{hvq_encoder_forward.19} parent=0 // pred_fallthru
    _
  // Predicated region
  $region22: #{hvq_encoder_forward.19} parent=0 // pred_check
    _
  $region23: #{hvq_encoder_forward.19} parent=0 // pred_check_branch
    %22 = sbr.rel (0) target = $region25
  $region24: #{hvq_encoder_forward.19} parent=0 // pred_region
    _
  $region25: #{hvq_encoder_forward.19} parent=0 // pred_fallthru
    _
  %v24 = vld [vmem:[%s0] sm:$0xff]
  %v25 = vld [vmem:[%s0 + $0x8] sm:$0xff]
  %v26 = vld [vmem:[%s0 + $0x10] sm:$0xff]
  %v27 = vld [vmem:[%s0 + $0x18] sm:$0xff]
  %v28 = vld [vmem:[%s0 + $0x20] sm:$0xff]
  %v29 = vld [vmem:[%s0 + $0x28] sm:$0xff]
  %v30 = vld [vmem:[%s0 + $0x30] sm:$0xff]
  %v31 = vld [vmem:[%s0 + $0x38] sm:$0xff]
  %v32 = vld [vmem:[%s0 + $0x40] sm:$0xff]
  %v33 = vld [vmem:[%s0 + $0x48] sm:$0xff]
  %v34 = vld [vmem:[%s0 + $0x50] sm:$0xff]
  %v35 = vld [vmem:[%s0 + $0x58] sm:$0xff]
  %v36 = vmax.f32 %v24, 0.0
  %v37 = vmax.f32 %v25, 0.0
  %v38 = vmax.f32 %v26, 0.0
  %v39 = vmax.f32 %v27, 0.0
  %v40 = vmax.f32 %v28, 0.0
  %v41 = vmax.f32 %v29, 0.0
  %v42 = vmax.f32 %v30, 0.0
  %v43 = vmax.f32 %v31, 0.0
  %v44 = vmax.f32 %v32, 0.0
  %v45 = vmax.f32 %v33, 0.0
  %v46 = vmax.f32 %v34, 0.0
  %v47 = vmax.f32 %v35, 0.0
  %v48 = vpack.c.bf16 %v39, %v36
  %v49 = vpack.c.bf16 %v40, %v37
  %v50 = vpack.c.bf16 %v41, %v38
  %v51 = vpack.c.bf16 %v45, %v42
  %v52 = vpack.c.bf16 %v46, %v43
  %v53 = vpack.c.bf16 %v47, %v44
  %v54 = vld [vmem:[%s2] sm:$0xf]
  %v55 = vld [vmem:[%s2 + $0x4] sm:$0xf]
  %v56 = vld [vmem:[%s2 + $0x8] sm:$0xf]
  %v57 = vld [vmem:[%s2 + $0xc] sm:$0xf]
  %v58 = vld [vmem:[%s2 + $0x10] sm:$0xf]
  %v59 = vld [vmem:[%s2 + $0x14] sm:$0xf]
  %v60 = vld [vmem:[%s2 + $0x18] sm:$0xf]
  %v61 = vld [vmem:[%s2 + $0x1c] sm:$0xf]
  %v62 = vld [vmem:[%s2 + $0x20] sm:$0xf]
  %v63 = vld [vmem:[%s2 + $0x24] sm:$0xf]
  %v64 = vld [vmem:[%s2 + $0x28] sm:$0xf]
  %v65 = vld [vmem:[%s2 + $0x2c] sm:$0xf]
  %v66 = vld [vmem:[%s2 + $0x30] sm:$0xf]
  %v67 = vld [vmem:[%s2 + $0x34] sm:$0xf]
  %v68 = vld [vmem:[%s2 + $0x38] sm:$0xf]
  %v69 = vld [vmem:[%s2 + $0x3c] sm:$0xf]
  %v70 = vld [vmem:[%s2 + $0x40] sm:$0xf]
  %v71 = vld [vmem:[%s2 + $0x44] sm:$0xf]
  %v72 = vld [vmem:[%s2 + $0x48] sm:$0xf]
  %v73 = vld [vmem:[%s2 + $0x4c] sm:$0xf]
  %v74 = vld [vmem:[%s2 + $0x50] sm:$0xf]
  %v75 = vld [vmem:[%s2 + $0x54] sm:$0xf]
  %v76 = vld [vmem:[%s2 + $0x58] sm:$0xf]
  %v77 = vld [vmem:[%s2 + $0x5c] sm:$0xf]
  %v78 = vld [vmem:[%s2 + $0x60] sm:$0xf]
  %v79 = vld [vmem:[%s2 + $0x64] sm:$0xf]
  %v80 = vld [vmem:[%s2 + $0x68] sm:$0xf]
  %v81 = vld [vmem:[%s2 + $0x6c] sm:$0xf]
  %v82 = vld [vmem:[%s2 + $0x70] sm:$0xf]
  %v83 = vld [vmem:[%s2 + $0x74] sm:$0xf]
  %v84 = vld [vmem:[%s2 + $0x78] sm:$0xf]
  %v85 = vld [vmem:[%s2 + $0x7c] sm:$0xf]
  %v86 = vld [vmem:[%s2 + $0x80] sm:$0xf]
  %v87 = vld [vmem:[%s2 + $0x84] sm:$0xf]
  %v88 = vld [vmem:[%s2 + $0x88] sm:$0xf]
  %v89 = vld [vmem:[%s2 + $0x8c] sm:$0xf]
  %v90 = vld [vmem:[%s3] sm:$0x1]
  %v92 = vlaneseq
  %v93 = vshrl.u32 %v92, 7
  %v94 = vsub.s32 0, %v93
  %v95 = vrot.slane %v90, %v94
  %v133 = vunpack.c.l.b16 %v54
  %v134 = vunpack.c.l.b16 %v55
  %v135 = vunpack.c.l.b16 %v56
  %v136 = vunpack.c.l.b16 %v57
  %v137 = vunpack.c.l.b16 %v58
  %v138 = vunpack.c.l.b16 %v59
  %v139 = vunpack.c.l.b16 %v60
  %v140 = vunpack.c.l.b16 %v61
  %v141 = vunpack.c.l.b16 %v62
  %v142 = vunpack.c.l.b16 %v63
  %v143 = vunpack.c.l.b16 %v64
  %v144 = vunpack.c.l.b16 %v65
  %v145 = vunpack.c.l.b16 %v66
  %v146 = vunpack.c.l.b16 %v67
  %v147 = vunpack.c.l.b16 %v68
  %v148 = vunpack.c.l.b16 %v69
  %v149 = vunpack.c.l.b16 %v70
  %v150 = vunpack.c.l.b16 %v71
  %v151 = vunpack.c.l.b16 %v72
  %v152 = vunpack.c.l.b16 %v73
  %v153 = vunpack.c.l.b16 %v74
  %v154 = vunpack.c.l.b16 %v75
  %v155 = vunpack.c.l.b16 %v76
  %v156 = vunpack.c.l.b16 %v77
  %v157 = vunpack.c.l.b16 %v78
  %v158 = vunpack.c.l.b16 %v79
  %v159 = vunpack.c.l.b16 %v80
  %v160 = vunpack.c.l.b16 %v81
  %v161 = vunpack.c.l.b16 %v82
  %v162 = vunpack.c.l.b16 %v83
  %v163 = vunpack.c.l.b16 %v84
  %v164 = vunpack.c.l.b16 %v85
  %v165 = vunpack.c.l.b16 %v86
  %v166 = vunpack.c.l.b16 %v87
  %v167 = vunpack.c.l.b16 %v88
  %v168 = vunpack.c.l.b16 %v89
  %v169 = vpack.c.b16 %v134, %v133
  %v170 = vpack.c.b16 %v136, %v135
  %v171 = vpack.c.b16 %v138, %v137
  %v172 = vpack.c.b16 %v140, %v139
  %v173 = vpack.c.b16 %v142, %v141
  %v174 = vpack.c.b16 %v144, %v143
  %v175 = vpack.c.b16 %v146, %v145
  %v176 = vpack.c.b16 %v148, %v147
  %v177 = vpack.c.b16 %v150, %v149
  %v178 = vpack.c.b16 %v152, %v151
  %v179 = vpack.c.b16 %v154, %v153
  %v180 = vpack.c.b16 %v156, %v155
  %v181 = vpack.c.b16 %v158, %v157
  %v182 = vpack.c.b16 %v160, %v159
  %v183 = vpack.c.b16 %v162, %v161
  %v184 = vpack.c.b16 %v164, %v163
  %v185 = vpack.c.b16 %v166, %v165
  %v186 = vpack.c.b16 %v168, %v167
  %vm205 = vcmask 261120
  %v207 = vsel %vm205, %v50, 0
  %v210 = vsel %vm205, %v53, 0
  %212 = vmatprep.subr.bf16.mxu0 0
  %213 = vmatpush1.bf16.msra.mxu0 %v169
  %214 = vmatprep.subr.bf16.mxu0 0
  %215 = vmatpush1.bf16.msra.mxu0 %v170
  %216 = vmatprep.subr.bf16.mxu0 0
  %217 = vmatpush1.bf16.msra.mxu0 %v171
  %218 = vmatprep.subr.bf16.mxu0 0
  %219 = vmatpush1.bf16.msra.mxu0 %v172
  %220 = vmatprep.subr.bf16.mxu0 0
  %221 = vmatpush1.bf16.msra.mxu0 %v173
  %222 = vmatprep.subr.bf16.mxu0 0
  %223 = vmatpush1.bf16.msra.mxu0 %v174
  %224 = vmatprep.subr.bf16.mxu0 0
  %225 = vmatpush1.bf16.msra.mxu0 %v175
  %226 = vmatprep.subr.bf16.mxu0 0
  %227 = vmatpush1.bf16.msra.mxu0 %v176
  %228 = vmatprep.subr.bf16.mxu0 0
  %229 = vmatpush1.bf16.msra.mxu0 %v177
  %230 = vmatprep.subr.bf16.mxu0 0
  %231 = vmatpush1.bf16.msra.mxu0 %v178
  %232 = vmatprep.subr.bf16.mxu0 0
  %233 = vmatpush1.bf16.msra.mxu0 %v179
  %234 = vmatprep.subr.bf16.mxu0 0
  %235 = vmatpush1.bf16.msra.mxu0 %v180
  %236 = vmatprep.subr.bf16.mxu0 0
  %237 = vmatpush1.bf16.msra.mxu0 %v181
  %238 = vmatprep.subr.bf16.mxu0 0
  %239 = vmatpush1.bf16.msra.mxu0 %v182
  %240 = vmatprep.subr.bf16.mxu0 0
  %241 = vmatpush1.bf16.msra.mxu0 %v183
  %242 = vmatprep.subr.bf16.mxu0 0
  %243 = vmatpush1.bf16.msra.mxu0 %v184
  %244 = vmatprep.mubr.bf16.mxu0 %v49
  %245 = vmatmul.mubr.bf16.gmra.mrb[0].mxu0 %v48
  %v246 = vpop.f32.mrb[0].mxu0
  %v247 = vadd.f32 %v95, %v246
  %v248 = vpop.f32.mrb[0].mxu0
  %v249 = vpop.f32.mrb[0].mxu0
  %v250 = vadd.f32 %v95, %v249
  %v251 = vpop.f32.mrb[0].mxu0
  %252 = vmatprep.mubr.bf16.mxu0 %v52
  %253 = vmatmul.mubr.bf16.gmra.mrb[0].mxu0 %v51
  %v254 = vpop.f32.mrb[0].mxu0
  %v255 = vadd.f32 %v95, %v254
  %v256 = vpop.f32.mrb[0].mxu0
  %v257 = vpop.f32.mrb[0].mxu0
  %v258 = vadd.f32 %v95, %v257
  %v259 = vpop.f32.mrb[0].mxu0
  %260 = vdwg.mxu0
  %261 = vmatprep.subr.bf16.mxu0 0
  %262 = vmatpush1.bf16.msra.mxu0 %v185
  %263 = vmatprep.subr.bf16.mxu0 0
  %264 = vmatpush1.bf16.msra.mxu0 %v186
  %265 = vmatprep.subr.bf16.mxu0 0
  %266 = vmatpush1.bf16.msra.mxu0 0
  %267 = vmatprep.subr.bf16.mxu0 0
  %268 = vmatpush1.bf16.msra.mxu0 0
  %269 = vmatprep.subr.bf16.mxu0 0
  %270 = vmatpush1.bf16.msra.mxu0 0
  %271 = vmatprep.subr.bf16.mxu0 0
  %272 = vmatpush1.bf16.msra.mxu0 0
  %273 = vmatprep.subr.bf16.mxu0 0
  %274 = vmatpush1.bf16.msra.mxu0 0
  %275 = vmatprep.subr.bf16.mxu0 0
  %276 = vmatpush1.bf16.msra.mxu0 0
  %277 = vmatprep.subr.bf16.mxu0 0
  %278 = vmatpush1.bf16.msra.mxu0 0
  %279 = vmatprep.subr.bf16.mxu0 0
  %280 = vmatpush1.bf16.msra.mxu0 0
  %281 = vmatprep.subr.bf16.mxu0 0
  %282 = vmatpush1.bf16.msra.mxu0 0
  %283 = vmatprep.subr.bf16.mxu0 0
  %284 = vmatpush1.bf16.msra.mxu0 0
  %285 = vmatprep.subr.bf16.mxu0 0
  %286 = vmatpush1.bf16.msra.mxu0 0
  %287 = vmatprep.subr.bf16.mxu0 0
  %288 = vmatpush1.bf16.msra.mxu0 0
  %289 = vmatprep.subr.bf16.mxu0 0
  %290 = vmatpush1.bf16.msra.mxu0 0
  %291 = vmatprep.subr.bf16.mxu0 0
  %292 = vmatpush1.bf16.msra.mxu0 0
  %293 = vmatprep.mubr.bf16.mxu0 0
  %294 = vmatmul.mubr.bf16.gmra.mrb[0].mxu0 %v207
  %v295 = vpop.f32.mrb[0].mxu0
  %v296 = vadd.f32 %v247, %v295
  %v297 = vpop.f32.mrb[0].mxu0
  %v298 = vpop.f32.mrb[0].mxu0
  %v299 = vadd.f32 %v250, %v298
  %v300 = vpop.f32.mrb[0].mxu0
  %301 = vmatprep.mubr.bf16.mxu0 0
  %302 = vmatmul.mubr.bf16.gmra.mrb[0].mxu0 %v210
  %v303 = vpop.f32.mrb[0].mxu0
  %v304 = vadd.f32 %v255, %v303
  %v305 = vpop.f32.mrb[0].mxu0
  %v306 = vpop.f32.mrb[0].mxu0
  %v307 = vadd.f32 %v258, %v306
  %v308 = vpop.f32.mrb[0].mxu0
  %309 = vdwg.mxu0
  %v310 = vmax.f32 %v296, 0.0
  %v311 = vmax.f32 %v299, 0.0
  %v312 = vmax.f32 %v304, 0.0
  %v313 = vmax.f32 %v307, 0.0
  %v314 = vpack.c.bf16 %v311, %v310
  %v315 = vpack.c.bf16 %v313, %v312
  %v316 = vld [vmem:[%s4] sm:$0xf]
  %v317 = vld [vmem:[%s4 + $0x4] sm:$0xf]
  %v318 = vld [vmem:[%s5] sm:$0x1]
  %v320 = vlaneseq
  %v321 = vshrl.u32 %v320, 7
  %v322 = vsub.s32 0, %v321
  %v323 = vrot.slane %v318, %v322
  %v327 = vunpack.c.l.b16 %v316
  %v328 = vunpack.c.l.b16 %v317
  %v329 = vpack.c.b16 %v328, %v327
  %vm331 = vcmask 130048
  %v333 = vsel %vm331, %v314, 0
  %v336 = vsel %vm331, %v315, 0
  %338 = vmatprep.subr.bf16.mxu0 0
  %339 = vmatpush1.bf16.msra.mxu0 %v329
  %340 = vmatprep.subr.bf16.mxu0 0
  %341 = vmatpush1.bf16.msra.mxu0 0
  %342 = vmatprep.subr.bf16.mxu0 0
  %343 = vmatpush1.bf16.msra.mxu0 0
  %344 = vmatprep.subr.bf16.mxu0 0
  %345 = vmatpush1.bf16.msra.mxu0 0
  %346 = vmatprep.subr.bf16.mxu0 0
  %347 = vmatpush1.bf16.msra.mxu0 0
  %348 = vmatprep.subr.bf16.mxu0 0
  %349 = vmatpush1.bf16.msra.mxu0 0
  %350 = vmatprep.subr.bf16.mxu0 0
  %351 = vmatpush1.bf16.msra.mxu0 0
  %352 = vmatprep.subr.bf16.mxu0 0
  %353 = vmatpush1.bf16.msra.mxu0 0
  %354 = vmatprep.subr.bf16.mxu0 0
  %355 = vmatpush1.bf16.msra.mxu0 0
  %356 = vmatprep.subr.bf16.mxu0 0
  %357 = vmatpush1.bf16.msra.mxu0 0
  %358 = vmatprep.subr.bf16.mxu0 0
  %359 = vmatpush1.bf16.msra.mxu0 0
  %360 = vmatprep.subr.bf16.mxu0 0
  %361 = vmatpush1.bf16.msra.mxu0 0
  %362 = vmatprep.subr.bf16.mxu0 0
  %363 = vmatpush1.bf16.msra.mxu0 0
  %364 = vmatprep.subr.bf16.mxu0 0
  %365 = vmatpush1.bf16.msra.mxu0 0
  %366 = vmatprep.subr.bf16.mxu0 0
  %367 = vmatpush1.bf16.msra.mxu0 0
  %368 = vmatprep.subr.bf16.mxu0 0
  %369 = vmatpush1.bf16.msra.mxu0 0
  %370 = vmatprep.mubr.bf16.mxu0 0
  %371 = vmatmul.mubr.bf16.gmra.mrb[0].mxu0 %v333
  %v372 = vpop.f32.mrb[0].mxu0
  %v373 = vadd.f32 %v323, %v372
  %v374 = vpop.f32.mrb[0].mxu0
  %v375 = vpop.f32.mrb[0].mxu0
  %v376 = vadd.f32 %v323, %v375
  %v377 = vpop.f32.mrb[0].mxu0
  %378 = vmatprep.mubr.bf16.mxu0 0
  %379 = vmatmul.mubr.bf16.gmra.mrb[0].mxu0 %v336
  %v380 = vpop.f32.mrb[0].mxu0
  %v381 = vadd.f32 %v323, %v380
  %v382 = vpop.f32.mrb[0].mxu0
  %v383 = vpop.f32.mrb[0].mxu0
  %v384 = vadd.f32 %v323, %v383
  %v385 = vpop.f32.mrb[0].mxu0
  %386 = vdwg.mxu0
  %v387 = vld [vmem:[%s1] sm:$0xff]
  %v388 = vld [vmem:[%s1 + $0x8] sm:$0xff]
  %v389 = vld [vmem:[%s1 + $0x10] sm:$0xff]
  %v390 = vld [vmem:[%s1 + $0x18] sm:$0xff]
  %v391 = vadd.f32 %v373, %v387
  %v392 = vadd.f32 %v376, %v388
  %v393 = vadd.f32 %v381, %v389
  %v394 = vadd.f32 %v384, %v390
  %395 = vst.msk [vmem:[%s6] sm:$0xff] %vm205, %v391
  %396 = vst.msk [vmem:[%s6 + $0x8] sm:$0xff] %vm205, %v392
  %397 = vst.msk [vmem:[%s6 + $0x10] sm:$0xff] %vm205, %v393
  %398 = vst.msk [vmem:[%s6 + $0x18] sm:$0xff] %vm205, %v394
  // Predicated region
  $region26: #{hvq_encoder_forward.19} parent=0 // pred_check
    _
  $region27: #{hvq_encoder_forward.19} parent=0 // pred_check_branch
    %400 = sbr.rel (0) target = $region29
  $region28: #{hvq_encoder_forward.19} parent=0 // pred_region
    _
  $region29: #{hvq_encoder_forward.19} parent=0 // pred_fallthru
    _
  // Predicated region
  $region30: #{hvq_encoder_forward.19} parent=0 // pred_check
    _
  $region31: #{hvq_encoder_forward.19} parent=0 // pred_check_branch
    %402 = sbr.rel (0) target = $region33
  $region32: #{hvq_encoder_forward.19} parent=0 // pred_region
    _
  $region33: #{hvq_encoder_forward.19} parent=0 // pred_fallthru
    _

// kernel: hvq_encoder_forward.20
$region0: #{hvq_encoder_forward.20}
  #allocation0 [shape = 'u32[]', space=smem, size = 0x4, offset = 0x4, fixed_abs, tag = 'smem constant byte address 0x4 - core index']
  #allocation1 [shape = 'u32[144,128]{1,0:T(1,128)}', space=vmem, size = 0x12000, scoped, tag = 'internal scratch']
  %s0 = inlined_call_operand.vmem [shape: f32[32,288], index: 0, kind: input, shape index: {}]
  %s1 = inlined_call_operand.vmem [shape: f32[32,32], index: 1, kind: input, shape index: {}, may-alias: {1,6}]
  %s2 = inlined_call_operand.vmem [shape: bf16[288,16], index: 2, kind: input, shape index: {}]
  %s3 = inlined_call_operand.vmem [shape: f32[1,16], index: 3, kind: input, shape index: {}]
  %s4 = inlined_call_operand.vmem [shape: bf16[16,32], index: 4, kind: input, shape index: {}]
  %s5 = inlined_call_operand.vmem [shape: f32[1,32], index: 5, kind: input, shape index: {}]
  %s6 = inlined_call_operand.vmem [shape: f32[32,32], index: 6, kind: output, shape index: {}, may-alias: {1,6}]
  %s7 = sld [smem:[#allocation0]]
  $region34: #{hvq_encoder_forward.20} parent=0
    _
  %s9 = ssub.s32 1, %s7
  %s10 = scalar_select 0, %s9, %s7
  // Predicated region
  $region2: #{hvq_encoder_forward.20} parent=0 // pred_check
    _
  $region3: #{hvq_encoder_forward.20} parent=0 // pred_check_branch
    %12 = sbr.rel (0) target = $region5
  $region4: #{hvq_encoder_forward.20} parent=0 // pred_region
    _
  $region5: #{hvq_encoder_forward.20} parent=0 // pred_fallthru
    _
  // Predicated region
  $region6: #{hvq_encoder_forward.20} parent=0 // pred_check
    _
  $region7: #{hvq_encoder_forward.20} parent=0 // pred_check_branch
    %14 = sbr.rel (0) target = $region9
  $region8: #{hvq_encoder_forward.20} parent=0 // pred_region
    _
  $region9: #{hvq_encoder_forward.20} parent=0 // pred_fallthru
    _
  // Predicated region
  $region10: #{hvq_encoder_forward.20} parent=0 // pred_check
    _
  $region11: #{hvq_encoder_forward.20} parent=0 // pred_check_branch
    %16 = sbr.rel (0) target = $region13
  $region12: #{hvq_encoder_forward.20} parent=0 // pred_region
    _
  $region13: #{hvq_encoder_forward.20} parent=0 // pred_fallthru
    _
  // Predicated region
  $region14: #{hvq_encoder_forward.20} parent=0 // pred_check
    _
  $region15: #{hvq_encoder_forward.20} parent=0 // pred_check_branch
    %18 = sbr.rel (0) target = $region17
  $region16: #{hvq_encoder_forward.20} parent=0 // pred_region
    _
  $region17: #{hvq_encoder_forward.20} parent=0 // pred_fallthru
    _
  // Predicated region
  $region18: #{hvq_encoder_forward.20} parent=0 // pred_check
    _
  $region19: #{hvq_encoder_forward.20} parent=0 // pred_check_branch
    %20 = sbr.rel (0) target = $region21
  $region20: #{hvq_encoder_forward.20} parent=0 // pred_region
    _
  $region21: #{hvq_encoder_forward.20} parent=0 // pred_fallthru
    _
  // Predicated region
  $region22: #{hvq_encoder_forward.20} parent=0 // pred_check
    _
  $region23: #{hvq_encoder_forward.20} parent=0 // pred_check_branch
    %22 = sbr.rel (0) target = $region25
  $region24: #{hvq_encoder_forward.20} parent=0 // pred_region
    _
  $region25: #{hvq_encoder_forward.20} parent=0 // pred_fallthru
    _
  %v24 = vld [vmem:[%s0] sm:$0xff]
  %v25 = vld [vmem:[%s0 + $0x8] sm:$0xff]
  %v26 = vld [vmem:[%s0 + $0x10] sm:$0xff]
  %v27 = vld [vmem:[%s0 + $0x18] sm:$0xff]
  %v28 = vld [vmem:[%s0 + $0x20] sm:$0xff]
  %v29 = vld [vmem:[%s0 + $0x28] sm:$0xff]
  %v30 = vld [vmem:[%s0 + $0x30] sm:$0xff]
  %v31 = vld [vmem:[%s0 + $0x38] sm:$0xff]
  %v32 = vld [vmem:[%s0 + $0x40] sm:$0xff]
  %v33 = vld [vmem:[%s0 + $0x48] sm:$0xff]
  %v34 = vld [vmem:[%s0 + $0x50] sm:$0xff]
  %v35 = vld [vmem:[%s0 + $0x58] sm:$0xff]
  %v36 = vmax.f32 %v24, 0.0
  %v37 = vmax.f32 %v25, 0.0
  %v38 = vmax.f32 %v26, 0.0
  %v39 = vmax.f32 %v27, 0.0
  %v40 = vmax.f32 %v28, 0.0
  %v41 = vmax.f32 %v29, 0.0
  %v42 = vmax.f32 %v30, 0.0
  %v43 = vmax.f32 %v31, 0.0
  %v44 = vmax.f32 %v32, 0.0
  %v45 = vmax.f32 %v33, 0.0
  %v46 = vmax.f32 %v34, 0.0
  %v47 = vmax.f32 %v35, 0.0
  %v48 = vpack.c.bf16 %v39, %v36
  %v49 = vpack.c.bf16 %v40, %v37
  %v50 = vpack.c.bf16 %v41, %v38
  %v51 = vpack.c.bf16 %v45, %v42
  %v52 = vpack.c.bf16 %v46, %v43
  %v53 = vpack.c.bf16 %v47, %v44
  %v54 = vld [vmem:[%s2] sm:$0xf]
  %v55 = vld [vmem:[%s2 + $0x4] sm:$0xf]
  %v56 = vld [vmem:[%s2 + $0x8] sm:$0xf]
  %v57 = vld [vmem:[%s2 + $0xc] sm:$0xf]
  %v58 = vld [vmem:[%s2 + $0x10] sm:$0xf]
  %v59 = vld [vmem:[%s2 + $0x14] sm:$0xf]
  %v60 = vld [vmem:[%s2 + $0x18] sm:$0xf]
  %v61 = vld [vmem:[%s2 + $0x1c] sm:$0xf]
  %v62 = vld [vmem:[%s2 + $0x20] sm:$0xf]
  %v63 = vld [vmem:[%s2 + $0x24] sm:$0xf]
  %v64 = vld [vmem:[%s2 + $0x28] sm:$0xf]
  %v65 = vld [vmem:[%s2 + $0x2c] sm:$0xf]
  %v66 = vld [vmem:[%s2 + $0x30] sm:$0xf]
  %v67 = vld [vmem:[%s2 + $0x34] sm:$0xf]
  %v68 = vld [vmem:[%s2 + $0x38] sm:$0xf]
  %v69 = vld [vmem:[%s2 + $0x3c] sm:$0xf]
  %v70 = vld [vmem:[%s2 + $0x40] sm:$0xf]
  %v71 = vld [vmem:[%s2 + $0x44] sm:$0xf]
  %v72 = vld [vmem:[%s2 + $0x48] sm:$0xf]
  %v73 = vld [vmem:[%s2 + $0x4c] sm:$0xf]
  %v74 = vld [vmem:[%s2 + $0x50] sm:$0xf]
  %v75 = vld [vmem:[%s2 + $0x54] sm:$0xf]
  %v76 = vld [vmem:[%s2 + $0x58] sm:$0xf]
  %v77 = vld [vmem:[%s2 + $0x5c] sm:$0xf]
  %v78 = vld [vmem:[%s2 + $0x60] sm:$0xf]
  %v79 = vld [vmem:[%s2 + $0x64] sm:$0xf]
  %v80 = vld [vmem:[%s2 + $0x68] sm:$0xf]
  %v81 = vld [vmem:[%s2 + $0x6c] sm:$0xf]
  %v82 = vld [vmem:[%s2 + $0x70] sm:$0xf]
  %v83 = vld [vmem:[%s2 + $0x74] sm:$0xf]
  %v84 = vld [vmem:[%s2 + $0x78] sm:$0xf]
  %v85 = vld [vmem:[%s2 + $0x7c] sm:$0xf]
  %v86 = vld [vmem:[%s2 + $0x80] sm:$0xf]
  %v87 = vld [vmem:[%s2 + $0x84] sm:$0xf]
  %v88 = vld [vmem:[%s2 + $0x88] sm:$0xf]
  %v89 = vld [vmem:[%s2 + $0x8c] sm:$0xf]
  %v90 = vld [vmem:[%s3] sm:$0x1]
  %v92 = vlaneseq
  %v93 = vshrl.u32 %v92, 7
  %v94 = vsub.s32 0, %v93
  %v95 = vrot.slane %v90, %v94
  %v133 = vunpack.c.l.b16 %v54
  %v134 = vunpack.c.l.b16 %v55
  %v135 = vunpack.c.l.b16 %v56
  %v136 = vunpack.c.l.b16 %v57
  %v137 = vunpack.c.l.b16 %v58
  %v138 = vunpack.c.l.b16 %v59
  %v139 = vunpack.c.l.b16 %v60
  %v140 = vunpack.c.l.b16 %v61
  %v141 = vunpack.c.l.b16 %v62
  %v142 = vunpack.c.l.b16 %v63
  %v143 = vunpack.c.l.b16 %v64
  %v144 = vunpack.c.l.b16 %v65
  %v145 = vunpack.c.l.b16 %v66
  %v146 = vunpack.c.l.b16 %v67
  %v147 = vunpack.c.l.b16 %v68
  %v148 = vunpack.c.l.b16 %v69
  %v149 = vunpack.c.l.b16 %v70
  %v150 = vunpack.c.l.b16 %v71
  %v151 = vunpack.c.l.b16 %v72
  %v152 = vunpack.c.l.b16 %v73
  %v153 = vunpack.c.l.b16 %v74
  %v154 = vunpack.c.l.b16 %v75
  %v155 = vunpack.c.l.b16 %v76
  %v156 = vunpack.c.l.b16 %v77
  %v157 = vunpack.c.l.b16 %v78
  %v158 = vunpack.c.l.b16 %v79
  %v159 = vunpack.c.l.b16 %v80
  %v160 = vunpack.c.l.b16 %v81
  %v161 = vunpack.c.l.b16 %v82
  %v162 = vunpack.c.l.b16 %v83
  %v163 = vunpack.c.l.b16 %v84
  %v164 = vunpack.c.l.b16 %v85
  %v165 = vunpack.c.l.b16 %v86
  %v166 = vunpack.c.l.b16 %v87
  %v167 = vunpack.c.l.b16 %v88
  %v168 = vunpack.c.l.b16 %v89
  %v169 = vpack.c.b16 %v134, %v133
  %v170 = vpack.c.b16 %v136, %v135
  %v171 = vpack.c.b16 %v138, %v137
  %v172 = vpack.c.b16 %v140, %v139
  %v173 = vpack.c.b16 %v142, %v141
  %v174 = vpack.c.b16 %v144, %v143
  %v175 = vpack.c.b16 %v146, %v145
  %v176 = vpack.c.b16 %v148, %v147
  %v177 = vpack.c.b16 %v150, %v149
  %v178 = vpack.c.b16 %v152, %v151
  %v179 = vpack.c.b16 %v154, %v153
  %v180 = vpack.c.b16 %v156, %v155
  %v181 = vpack.c.b16 %v158, %v157
  %v182 = vpack.c.b16 %v160, %v159
  %v183 = vpack.c.b16 %v162, %v161
  %v184 = vpack.c.b16 %v164, %v163
  %v185 = vpack.c.b16 %v166, %v165
  %v186 = vpack.c.b16 %v168, %v167
  %vm205 = vcmask 261120
  %v207 = vsel %vm205, %v50, 0
  %v210 = vsel %vm205, %v53, 0
  %212 = vmatprep.subr.bf16.mxu0 0
  %213 = vmatpush1.bf16.msra.mxu0 %v169
  %214 = vmatprep.subr.bf16.mxu0 0
  %215 = vmatpush1.bf16.msra.mxu0 %v170
  %216 = vmatprep.subr.bf16.mxu0 0
  %217 = vmatpush1.bf16.msra.mxu0 %v171
  %218 = vmatprep.subr.bf16.mxu0 0
  %219 = vmatpush1.bf16.msra.mxu0 %v172
  %220 = vmatprep.subr.bf16.mxu0 0
  %221 = vmatpush1.bf16.msra.mxu0 %v173
  %222 = vmatprep.subr.bf16.mxu0 0
  %223 = vmatpush1.bf16.msra.mxu0 %v174
  %224 = vmatprep.subr.bf16.mxu0 0
  %225 = vmatpush1.bf16.msra.mxu0 %v175
  %226 = vmatprep.subr.bf16.mxu0 0
  %227 = vmatpush1.bf16.msra.mxu0 %v176
  %228 = vmatprep.subr.bf16.mxu0 0
  %229 = vmatpush1.bf16.msra.mxu0 %v177
  %230 = vmatprep.subr.bf16.mxu0 0
  %231 = vmatpush1.bf16.msra.mxu0 %v178
  %232 = vmatprep.subr.bf16.mxu0 0
  %233 = vmatpush1.bf16.msra.mxu0 %v179
  %234 = vmatprep.subr.bf16.mxu0 0
  %235 = vmatpush1.bf16.msra.mxu0 %v180
  %236 = vmatprep.subr.bf16.mxu0 0
  %237 = vmatpush1.bf16.msra.mxu0 %v181
  %238 = vmatprep.subr.bf16.mxu0 0
  %239 = vmatpush1.bf16.msra.mxu0 %v182
  %240 = vmatprep.subr.bf16.mxu0 0
  %241 = vmatpush1.bf16.msra.mxu0 %v183
  %242 = vmatprep.subr.bf16.mxu0 0
  %243 = vmatpush1.bf16.msra.mxu0 %v184
  %244 = vmatprep.mubr.bf16.mxu0 %v49
  %245 = vmatmul.mubr.bf16.gmra.mrb[0].mxu0 %v48
  %v246 = vpop.f32.mrb[0].mxu0
  %v247 = vadd.f32 %v95, %v246
  %v248 = vpop.f32.mrb[0].mxu0
  %v249 = vpop.f32.mrb[0].mxu0
  %v250 = vadd.f32 %v95, %v249
  %v251 = vpop.f32.mrb[0].mxu0
  %252 = vmatprep.mubr.bf16.mxu0 %v52
  %253 = vmatmul.mubr.bf16.gmra.mrb[0].mxu0 %v51
  %v254 = vpop.f32.mrb[0].mxu0
  %v255 = vadd.f32 %v95, %v254
  %v256 = vpop.f32.mrb[0].mxu0
  %v257 = vpop.f32.mrb[0].mxu0
  %v258 = vadd.f32 %v95, %v257
  %v259 = vpop.f32.mrb[0].mxu0
  %260 = vdwg.mxu0
  %261 = vmatprep.subr.bf16.mxu0 0
  %262 = vmatpush1.bf16.msra.mxu0 %v185
  %263 = vmatprep.subr.bf16.mxu0 0
  %264 = vmatpush1.bf16.msra.mxu0 %v186
  %265 = vmatprep.subr.bf16.mxu0 0
  %266 = vmatpush1.bf16.msra.mxu0 0
  %267 = vmatprep.subr.bf16.mxu0 0
  %268 = vmatpush1.bf16.msra.mxu0 0
  %269 = vmatprep.subr.bf16.mxu0 0
  %270 = vmatpush1.bf16.msra.mxu0 0
  %271 = vmatprep.subr.bf16.mxu0 0
  %272 = vmatpush1.bf16.msra.mxu0 0
  %273 = vmatprep.subr.bf16.mxu0 0
  %274 = vmatpush1.bf16.msra.mxu0 0
  %275 = vmatprep.subr.bf16.mxu0 0
  %276 = vmatpush1.bf16.msra.mxu0 0
  %277 = vmatprep.subr.bf16.mxu0 0
  %278 = vmatpush1.bf16.msra.mxu0 0
  %279 = vmatprep.subr.bf16.mxu0 0
  %280 = vmatpush1.bf16.msra.mxu0 0
  %281 = vmatprep.subr.bf16.mxu0 0
  %282 = vmatpush1.bf16.msra.mxu0 0
  %283 = vmatprep.subr.bf16.mxu0 0
  %284 = vmatpush1.bf16.msra.mxu0 0
  %285 = vmatprep.subr.bf16.mxu0 0
  %286 = vmatpush1.bf16.msra.mxu0 0
  %287 = vmatprep.subr.bf16.mxu0 0
  %288 = vmatpush1.bf16.msra.mxu0 0
  %289 = vmatprep.subr.bf16.mxu0 0
  %290 = vmatpush1.bf16.msra.mxu0 0
  %291 = vmatprep.subr.bf16.mxu0 0
  %292 = vmatpush1.bf16.msra.mxu0 0
  %293 = vmatprep.mubr.bf16.mxu0 0
  %294 = vmatmul.mubr.bf16.gmra.mrb[0].mxu0 %v207
  %v295 = vpop.f32.mrb[0].mxu0
  %v296 = vadd.f32 %v247, %v295
  %v297 = vpop.f32.mrb[0].mxu0
  %v298 = vpop.f32.mrb[0].mxu0
  %v299 = vadd.f32 %v250, %v298
  %v300 = vpop.f32.mrb[0].mxu0
  %301 = vmatprep.mubr.bf16.mxu0 0
  %302 = vmatmul.mubr.bf16.gmra.mrb[0].mxu0 %v210
  %v303 = vpop.f32.mrb[0].mxu0
  %v304 = vadd.f32 %v255, %v303
  %v305 = vpop.f32.mrb[0].mxu0
  %v306 = vpop.f32.mrb[0].mxu0
  %v307 = vadd.f32 %v258, %v306
  %v308 = vpop.f32.mrb[0].mxu0
  %309 = vdwg.mxu0
  %v310 = vmax.f32 %v296, 0.0
  %v311 = vmax.f32 %v299, 0.0
  %v312 = vmax.f32 %v304, 0.0
  %v313 = vmax.f32 %v307, 0.0
  %v314 = vpack.c.bf16 %v311, %v310
  %v315 = vpack.c.bf16 %v313, %v312
  %v316 = vld [vmem:[%s4] sm:$0xf]
  %v317 = vld [vmem:[%s4 + $0x4] sm:$0xf]
  %v318 = vld [vmem:[%s5] sm:$0x1]
  %v320 = vlaneseq
  %v321 = vshrl.u32 %v320, 7
  %v322 = vsub.s32 0, %v321
  %v323 = vrot.slane %v318, %v322
  %v327 = vunpack.c.l.b16 %v316
  %v328 = vunpack.c.l.b16 %v317
  %v329 = vpack.c.b16 %v328, %v327
  %vm331 = vcmask 130048
  %v333 = vsel %vm331, %v314, 0
  %v336 = vsel %vm331, %v315, 0
  %338 = vmatprep.subr.bf16.mxu0 0
  %339 = vmatpush1.bf16.msra.mxu0 %v329
  %340 = vmatprep.subr.bf16.mxu0 0
  %341 = vmatpush1.bf16.msra.mxu0 0
  %342 = vmatprep.subr.bf16.mxu0 0
  %343 = vmatpush1.bf16.msra.mxu0 0
  %344 = vmatprep.subr.bf16.mxu0 0
  %345 = vmatpush1.bf16.msra.mxu0 0
  %346 = vmatprep.subr.bf16.mxu0 0
  %347 = vmatpush1.bf16.msra.mxu0 0
  %348 = vmatprep.subr.bf16.mxu0 0
  %349 = vmatpush1.bf16.msra.mxu0 0
  %350 = vmatprep.subr.bf16.mxu0 0
  %351 = vmatpush1.bf16.msra.mxu0 0
  %352 = vmatprep.subr.bf16.mxu0 0
  %353 = vmatpush1.bf16.msra.mxu0 0
  %354 = vmatprep.subr.bf16.mxu0 0
  %355 = vmatpush1.bf16.msra.mxu0 0
  %356 = vmatprep.subr.bf16.mxu0 0
  %357 = vmatpush1.bf16.msra.mxu0 0
  %358 = vmatprep.subr.bf16.mxu0 0
  %359 = vmatpush1.bf16.msra.mxu0 0
  %360 = vmatprep.subr.bf16.mxu0 0
  %361 = vmatpush1.bf16.msra.mxu0 0
  %362 = vmatprep.subr.bf16.mxu0 0
  %363 = vmatpush1.bf16.msra.mxu0 0
  %364 = vmatprep.subr.bf16.mxu0 0
  %365 = vmatpush1.bf16.msra.mxu0 0
  %366 = vmatprep.subr.bf16.mxu0 0
  %367 = vmatpush1.bf16.msra.mxu0 0
  %368 = vmatprep.subr.bf16.mxu0 0
  %369 = vmatpush1.bf16.msra.mxu0 0
  %370 = vmatprep.mubr.bf16.mxu0 0
  %371 = vmatmul.mubr.bf16.gmra.mrb[0].mxu0 %v333
  %v372 = vpop.f32.mrb[0].mxu0
  %v373 = vadd.f32 %v323, %v372
  %v374 = vpop.f32.mrb[0].mxu0
  %v375 = vpop.f32.mrb[0].mxu0
  %v376 = vadd.f32 %v323, %v375
  %v377 = vpop.f32.mrb[0].mxu0
  %378 = vmatprep.mubr.bf16.mxu0 0
  %379 = vmatmul.mubr.bf16.gmra.mrb[0].mxu0 %v336
  %v380 = vpop.f32.mrb[0].mxu0
  %v381 = vadd.f32 %v323, %v380
  %v382 = vpop.f32.mrb[0].mxu0
  %v383 = vpop.f32.mrb[0].mxu0
  %v384 = vadd.f32 %v323, %v383
  %v385 = vpop.f32.mrb[0].mxu0
  %386 = vdwg.mxu0
  %v387 = vld [vmem:[%s1] sm:$0xff]
  %v388 = vld [vmem:[%s1 + $0x8] sm:$0xff]
  %v389 = vld [vmem:[%s1 + $0x10] sm:$0xff]
  %v390 = vld [vmem:[%s1 + $0x18] sm:$0xff]
  %v391 = vadd.f32 %v373, %v387
  %v392 = vadd.f32 %v376, %v388
  %v393 = vadd.f32 %v381, %v389
  %v394 = vadd.f32 %v384, %v390
  %v395 = vmax.f32 %v391, 0.0
  %v396 = vmax.f32 %v392, 0.0
  %v397 = vmax.f32 %v393, 0.0
  %v398 = vmax.f32 %v394, 0.0
  %399 = vst.msk [vmem:[%s6] sm:$0xff] %vm205, %v395
  %400 = vst.msk [vmem:[%s6 + $0x8] sm:$0xff] %vm205, %v396
  %401 = vst.msk [vmem:[%s6 + $0x10] sm:$0xff] %vm205, %v397
  %402 = vst.msk [vmem:[%s6 + $0x18] sm:$0xff] %vm205, %v398
  // Predicated region
  $region26: #{hvq_encoder_forward.20} parent=0 // pred_check
    _
  $region27: #{hvq_encoder_forward.20} parent=0 // pred_check_branch
    %404 = sbr.rel (0) target = $region29
  $region28: #{hvq_encoder_forward.20} parent=0 // pred_region
    _
  $region29: #{hvq_encoder_forward.20} parent=0 // pred_fallthru
    _
  // Predicated region
  $region30: #{hvq_encoder_forward.20} parent=0 // pred_check
    _
  $region31: #{hvq_encoder_forward.20} parent=0 // pred_check_branch
    %406 = sbr.rel (0) target = $region33
  $region32: #{hvq_encoder_forward.20} parent=0 // pred_region
    _
  $region33: #{hvq_encoder_forward.20} parent=0 // pred_fallthru
    _

// kernel: hvq_encoder_forward.21
$region0: #{hvq_encoder_forward.21}
  #allocation0 [shape = 'u32[]', space=smem, size = 0x4, offset = 0x4, fixed_abs, tag = 'smem constant byte address 0x4 - core index']
  #allocation1 [shape = 'u32[144,128]{1,0:T(1,128)}', space=vmem, size = 0x12000, scoped, tag = 'internal scratch']
  %s0 = inlined_call_operand.vmem [shape: f32[8,512], index: 0, kind: input, shape index: {}]
  %s1 = inlined_call_operand.vmem [shape: bf16[512,16], index: 1, kind: input, shape index: {}]
  %s2 = inlined_call_operand.vmem [shape: f32[1,16], index: 2, kind: input, shape index: {}]
  %s3 = inlined_call_operand.vmem [shape: f32[8,16], index: 3, kind: output, shape index: {}]
  %s4 = sld [smem:[#allocation0]]
  $region22: #{hvq_encoder_forward.21} parent=0
    _
  %s6 = ssub.s32 1, %s4
  %s7 = scalar_select 0, %s6, %s4
  // Predicated region
  $region2: #{hvq_encoder_forward.21} parent=0 // pred_check
    _
  $region3: #{hvq_encoder_forward.21} parent=0 // pred_check_branch
    %9 = sbr.rel (0) target = $region5
  $region4: #{hvq_encoder_forward.21} parent=0 // pred_region
    _
  $region5: #{hvq_encoder_forward.21} parent=0 // pred_fallthru
    _
  // Predicated region
  $region6: #{hvq_encoder_forward.21} parent=0 // pred_check
    _
  $region7: #{hvq_encoder_forward.21} parent=0 // pred_check_branch
    %11 = sbr.rel (0) target = $region9
  $region8: #{hvq_encoder_forward.21} parent=0 // pred_region
    _
  $region9: #{hvq_encoder_forward.21} parent=0 // pred_fallthru
    _
  // Predicated region
  $region10: #{hvq_encoder_forward.21} parent=0 // pred_check
    _
  $region11: #{hvq_encoder_forward.21} parent=0 // pred_check_branch
    %13 = sbr.rel (0) target = $region13
  $region12: #{hvq_encoder_forward.21} parent=0 // pred_region
    _
  $region13: #{hvq_encoder_forward.21} parent=0 // pred_fallthru
    _
  %v15 = vld [vmem:[%s0] sm:$0xff]
  %v16 = vld [vmem:[%s0 + $0x8] sm:$0xff]
  %v17 = vld [vmem:[%s0 + $0x10] sm:$0xff]
  %v18 = vld [vmem:[%s0 + $0x18] sm:$0xff]
  %v19 = vpack.c.bf16 %v15, %v15
  %v20 = vpack.c.bf16 %v16, %v16
  %v21 = vpack.c.bf16 %v17, %v17
  %v22 = vpack.c.bf16 %v18, %v18
  %v23 = vld [vmem:[%s1] sm:$0xf]
  %v24 = vld [vmem:[%s1 + $0x4] sm:$0xf]
  %v25 = vld [vmem:[%s1 + $0x8] sm:$0xf]
  %v26 = vld [vmem:[%s1 + $0xc] sm:$0xf]
  %v27 = vld [vmem:[%s1 + $0x10] sm:$0xf]
  %v28 = vld [vmem:[%s1 + $0x14] sm:$0xf]
  %v29 = vld [vmem:[%s1 + $0x18] sm:$0xf]
  %v30 = vld [vmem:[%s1 + $0x1c] sm:$0xf]
  %v31 = vld [vmem:[%s1 + $0x20] sm:$0xf]
  %v32 = vld [vmem:[%s1 + $0x24] sm:$0xf]
  %v33 = vld [vmem:[%s1 + $0x28] sm:$0xf]
  %v34 = vld [vmem:[%s1 + $0x2c] sm:$0xf]
  %v35 = vld [vmem:[%s1 + $0x30] sm:$0xf]
  %v36 = vld [vmem:[%s1 + $0x34] sm:$0xf]
  %v37 = vld [vmem:[%s1 + $0x38] sm:$0xf]
  %v38 = vld [vmem:[%s1 + $0x3c] sm:$0xf]
  %v39 = vld [vmem:[%s1 + $0x40] sm:$0xf]
  %v40 = vld [vmem:[%s1 + $0x44] sm:$0xf]
  %v41 = vld [vmem:[%s1 + $0x48] sm:$0xf]
  %v42 = vld [vmem:[%s1 + $0x4c] sm:$0xf]
  %v43 = vld [vmem:[%s1 + $0x50] sm:$0xf]
  %v44 = vld [vmem:[%s1 + $0x54] sm:$0xf]
  %v45 = vld [vmem:[%s1 + $0x58] sm:$0xf]
  %v46 = vld [vmem:[%s1 + $0x5c] sm:$0xf]
  %v47 = vld [vmem:[%s1 + $0x60] sm:$0xf]
  %v48 = vld [vmem:[%s1 + $0x64] sm:$0xf]
  %v49 = vld [vmem:[%s1 + $0x68] sm:$0xf]
  %v50 = vld [vmem:[%s1 + $0x6c] sm:$0xf]
  %v51 = vld [vmem:[%s1 + $0x70] sm:$0xf]
  %v52 = vld [vmem:[%s1 + $0x74] sm:$0xf]
  %v53 = vld [vmem:[%s1 + $0x78] sm:$0xf]
  %v54 = vld [vmem:[%s1 + $0x7c] sm:$0xf]
  %v55 = vld [vmem:[%s1 + $0x80] sm:$0xf]
  %v56 = vld [vmem:[%s1 + $0x84] sm:$0xf]
  %v57 = vld [vmem:[%s1 + $0x88] sm:$0xf]
  %v58 = vld [vmem:[%s1 + $0x8c] sm:$0xf]
  %v59 = vld [vmem:[%s1 + $0x90] sm:$0xf]
  %v60 = vld [vmem:[%s1 + $0x94] sm:$0xf]
  %v61 = vld [vmem:[%s1 + $0x98] sm:$0xf]
  %v62 = vld [vmem:[%s1 + $0x9c] sm:$0xf]
  %v63 = vld [vmem:[%s1 + $0xa0] sm:$0xf]
  %v64 = vld [vmem:[%s1 + $0xa4] sm:$0xf]
  %v65 = vld [vmem:[%s1 + $0xa8] sm:$0xf]
  %v66 = vld [vmem:[%s1 + $0xac] sm:$0xf]
  %v67 = vld [vmem:[%s1 + $0xb0] sm:$0xf]
  %v68 = vld [vmem:[%s1 + $0xb4] sm:$0xf]
  %v69 = vld [vmem:[%s1 + $0xb8] sm:$0xf]
  %v70 = vld [vmem:[%s1 + $0xbc] sm:$0xf]
  %v71 = vld [vmem:[%s1 + $0xc0] sm:$0xf]
  %v72 = vld [vmem:[%s1 + $0xc4] sm:$0xf]
  %v73 = vld [vmem:[%s1 + $0xc8] sm:$0xf]
  %v74 = vld [vmem:[%s1 + $0xcc] sm:$0xf]
  %v75 = vld [vmem:[%s1 + $0xd0] sm:$0xf]
  %v76 = vld [vmem:[%s1 + $0xd4] sm:$0xf]
  %v77 = vld [vmem:[%s1 + $0xd8] sm:$0xf]
  %v78 = vld [vmem:[%s1 + $0xdc] sm:$0xf]
  %v79 = vld [vmem:[%s1 + $0xe0] sm:$0xf]
  %v80 = vld [vmem:[%s1 + $0xe4] sm:$0xf]
  %v81 = vld [vmem:[%s1 + $0xe8] sm:$0xf]
  %v82 = vld [vmem:[%s1 + $0xec] sm:$0xf]
  %v83 = vld [vmem:[%s1 + $0xf0] sm:$0xf]
  %v84 = vld [vmem:[%s1 + $0xf4] sm:$0xf]
  %v85 = vld [vmem:[%s1 + $0xf8] sm:$0xf]
  %v86 = vld [vmem:[%s1 + $0xfc] sm:$0xf]
  %v87 = vld [vmem:[%s2] sm:$0x1]
  %v89 = vlaneseq
  %v90 = vshrl.u32 %v89, 7
  %v91 = vsub.s32 0, %v90
  %v92 = vrot.slane %v87, %v91
  %v158 = vunpack.c.l.b16 %v23
  %v159 = vunpack.c.l.b16 %v24
  %v160 = vunpack.c.l.b16 %v25
  %v161 = vunpack.c.l.b16 %v26
  %v162 = vunpack.c.l.b16 %v27
  %v163 = vunpack.c.l.b16 %v28
  %v164 = vunpack.c.l.b16 %v29
  %v165 = vunpack.c.l.b16 %v30
  %v166 = vunpack.c.l.b16 %v31
  %v167 = vunpack.c.l.b16 %v32
  %v168 = vunpack.c.l.b16 %v33
  %v169 = vunpack.c.l.b16 %v34
  %v170 = vunpack.c.l.b16 %v35
  %v171 = vunpack.c.l.b16 %v36
  %v172 = vunpack.c.l.b16 %v37
  %v173 = vunpack.c.l.b16 %v38
  %v174 = vunpack.c.l.b16 %v39
  %v175 = vunpack.c.l.b16 %v40
  %v176 = vunpack.c.l.b16 %v41
  %v177 = vunpack.c.l.b16 %v42
  %v178 = vunpack.c.l.b16 %v43
  %v179 = vunpack.c.l.b16 %v44
  %v180 = vunpack.c.l.b16 %v45
  %v181 = vunpack.c.l.b16 %v46
  %v182 = vunpack.c.l.b16 %v47
  %v183 = vunpack.c.l.b16 %v48
  %v184 = vunpack.c.l.b16 %v49
  %v185 = vunpack.c.l.b16 %v50
  %v186 = vunpack.c.l.b16 %v51
  %v187 = vunpack.c.l.b16 %v52
  %v188 = vunpack.c.l.b16 %v53
  %v189 = vunpack.c.l.b16 %v54
  %v190 = vunpack.c.l.b16 %v55
  %v191 = vunpack.c.l.b16 %v56
  %v192 = vunpack.c.l.b16 %v57
  %v193 = vunpack.c.l.b16 %v58
  %v194 = vunpack.c.l.b16 %v59
  %v195 = vunpack.c.l.b16 %v60
  %v196 = vunpack.c.l.b16 %v61
  %v197 = vunpack.c.l.b16 %v62
  %v198 = vunpack.c.l.b16 %v63
  %v199 = vunpack.c.l.b16 %v64
  %v200 = vunpack.c.l.b16 %v65
  %v201 = vunpack.c.l.b16 %v66
  %v202 = vunpack.c.l.b16 %v67
  %v203 = vunpack.c.l.b16 %v68
  %v204 = vunpack.c.l.b16 %v69
  %v205 = vunpack.c.l.b16 %v70
  %v206 = vunpack.c.l.b16 %v71
  %v207 = vunpack.c.l.b16 %v72
  %v208 = vunpack.c.l.b16 %v73
  %v209 = vunpack.c.l.b16 %v74
  %v210 = vunpack.c.l.b16 %v75
  %v211 = vunpack.c.l.b16 %v76
  %v212 = vunpack.c.l.b16 %v77
  %v213 = vunpack.c.l.b16 %v78
  %v214 = vunpack.c.l.b16 %v79
  %v215 = vunpack.c.l.b16 %v80
  %v216 = vunpack.c.l.b16 %v81
  %v217 = vunpack.c.l.b16 %v82
  %v218 = vunpack.c.l.b16 %v83
  %v219 = vunpack.c.l.b16 %v84
  %v220 = vunpack.c.l.b16 %v85
  %v221 = vunpack.c.l.b16 %v86
  %v222 = vpack.c.b16 %v159, %v158
  %v223 = vpack.c.b16 %v161, %v160
  %v224 = vpack.c.b16 %v163, %v162
  %v225 = vpack.c.b16 %v165, %v164
  %v226 = vpack.c.b16 %v167, %v166
  %v227 = vpack.c.b16 %v169, %v168
  %v228 = vpack.c.b16 %v171, %v170
  %v229 = vpack.c.b16 %v173, %v172
  %v230 = vpack.c.b16 %v175, %v174
  %v231 = vpack.c.b16 %v177, %v176
  %v232 = vpack.c.b16 %v179, %v178
  %v233 = vpack.c.b16 %v181, %v180
  %v234 = vpack.c.b16 %v183, %v182
  %v235 = vpack.c.b16 %v185, %v184
  %v236 = vpack.c.b16 %v187, %v186
  %v237 = vpack.c.b16 %v189, %v188
  %v238 = vpack.c.b16 %v191, %v190
  %v239 = vpack.c.b16 %v193, %v192
  %v240 = vpack.c.b16 %v195, %v194
  %v241 = vpack.c.b16 %v197, %v196
  %v242 = vpack.c.b16 %v199, %v198
  %v243 = vpack.c.b16 %v201, %v200
  %v244 = vpack.c.b16 %v203, %v202
  %v245 = vpack.c.b16 %v205, %v204
  %v246 = vpack.c.b16 %v207, %v206
  %v247 = vpack.c.b16 %v209, %v208
  %v248 = vpack.c.b16 %v211, %v210
  %v249 = vpack.c.b16 %v213, %v212
  %v250 = vpack.c.b16 %v215, %v214
  %v251 = vpack.c.b16 %v217, %v216
  %v252 = vpack.c.b16 %v219, %v218
  %v253 = vpack.c.b16 %v221, %v220
  %286 = vmatprep.subr.bf16.mxu0 0
  %287 = vmatpush1.bf16.msra.mxu0 %v222
  %288 = vmatprep.subr.bf16.mxu0 0
  %289 = vmatpush1.bf16.msra.mxu0 %v223
  %290 = vmatprep.subr.bf16.mxu0 0
  %291 = vmatpush1.bf16.msra.mxu0 %v224
  %292 = vmatprep.subr.bf16.mxu0 0
  %293 = vmatpush1.bf16.msra.mxu0 %v225
  %294 = vmatprep.subr.bf16.mxu0 0
  %295 = vmatpush1.bf16.msra.mxu0 %v226
  %296 = vmatprep.subr.bf16.mxu0 0
  %297 = vmatpush1.bf16.msra.mxu0 %v227
  %298 = vmatprep.subr.bf16.mxu0 0
  %299 = vmatpush1.bf16.msra.mxu0 %v228
  %300 = vmatprep.subr.bf16.mxu0 0
  %301 = vmatpush1.bf16.msra.mxu0 %v229
  %302 = vmatprep.subr.bf16.mxu0 0
  %303 = vmatpush1.bf16.msra.mxu0 %v230
  %304 = vmatprep.subr.bf16.mxu0 0
  %305 = vmatpush1.bf16.msra.mxu0 %v231
  %306 = vmatprep.subr.bf16.mxu0 0
  %307 = vmatpush1.bf16.msra.mxu0 %v232
  %308 = vmatprep.subr.bf16.mxu0 0
  %309 = vmatpush1.bf16.msra.mxu0 %v233
  %310 = vmatprep.subr.bf16.mxu0 0
  %311 = vmatpush1.bf16.msra.mxu0 %v234
  %312 = vmatprep.subr.bf16.mxu0 0
  %313 = vmatpush1.bf16.msra.mxu0 %v235
  %314 = vmatprep.subr.bf16.mxu0 0
  %315 = vmatpush1.bf16.msra.mxu0 %v236
  %316 = vmatprep.subr.bf16.mxu0 0
  %317 = vmatpush1.bf16.msra.mxu0 %v237
  %318 = vmatprep.mubr.bf16.mxu0 %v20
  %319 = vmatmul.mubr.bf16.gmra.mrb[0].mxu0 %v19
  %v320 = vpop.f32.mrb[0].mxu0
  %v321 = vadd.f32 %v92, %v320
  %v322 = vpop.f32.mrb[0].mxu0
  %v323 = vpop.f32.mrb[0].mxu0
  %v324 = vpop.f32.mrb[0].mxu0
  %325 = vdwg.mxu0
  %326 = vmatprep.subr.bf16.mxu0 0
  %327 = vmatpush1.bf16.msra.mxu0 %v238
  %328 = vmatprep.subr.bf16.mxu0 0
  %329 = vmatpush1.bf16.msra.mxu0 %v239
  %330 = vmatprep.subr.bf16.mxu0 0
  %331 = vmatpush1.bf16.msra.mxu0 %v240
  %332 = vmatprep.subr.bf16.mxu0 0
  %333 = vmatpush1.bf16.msra.mxu0 %v241
  %334 = vmatprep.subr.bf16.mxu0 0
  %335 = vmatpush1.bf16.msra.mxu0 %v242
  %336 = vmatprep.subr.bf16.mxu0 0
  %337 = vmatpush1.bf16.msra.mxu0 %v243
  %338 = vmatprep.subr.bf16.mxu0 0
  %339 = vmatpush1.bf16.msra.mxu0 %v244
  %340 = vmatprep.subr.bf16.mxu0 0
  %341 = vmatpush1.bf16.msra.mxu0 %v245
  %342 = vmatprep.subr.bf16.mxu0 0
  %343 = vmatpush1.bf16.msra.mxu0 %v246
  %344 = vmatprep.subr.bf16.mxu0 0
  %345 = vmatpush1.bf16.msra.mxu0 %v247
  %346 = vmatprep.subr.bf16.mxu0 0
  %347 = vmatpush1.bf16.msra.mxu0 %v248
  %348 = vmatprep.subr.bf16.mxu0 0
  %349 = vmatpush1.bf16.msra.mxu0 %v249
  %350 = vmatprep.subr.bf16.mxu0 0
  %351 = vmatpush1.bf16.msra.mxu0 %v250
  %352 = vmatprep.subr.bf16.mxu0 0
  %353 = vmatpush1.bf16.msra.mxu0 %v251
  %354 = vmatprep.subr.bf16.mxu0 0
  %355 = vmatpush1.bf16.msra.mxu0 %v252
  %356 = vmatprep.subr.bf16.mxu0 0
  %357 = vmatpush1.bf16.msra.mxu0 %v253
  %358 = vmatprep.mubr.bf16.mxu0 %v22
  %359 = vmatmul.mubr.bf16.gmra.mrb[0].mxu0 %v21
  %v360 = vpop.f32.mrb[0].mxu0
  %v361 = vadd.f32 %v321, %v360
  %v362 = vpop.f32.mrb[0].mxu0
  %v363 = vpop.f32.mrb[0].mxu0
  %v364 = vpop.f32.mrb[0].mxu0
  %365 = vdwg.mxu0
  %v366 = vmax.f32 %v361, 0.0
  %vm367 = vcmask 130048
  %368 = vst.msk [vmem:[%s3] sm:$0xff] %vm367, %v366
  // Predicated region
  $region14: #{hvq_encoder_forward.21} parent=0 // pred_check
    _
  $region15: #{hvq_encoder_forward.21} parent=0 // pred_check_branch
    %370 = sbr.rel (0) target = $region17
  $region16: #{hvq_encoder_forward.21} parent=0 // pred_region
    _
  $region17: #{hvq_encoder_forward.21} parent=0 // pred_fallthru
    _
  // Predicated region
  $region18: #{hvq_encoder_forward.21} parent=0 // pred_check
    _
  $region19: #{hvq_encoder_forward.21} parent=0 // pred_check_branch
    %372 = sbr.rel (0) target = $region21
  $region20: #{hvq_encoder_forward.21} parent=0 // pred_region
    _
  $region21: #{hvq_encoder_forward.21} parent=0 // pred_fallthru
    _

// kernel: hvq_encoder_forward.22
$region0: #{hvq_encoder_forward.22}
  #allocation0 [shape = 'u32[]', space=smem, size = 0x4, offset = 0x4, fixed_abs, tag = 'smem constant byte address 0x4 - core index']
  #allocation1 [shape = 'u32[144,128]{1,0:T(1,128)}', space=vmem, size = 0x12000, scoped, tag = 'internal scratch']
  %s0 = inlined_call_operand.vmem [shape: f32[8,144], index: 0, kind: input, shape index: {}]
  %s1 = inlined_call_operand.vmem [shape: bf16[144,32], index: 1, kind: input, shape index: {}]
  %s2 = inlined_call_operand.vmem [shape: f32[1,32], index: 2, kind: input, shape index: {}]
  %s3 = inlined_call_operand.vmem [shape: f32[8,32], index: 3, kind: output, shape index: {}]
  %s4 = sld [smem:[#allocation0]]
  $region22: #{hvq_encoder_forward.22} parent=0
    _
  %s6 = ssub.s32 1, %s4
  %s7 = scalar_select 0, %s6, %s4
  // Predicated region
  $region2: #{hvq_encoder_forward.22} parent=0 // pred_check
    _
  $region3: #{hvq_encoder_forward.22} parent=0 // pred_check_branch
    %9 = sbr.rel (0) target = $region5
  $region4: #{hvq_encoder_forward.22} parent=0 // pred_region
    _
  $region5: #{hvq_encoder_forward.22} parent=0 // pred_fallthru
    _
  // Predicated region
  $region6: #{hvq_encoder_forward.22} parent=0 // pred_check
    _
  $region7: #{hvq_encoder_forward.22} parent=0 // pred_check_branch
    %11 = sbr.rel (0) target = $region9
  $region8: #{hvq_encoder_forward.22} parent=0 // pred_region
    _
  $region9: #{hvq_encoder_forward.22} parent=0 // pred_fallthru
    _
  // Predicated region
  $region10: #{hvq_encoder_forward.22} parent=0 // pred_check
    _
  $region11: #{hvq_encoder_forward.22} parent=0 // pred_check_branch
    %13 = sbr.rel (0) target = $region13
  $region12: #{hvq_encoder_forward.22} parent=0 // pred_region
    _
  $region13: #{hvq_encoder_forward.22} parent=0 // pred_fallthru
    _
  %v15 = vld [vmem:[%s0] sm:$0xff]
  %v16 = vld [vmem:[%s0 + $0x8] sm:$0xff]
  %v17 = vpack.c.bf16 %v15, %v15
  %v18 = vpack.c.bf16 %v16, %v16
  %v19 = vld [vmem:[%s1] sm:$0xf]
  %v20 = vld [vmem:[%s1 + $0x4] sm:$0xf]
  %v21 = vld [vmem:[%s1 + $0x8] sm:$0xf]
  %v22 = vld [vmem:[%s1 + $0xc] sm:$0xf]
  %v23 = vld [vmem:[%s1 + $0x10] sm:$0xf]
  %v24 = vld [vmem:[%s1 + $0x14] sm:$0xf]
  %v25 = vld [vmem:[%s1 + $0x18] sm:$0xf]
  %v26 = vld [vmem:[%s1 + $0x1c] sm:$0xf]
  %v27 = vld [vmem:[%s1 + $0x20] sm:$0xf]
  %v28 = vld [vmem:[%s1 + $0x24] sm:$0xf]
  %v29 = vld [vmem:[%s1 + $0x28] sm:$0xf]
  %v30 = vld [vmem:[%s1 + $0x2c] sm:$0xf]
  %v31 = vld [vmem:[%s1 + $0x30] sm:$0xf]
  %v32 = vld [vmem:[%s1 + $0x34] sm:$0xf]
  %v33 = vld [vmem:[%s1 + $0x38] sm:$0xf]
  %v34 = vld [vmem:[%s1 + $0x3c] sm:$0xf]
  %v35 = vld [vmem:[%s1 + $0x40] sm:$0xf]
  %v36 = vld [vmem:[%s1 + $0x44] sm:$0xf]
  %v37 = vld [vmem:[%s2] sm:$0x1]
  %v39 = vlaneseq
  %v40 = vshrl.u32 %v39, 7
  %v41 = vsub.s32 0, %v40
  %v42 = vrot.slane %v37, %v41
  %v62 = vunpack.c.l.b16 %v19
  %v63 = vunpack.c.l.b16 %v20
  %v64 = vunpack.c.l.b16 %v21
  %v65 = vunpack.c.l.b16 %v22
  %v66 = vunpack.c.l.b16 %v23
  %v67 = vunpack.c.l.b16 %v24
  %v68 = vunpack.c.l.b16 %v25
  %v69 = vunpack.c.l.b16 %v26
  %v70 = vunpack.c.l.b16 %v27
  %v71 = vunpack.c.l.b16 %v28
  %v72 = vunpack.c.l.b16 %v29
  %v73 = vunpack.c.l.b16 %v30
  %v74 = vunpack.c.l.b16 %v31
  %v75 = vunpack.c.l.b16 %v32
  %v76 = vunpack.c.l.b16 %v33
  %v77 = vunpack.c.l.b16 %v34
  %v78 = vunpack.c.l.b16 %v35
  %v79 = vunpack.c.l.b16 %v36
  %v80 = vpack.c.b16 %v63, %v62
  %v81 = vpack.c.b16 %v65, %v64
  %v82 = vpack.c.b16 %v67, %v66
  %v83 = vpack.c.b16 %v69, %v68
  %v84 = vpack.c.b16 %v71, %v70
  %v85 = vpack.c.b16 %v73, %v72
  %v86 = vpack.c.b16 %v75, %v74
  %v87 = vpack.c.b16 %v77, %v76
  %v88 = vpack.c.b16 %v79, %v78
  %vm98 = vcmask 130048
  %v100 = vsel %vm98, %v18, 0
  %102 = vmatprep.subr.bf16.mxu0 0
  %103 = vmatpush1.bf16.msra.mxu0 %v80
  %104 = vmatprep.subr.bf16.mxu0 0
  %105 = vmatpush1.bf16.msra.mxu0 %v81
  %106 = vmatprep.subr.bf16.mxu0 0
  %107 = vmatpush1.bf16.msra.mxu0 %v82
  %108 = vmatprep.subr.bf16.mxu0 0
  %109 = vmatpush1.bf16.msra.mxu0 %v83
  %110 = vmatprep.subr.bf16.mxu0 0
  %111 = vmatpush1.bf16.msra.mxu0 %v84
  %112 = vmatprep.subr.bf16.mxu0 0
  %113 = vmatpush1.bf16.msra.mxu0 %v85
  %114 = vmatprep.subr.bf16.mxu0 0
  %115 = vmatpush1.bf16.msra.mxu0 %v86
  %116 = vmatprep.subr.bf16.mxu0 0
  %117 = vmatpush1.bf16.msra.mxu0 %v87
  %118 = vmatprep.subr.bf16.mxu0 0
  %119 = vmatpush1.bf16.msra.mxu0 %v88
  %120 = vmatprep.subr.bf16.mxu0 0
  %121 = vmatpush1.bf16.msra.mxu0 0
  %122 = vmatprep.subr.bf16.mxu0 0
  %123 = vmatpush1.bf16.msra.mxu0 0
  %124 = vmatprep.subr.bf16.mxu0 0
  %125 = vmatpush1.bf16.msra.mxu0 0
  %126 = vmatprep.subr.bf16.mxu0 0
  %127 = vmatpush1.bf16.msra.mxu0 0
  %128 = vmatprep.subr.bf16.mxu0 0
  %129 = vmatpush1.bf16.msra.mxu0 0
  %130 = vmatprep.subr.bf16.mxu0 0
  %131 = vmatpush1.bf16.msra.mxu0 0
  %132 = vmatprep.subr.bf16.mxu0 0
  %133 = vmatpush1.bf16.msra.mxu0 0
  %134 = vmatprep.mubr.bf16.mxu0 %v100
  %135 = vmatmul.mubr.bf16.gmra.mrb[0].mxu0 %v17
  %v136 = vpop.f32.mrb[0].mxu0
  %v137 = vadd.f32 %v42, %v136
  %v138 = vpop.f32.mrb[0].mxu0
  %v139 = vpop.f32.mrb[0].mxu0
  %v140 = vpop.f32.mrb[0].mxu0
  %141 = vdwg.mxu0
  %vm142 = vcmask 261120
  %143 = vst.msk [vmem:[%s3] sm:$0xff] %vm142, %v137
  // Predicated region
  $region14: #{hvq_encoder_forward.22} parent=0 // pred_check
    _
  $region15: #{hvq_encoder_forward.22} parent=0 // pred_check_branch
    %145 = sbr.rel (0) target = $region17
  $region16: #{hvq_encoder_forward.22} parent=0 // pred_region
    _
  $region17: #{hvq_encoder_forward.22} parent=0 // pred_fallthru
    _
  // Predicated region
  $region18: #{hvq_encoder_forward.22} parent=0 // pred_check
    _
  $region19: #{hvq_encoder_forward.22} parent=0 // pred_check_branch
    %147 = sbr.rel (0) target = $region21
  $region20: #{hvq_encoder_forward.22} parent=0 // pred_region
    _
  $region21: #{hvq_encoder_forward.22} parent=0 // pred_fallthru
    _

// kernel: hvq_encoder_forward.25
$region0: #{hvq_encoder_forward.25}
  #allocation0 [shape = 'u32[]', space=smem, size = 0x4, offset = 0x4, fixed_abs, tag = 'smem constant byte address 0x4 - core index']
  #allocation1 [shape = 'u32[144,128]{1,0:T(1,128)}', space=vmem, size = 0x12000, scoped, tag = 'internal scratch']
  #allocation2 [shape = 'f32[1,1]{1,0:T(1,128)}', space=vmem, size = 0x200, scoped, tag = 'scratch operand']
  %s0 = inlined_call_operand.vmem [shape: f32[8,32], index: 0, kind: input, shape index: {}]
  %s1 = inlined_call_operand.vmem [shape: f32[32,32], index: 1, kind: input, shape index: {}]
  %s2 = inlined_call_operand.vmem [shape: f32[1,32], index: 2, kind: input, shape index: {}]
  %s3 = inlined_call_operand.vmem [shape: f32[32,64], index: 3, kind: input, shape index: {}]
  %s4 = inlined_call_operand.vmem [shape: f32[8,32], index: 4, kind: output, shape index: {0}]
  %s5 = inlined_call_operand.hbm [shape: f32[1,1], index: 5, kind: output, shape index: {1}]
  %6 = xla_tuple %s4, %s5
  %s7 = sld [smem:[#allocation0]]
  $region42: #{hvq_encoder_forward.25} parent=0
    _
  %s9 = ssub.s32 1, %s7
  %s10 = scalar_select 0, %s9, %s7
  $region1: #{hvq_encoder_forward.25} parent=0
    #allocation3 [shape = 'u8[512]{0}', space=vmem, size = 0x400, scoped, tag = 'output window, operand 1, single buffered']
    #allocation4 [shape = 's32[1]{0}', space=sflag, size = 0x4, scoped, tag = 'scoped memory for hvq_encoder_forward.25']
    %11 = vsyncpa [#allocation4], 0
    // Predicated region
    $region2: #{hvq_encoder_forward.25} parent=1 // pred_check
      _
    $region3: #{hvq_encoder_forward.25} parent=1 // pred_check_branch
      %13 = sbr.rel (0) target = $region5
    $region4: #{hvq_encoder_forward.25} parent=1 // pred_region
      _
    $region5: #{hvq_encoder_forward.25} parent=1 // pred_fallthru
      _
    // Predicated region
    $region6: #{hvq_encoder_forward.25} parent=1 // pred_check
      _
    $region7: #{hvq_encoder_forward.25} parent=1 // pred_check_branch
      %15 = sbr.rel (0) target = $region9
    $region8: #{hvq_encoder_forward.25} parent=1 // pred_region
      _
    $region9: #{hvq_encoder_forward.25} parent=1 // pred_fallthru
      _
    // Predicated region
    $region10: #{hvq_encoder_forward.25} parent=1 // pred_check
      _
    $region11: #{hvq_encoder_forward.25} parent=1 // pred_check_branch
      %17 = sbr.rel (0) target = $region13
    $region12: #{hvq_encoder_forward.25} parent=1 // pred_region
      _
    $region13: #{hvq_encoder_forward.25} parent=1 // pred_fallthru
      _
    // Predicated region
    $region14: #{hvq_encoder_forward.25} parent=1 // pred_check
      _
    $region15: #{hvq_encoder_forward.25} parent=1 // pred_check_branch
      %19 = sbr.rel (0) target = $region17
    $region16: #{hvq_encoder_forward.25} parent=1 // pred_region
      _
    $region17: #{hvq_encoder_forward.25} parent=1 // pred_fallthru
      _
    %p20 = scmp.eq.s32.totalorder 0, 0
    // Predicated region
    $region18: #{hvq_encoder_forward.25} parent=1 // pred_check
      %p21 = pneg %p20
    $region19: #{hvq_encoder_forward.25} parent=1 // pred_check_branch
      %23 = sbr.rel (%p21) target = $region21
    $region20: #{hvq_encoder_forward.25} parent=1 // pred_region
      %vm24 = vcmask 0
      %25 = vst.msk [vmem:[#allocation2] sm:$0x1] %vm24, 0.0
    $region21: #{hvq_encoder_forward.25} parent=1 // pred_fallthru
      _
    %v26 = vld [vmem:[%s0] sm:$0xff]
    %v27 = vld [vmem:[%s1] sm:$0xff]
    %v28 = vld [vmem:[%s1 + $0x8] sm:$0xff]
    %v29 = vld [vmem:[%s1 + $0x10] sm:$0xff]
    %v30 = vld [vmem:[%s1 + $0x18] sm:$0xff]
    %v31 = vld [vmem:[%s2] sm:$0x1]
    %v33 = vlaneseq
    %v34 = vshrl.u32 %v33, 7
    %v35 = vsub.s32 0, %v34
    %v36 = vrot.slane %v31, %v35
    %vm38 = vcmask 261120
    %v40 = vsel %vm38, %v26, 0
    %42 = vmatprep.subr.mxu0 0.0
    %43 = vmatpush1.msra.mxu0 %v27
    %44 = vmatprep.subr.mxu0 0.0
    %45 = vmatpush1.msra.mxu0 %v28
    %46 = vmatprep.subr.mxu0 0.0
    %47 = vmatpush1.msra.mxu0 %v29
    %48 = vmatprep.subr.mxu0 0.0
    %49 = vmatpush1.msra.mxu0 %v30
    %50 = vmatprep.subr.mxu0 0.0
    %51 = vmatpush1.msra.mxu0 0.0
    %52 = vmatprep.subr.mxu0 0.0
    %53 = vmatpush1.msra.mxu0 0.0
    %54 = vmatprep.subr.mxu0 0.0
    %55 = vmatpush1.msra.mxu0 0.0
    %56 = vmatprep.subr.mxu0 0.0
    %57 = vmatpush1.msra.mxu0 0.0
    %58 = vmatprep.subr.mxu0 0.0
    %59 = vmatpush1.msra.mxu0 0.0
    %60 = vmatprep.subr.mxu0 0.0
    %61 = vmatpush1.msra.mxu0 0.0
    %62 = vmatprep.subr.mxu0 0.0
    %63 = vmatpush1.msra.mxu0 0.0
    %64 = vmatprep.subr.mxu0 0.0
    %65 = vmatpush1.msra.mxu0 0.0
    %66 = vmatprep.subr.mxu0 0.0
    %67 = vmatpush1.msra.mxu0 0.0
    %68 = vmatprep.subr.mxu0 0.0
    %69 = vmatpush1.msra.mxu0 0.0
    %70 = vmatprep.subr.mxu0 0.0
    %71 = vmatpush1.msra.mxu0 0.0
    %72 = vmatprep.subr.mxu0 0.0
    %73 = vmatpush1.msra.mxu0 0.0
    %74 = vmatprep.subr.mxu0 0.0
    %75 = vmatpush1.msra.mxu0 0.0
    %76 = vmatprep.subr.mxu0 0.0
    %77 = vmatpush1.msra.mxu0 0.0
    %78 = vmatprep.subr.mxu0 0.0
    %79 = vmatpush1.msra.mxu0 0.0
    %80 = vmatprep.subr.mxu0 0.0
    %81 = vmatpush1.msra.mxu0 0.0
    %82 = vmatprep.subr.mxu0 0.0
    %83 = vmatpush1.msra.mxu0 0.0
    %84 = vmatprep.subr.mxu0 0.0
    %85 = vmatpush1.msra.mxu0 0.0
    %86 = vmatprep.subr.mxu0 0.0
    %87 = vmatpush1.msra.mxu0 0.0
    %88 = vmatprep.subr.mxu0 0.0
    %89 = vmatpush1.msra.mxu0 0.0
    %90 = vmatprep.subr.mxu0 0.0
    %91 = vmatpush1.msra.mxu0 0.0
    %92 = vmatprep.subr.mxu0 0.0
    %93 = vmatpush1.msra.mxu0 0.0
    %94 = vmatprep.subr.mxu0 0.0
    %95 = vmatpush1.msra.mxu0 0.0
    %96 = vmatprep.subr.mxu0 0.0
    %97 = vmatpush1.msra.mxu0 0.0
    %98 = vmatprep.subr.mxu0 0.0
    %99 = vmatpush1.msra.mxu0 0.0
    %100 = vmatprep.subr.mxu0 0.0
    %101 = vmatpush1.msra.mxu0 0.0
    %102 = vmatprep.subr.mxu0 0.0
    %103 = vmatpush1.msra.mxu0 0.0
    %104 = vmatprep.subr.mxu0 0.0
    %105 = vmatpush1.msra.mxu0 0.0
    %106 = vmatprep.mubr.f32.mxu0 0.0
    %107 = vmatmul.mubr.f32.gmra.mrb[0].mxu0 %v40
    %v108 = vpop.f32.mrb[0].mxu0
    %v109 = vadd.f32 %v36, %v108
    %v110 = vpop.f32.mrb[0].mxu0
    %111 = vdwg.mxu0
    %v112 = vld [vmem:[%s3] sm:$0xff]
    %v113 = vld [vmem:[%s3 + $0x8] sm:$0xff]
    %v114 = vld [vmem:[%s3 + $0x10] sm:$0xff]
    %v115 = vld [vmem:[%s3 + $0x18] sm:$0xff]
    %v116 = vmul.f32 %v109, %v109
    %v117 = vsel %vm38, %v116, 0.0
    %118 = vadd.xlane.f32.xlu0 %v117
    %v119 = vpop.xlane.xlu0 %118
    %v120 = vmul.f32 %v112, %v112
    %v121 = vmul.f32 %v113, %v113
    %v122 = vmul.f32 %v114, %v114
    %v123 = vmul.f32 %v115, %v115
    %vm124 = vcmask 523264
    %v125 = vsel %vm124, %v120, 0.0
    %v126 = vsel %vm124, %v121, 0.0
    %v127 = vadd.f32 %v125, %v126
    %v128 = vsel %vm124, %v122, 0.0
    %v129 = vadd.f32 %v127, %v128
    %v130 = vsel %vm124, %v123, 0.0
    %v131 = vadd.f32 %v129, %v130
    %v132 = vrot.slane %v131, 4
    %v133 = vadd.f32 %v131, %v132
    %v134 = vrot.slane %v133, 2
    %v135 = vadd.f32 %v133, %v134
    %v136 = vrot.slane %v135, 1
    %v137 = vadd.f32 %v135, %v136
    %v139 = vsel %vm38, %v109, 0
    %141 = vmatprep.subr.mxu0 0.0
    %142 = vmatpush1.msra.mxu0 %v112
    %143 = vmatprep.subr.mxu0 0.0
    %144 = vmatpush1.msra.mxu0 %v113
    %145 = vmatprep.subr.mxu0 0.0
    %146 = vmatpush1.msra.mxu0 %v114
    %147 = vmatprep.subr.mxu0 0.0
    %148 = vmatpush1.msra.mxu0 %v115
    %149 = vmatprep.subr.mxu0 0.0
    %150 = vmatpush1.msra.mxu0 0.0
    %151 = vmatprep.subr.mxu0 0.0
    %152 = vmatpush1.msra.mxu0 0.0
    %153 = vmatprep.subr.mxu0 0.0
    %154 = vmatpush1.msra.mxu0 0.0
    %155 = vmatprep.subr.mxu0 0.0
    %156 = vmatpush1.msra.mxu0 0.0
    %157 = vmatprep.subr.mxu0 0.0
    %158 = vmatpush1.msra.mxu0 0.0
    %159 = vmatprep.subr.mxu0 0.0
    %160 = vmatpush1.msra.mxu0 0.0
    %161 = vmatprep.subr.mxu0 0.0
    %162 = vmatpush1.msra.mxu0 0.0
    %163 = vmatprep.subr.mxu0 0.0
    %164 = vmatpush1.msra.mxu0 0.0
    %165 = vmatprep.subr.mxu0 0.0
    %166 = vmatpush1.msra.mxu0 0.0
    %167 = vmatprep.subr.mxu0 0.0
    %168 = vmatpush1.msra.mxu0 0.0
    %169 = vmatprep.subr.mxu0 0.0
    %170 = vmatpush1.msra.mxu0 0.0
    %171 = vmatprep.subr.mxu0 0.0
    %172 = vmatpush1.msra.mxu0 0.0
    %173 = vmatprep.subr.mxu0 0.0
    %174 = vmatpush1.msra.mxu0 0.0
    %175 = vmatprep.subr.mxu0 0.0
    %176 = vmatpush1.msra.mxu0 0.0
    %177 = vmatprep.subr.mxu0 0.0
    %178 = vmatpush1.msra.mxu0 0.0
    %179 = vmatprep.subr.mxu0 0.0
    %180 = vmatpush1.msra.mxu0 0.0
    %181 = vmatprep.subr.mxu0 0.0
    %182 = vmatpush1.msra.mxu0 0.0
    %183 = vmatprep.subr.mxu0 0.0
    %184 = vmatpush1.msra.mxu0 0.0
    %185 = vmatprep.subr.mxu0 0.0
    %186 = vmatpush1.msra.mxu0 0.0
    %187 = vmatprep.subr.mxu0 0.0
    %188 = vmatpush1.msra.mxu0 0.0
    %189 = vmatprep.subr.mxu0 0.0
    %190 = vmatpush1.msra.mxu0 0.0
    %191 = vmatprep.subr.mxu0 0.0
    %192 = vmatpush1.msra.mxu0 0.0
    %193 = vmatprep.subr.mxu0 0.0
    %194 = vmatpush1.msra.mxu0 0.0
    %195 = vmatprep.subr.mxu0 0.0
    %196 = vmatpush1.msra.mxu0 0.0
    %197 = vmatprep.subr.mxu0 0.0
    %198 = vmatpush1.msra.mxu0 0.0
    %199 = vmatprep.subr.mxu0 0.0
    %200 = vmatpush1.msra.mxu0 0.0
    %201 = vmatprep.subr.mxu0 0.0
    %202 = vmatpush1.msra.mxu0 0.0
    %203 = vmatprep.subr.mxu0 0.0
    %204 = vmatpush1.msra.mxu0 0.0
    %205 = vmatprep.mubr.f32.mxu0 0.0
    %206 = vmatmul.mubr.f32.gmra.mrb[0].mxu0 %v139
    %v207 = vpop.f32.mrb[0].mxu0
    %v208 = vadd.f32 0.0, %v207
    %v209 = vpop.f32.mrb[0].mxu0
    %210 = vdwg.mxu0
    %v211 = vmul.f32 %v208, 2.0
    %v212 = vsub.f32 %v119, %v211
    %v213 = vadd.f32 %v212, %v137
    %v214 = vsub.f32 0.0, %v213
    %v215 = vsel %vm124, %v214, -inf
    %216 = vmax.xlane.f32.xlu0 %v215
    %v217 = vpop.xlane.xlu0 %216
    %v218 = vlaneseq
    %v219 = vand.u32 %v218, 127
    %vm220 = vcmp.ge.f32.partialorder %v214, %v217
    %v221 = vsel %vm220, %v219, 64
    %v222 = vsel %vm124, %v221, 2147483647
    %v223 = vand.u32 %v222, 65535
    %v224 = vshra.s32 %v222, 16
    %v225 = vcvt.s32.f32 %v223
    %v226 = vcvt.s32.f32 %v224
    %227 = vmin.xlane.f32.xlu0 %v226
    %v228 = vpop.xlane.xlu0 %227
    %vm229 = vcmp.eq.f32.partialorder %v226, %v228
    %v230 = vsel %vm229, %v225, inf
    %231 = vmin.xlane.f32.xlu0 %v230
    %v232 = vpop.xlane.xlu0 %231
    %v233 = vcvt.f32.s32 %v232
    %v234 = vcvt.f32.s32 %v228
    %v235 = vshll.u32 %v234, 16
    %v236 = vadd.s32 %v235, %v233
    %vm237 = vcmp.eq.s32.totalorder %v219, %v236
    %v238 = vsel %vm237, 1, 0
    %v239 = vcvt.s32.f32 %v238
    %v241 = vsel %vm124, %v239, 0
    %v244 = vsel %vm124, %v112, 0
    %v247 = vsel %vm124, %v113, 0
    %v250 = vsel %vm124, %v114, 0
    %v253 = vsel %vm124, %v115, 0
    %255 = vmatprep.subr.mxu0 0.0
    %256 = vmatpush1.xpose.msra.mxu0 %v244
    %257 = vmatprep.subr.mxu0 0.0
    %258 = vmatpush1.xpose.msra.mxu0 %v247
    %259 = vmatprep.subr.mxu0 0.0
    %260 = vmatpush1.xpose.msra.mxu0 %v250
    %261 = vmatprep.subr.mxu0 0.0
    %262 = vmatpush1.xpose.msra.mxu0 %v253
    %263 = vmatprep.subr.mxu0 0.0
    %264 = vmatpush1.xpose.msra.mxu0 0.0
    %265 = vmatprep.subr.mxu0 0.0
    %266 = vmatpush1.xpose.msra.mxu0 0.0
    %267 = vmatprep.subr.mxu0 0.0
    %268 = vmatpush1.xpose.msra.mxu0 0.0
    %269 = vmatprep.subr.mxu0 0.0
    %270 = vmatpush1.xpose.msra.mxu0 0.0
    %271 = vmatprep.subr.mxu0 0.0
    %272 = vmatpush1.xpose.msra.mxu0 0.0
    %273 = vmatprep.subr.mxu0 0.0
    %274 = vmatpush1.xpose.msra.mxu0 0.0
    %275 = vmatprep.subr.mxu0 0.0
    %276 = vmatpush1.xpose.msra.mxu0 0.0
    %277 = vmatprep.subr.mxu0 0.0
    %278 = vmatpush1.xpose.msra.mxu0 0.0
    %279 = vmatprep.subr.mxu0 0.0
    %280 = vmatpush1.xpose.msra.mxu0 0.0
    %281 = vmatprep.subr.mxu0 0.0
    %282 = vmatpush1.xpose.msra.mxu0 0.0
    %283 = vmatprep.subr.mxu0 0.0
    %284 = vmatpush1.xpose.msra.mxu0 0.0
    %285 = vmatprep.subr.mxu0 0.0
    %286 = vmatpush1.xpose.msra.mxu0 0.0
    %287 = vmatprep.subr.mxu0 0.0
    %288 = vmatpush1.xpose.msra.mxu0 0.0
    %289 = vmatprep.subr.mxu0 0.0
    %290 = vmatpush1.xpose.msra.mxu0 0.0
    %291 = vmatprep.subr.mxu0 0.0
    %292 = vmatpush1.xpose.msra.mxu0 0.0
    %293 = vmatprep.subr.mxu0 0.0
    %294 = vmatpush1.xpose.msra.mxu0 0.0
    %295 = vmatprep.subr.mxu0 0.0
    %296 = vmatpush1.xpose.msra.mxu0 0.0
    %297 = vmatprep.subr.mxu0 0.0
    %298 = vmatpush1.xpose.msra.mxu0 0.0
    %299 = vmatprep.subr.mxu0 0.0
    %300 = vmatpush1.xpose.msra.mxu0 0.0
    %301 = vmatprep.subr.mxu0 0.0
    %302 = vmatpush1.xpose.msra.mxu0 0.0
    %303 = vmatprep.subr.mxu0 0.0
    %304 = vmatpush1.xpose.msra.mxu0 0.0
    %305 = vmatprep.subr.mxu0 0.0
    %306 = vmatpush1.xpose.msra.mxu0 0.0
    %307 = vmatprep.subr.mxu0 0.0
    %308 = vmatpush1.xpose.msra.mxu0 0.0
    %309 = vmatprep.subr.mxu0 0.0
    %310 = vmatpush1.xpose.msra.mxu0 0.0
    %311 = vmatprep.subr.mxu0 0.0
    %312 = vmatpush1.xpose.msra.mxu0 0.0
    %313 = vmatprep.subr.mxu0 0.0
    %314 = vmatpush1.xpose.msra.mxu0 0.0
    %315 = vmatprep.subr.mxu0 0.0
    %316 = vmatpush1.xpose.msra.mxu0 0.0
    %317 = vmatprep.subr.mxu0 0.0
    %318 = vmatpush1.xpose.msra.mxu0 0.0
    %319 = vmatprep.mubr.f32.mxu0 0.0
    %320 = vmatmul.mubr.f32.gmra.mrb[0].mxu0 %v241
    %v321 = vpop.f32.mrb[0].mxu0
    %v322 = vadd.f32 0.0, %v321
    %v323 = vpop.f32.mrb[0].mxu0
    %324 = vdwg.mxu0
    %325 = vst.msk [vmem:[%s4] sm:$0xff] %vm38, %v322
    %v326 = vsub.f32 %v322, %v109
    %s327 = smul.u32 0, 8
    %v328 = vlaneseq
    %v329 = vshrl.u32 %v328, 7
    %v330 = vstv %s327
    %v331 = vadd.s32 %v330, %v329
    %vm332 = vcmp.lt.s32.totalorder %v331, 8
    %v333 = vsel %vm332, 1, 0
    %v334 = vcvt.s32.f32 %v333
    %v335 = vld [vmem:[#allocation2] sm:$0x1]
    %v336 = vmul.f32 %v326, %v326
    %v337 = vmul.f32 %v336, %v334
    %v338 = vsel %vm38, %v337, 0.0
    %339 = vadd.xlane.f32.xlu0 %v338
    %v340 = vpop.xlane.xlu0 %339
    %v341 = vrot.slane %v340, 4
    %v342 = vadd.f32 %v340, %v341
    %v343 = vrot.slane %v342, 2
    %v344 = vadd.f32 %v342, %v343
    %v345 = vrot.slane %v344, 1
    %v346 = vadd.f32 %v344, %v345
    %s347 = vtos %v346
    %v348 = vstv %s347
    %v349 = vadd.f32 %v335, %v348
    %vm350 = vcmask 0
    %351 = vst.msk [vmem:[#allocation2] sm:$0x1] %vm350, %v349
    // Predicated region
    $region22: #{hvq_encoder_forward.25} parent=1 // pred_check
      %p352 = pneg %p20
    $region23: #{hvq_encoder_forward.25} parent=1 // pred_check_branch
      %354 = sbr.rel (%p352) target = $region25
    $region24: #{hvq_encoder_forward.25} parent=1 // pred_region
      %v355 = vld [vmem:[#allocation2] sm:$0x1]
      %v356 = vmul.f32 %v355, 0.00390625
      %357 = vst.msk [vmem:[#allocation3] sm:$0x1] %vm350, %v356
    $region25: #{hvq_encoder_forward.25} parent=1 // pred_fallthru
      _
    // Predicated region
    $region26: #{hvq_encoder_forward.25} parent=1 // pred_check
      _
    $region27: #{hvq_encoder_forward.25} parent=1 // pred_check_branch
      %359 = sbr.rel (0) target = $region29
    $region28: #{hvq_encoder_forward.25} parent=1 // pred_region
      _
    $region29: #{hvq_encoder_forward.25} parent=1 // pred_fallthru
      _
    // Predicated region
    $region30: #{hvq_encoder_forward.25} parent=1 // pred_check
      _
    $region31: #{hvq_encoder_forward.25} parent=1 // pred_check_branch
      %361 = sbr.rel (0) target = $region33
    $region32: #{hvq_encoder_forward.25} parent=1 // pred_region
      %s363 = ssub.s32 16, 16
      %364 = vsyncadd [#allocation4], %s363
      %s366 = sshll.u32 [#allocation3], 4
      %s367 = int_to_ptr.vmem [resolvable:$true] %s366
      %369 = dma.vmem_to_hbm [thread:$0]  %s367, 16, %s5, [#allocation4]
    $region33: #{hvq_encoder_forward.25} parent=1 // pred_fallthru
      _
    // Predicated region
    $region34: #{hvq_encoder_forward.25} parent=1 // pred_check
      _
    $region35: #{hvq_encoder_forward.25} parent=1 // pred_check_branch
      %371 = sbr.rel (0) target = $region37
    $region36: #{hvq_encoder_forward.25} parent=1 // pred_region
      _
    $region37: #{hvq_encoder_forward.25} parent=1 // pred_fallthru
      _
    // Predicated region
    $region38: #{hvq_encoder_forward.25} parent=1 // pred_check
      _
    $region39: #{hvq_encoder_forward.25} parent=1 // pred_check_branch
      %373 = sbr.rel (0) target = $region41
    $region40: #{hvq_encoder_forward.25} parent=1 // pred_region
      %374 = dma.done [#allocation4], 16
    $region41: #{hvq_encoder_forward.25} parent=1 // pred_fallthru
      _
    %375 = vsyncpa [#allocation4], 1

// kernel: hvq_encoder_forward.24
$region0: #{hvq_encoder_forward.24}
  #allocation0 [shape = 'u32[]', space=smem, size = 0x4, offset = 0x4, fixed_abs, tag = 'smem constant byte address 0x4 - core index']
  #allocation1 [shape = 'u32[144,128]{1,0:T(1,128)}', space=vmem, size = 0x12000, scoped, tag = 'internal scratch']
  %s0 = inlined_call_operand.vmem [shape: f32[8,288], index: 0, kind: input, shape index: {}]
  %s1 = inlined_call_operand.vmem [shape: f32[8,32], index: 1, kind: input, shape index: {}, may-alias: {1,6}]
  %s2 = inlined_call_operand.vmem [shape: bf16[288,16], index: 2, kind: input, shape index: {}]
  %s3 = inlined_call_operand.vmem [shape: f32[1,16], index: 3, kind: input, shape index: {}]
  %s4 = inlined_call_operand.vmem [shape: bf16[16,32], index: 4, kind: input, shape index: {}]
  %s5 = inlined_call_operand.vmem [shape: f32[1,32], index: 5, kind: input, shape index: {}]
  %s6 = inlined_call_operand.vmem [shape: f32[8,32], index: 6, kind: output, shape index: {}, may-alias: {1,6}]
  %s7 = sld [smem:[#allocation0]]
  $region34: #{hvq_encoder_forward.24} parent=0
    _
  %s9 = ssub.s32 1, %s7
  %s10 = scalar_select 0, %s9, %s7
  // Predicated region
  $region2: #{hvq_encoder_forward.24} parent=0 // pred_check
    _
  $region3: #{hvq_encoder_forward.24} parent=0 // pred_check_branch
    %12 = sbr.rel (0) target = $region5
  $region4: #{hvq_encoder_forward.24} parent=0 // pred_region
    _
  $region5: #{hvq_encoder_forward.24} parent=0 // pred_fallthru
    _
  // Predicated region
  $region6: #{hvq_encoder_forward.24} parent=0 // pred_check
    _
  $region7: #{hvq_encoder_forward.24} parent=0 // pred_check_branch
    %14 = sbr.rel (0) target = $region9
  $region8: #{hvq_encoder_forward.24} parent=0 // pred_region
    _
  $region9: #{hvq_encoder_forward.24} parent=0 // pred_fallthru
    _
  // Predicated region
  $region10: #{hvq_encoder_forward.24} parent=0 // pred_check
    _
  $region11: #{hvq_encoder_forward.24} parent=0 // pred_check_branch
    %16 = sbr.rel (0) target = $region13
  $region12: #{hvq_encoder_forward.24} parent=0 // pred_region
    _
  $region13: #{hvq_encoder_forward.24} parent=0 // pred_fallthru
    _
  // Predicated region
  $region14: #{hvq_encoder_forward.24} parent=0 // pred_check
    _
  $region15: #{hvq_encoder_forward.24} parent=0 // pred_check_branch
    %18 = sbr.rel (0) target = $region17
  $region16: #{hvq_encoder_forward.24} parent=0 // pred_region
    _
  $region17: #{hvq_encoder_forward.24} parent=0 // pred_fallthru
    _
  // Predicated region
  $region18: #{hvq_encoder_forward.24} parent=0 // pred_check
    _
  $region19: #{hvq_encoder_forward.24} parent=0 // pred_check_branch
    %20 = sbr.rel (0) target = $region21
  $region20: #{hvq_encoder_forward.24} parent=0 // pred_region
    _
  $region21: #{hvq_encoder_forward.24} parent=0 // pred_fallthru
    _
  // Predicated region
  $region22: #{hvq_encoder_forward.24} parent=0 // pred_check
    _
  $region23: #{hvq_encoder_forward.24} parent=0 // pred_check_branch
    %22 = sbr.rel (0) target = $region25
  $region24: #{hvq_encoder_forward.24} parent=0 // pred_region
    _
  $region25: #{hvq_encoder_forward.24} parent=0 // pred_fallthru
    _
  %v24 = vld [vmem:[%s0] sm:$0xff]
  %v25 = vld [vmem:[%s0 + $0x8] sm:$0xff]
  %v26 = vld [vmem:[%s0 + $0x10] sm:$0xff]
  %v27 = vmax.f32 %v24, 0.0
  %v28 = vmax.f32 %v25, 0.0
  %v29 = vmax.f32 %v26, 0.0
  %v30 = vpack.c.bf16 %v27, %v27
  %v31 = vpack.c.bf16 %v28, %v28
  %v32 = vpack.c.bf16 %v29, %v29
  %v33 = vld [vmem:[%s2] sm:$0xf]
  %v34 = vld [vmem:[%s2 + $0x4] sm:$0xf]
  %v35 = vld [vmem:[%s2 + $0x8] sm:$0xf]
  %v36 = vld [vmem:[%s2 + $0xc] sm:$0xf]
  %v37 = vld [vmem:[%s2 + $0x10] sm:$0xf]
  %v38 = vld [vmem:[%s2 + $0x14] sm:$0xf]
  %v39 = vld [vmem:[%s2 + $0x18] sm:$0xf]
  %v40 = vld [vmem:[%s2 + $0x1c] sm:$0xf]
  %v41 = vld [vmem:[%s2 + $0x20] sm:$0xf]
  %v42 = vld [vmem:[%s2 + $0x24] sm:$0xf]
  %v43 = vld [vmem:[%s2 + $0x28] sm:$0xf]
  %v44 = vld [vmem:[%s2 + $0x2c] sm:$0xf]
  %v45 = vld [vmem:[%s2 + $0x30] sm:$0xf]
  %v46 = vld [vmem:[%s2 + $0x34] sm:$0xf]
  %v47 = vld [vmem:[%s2 + $0x38] sm:$0xf]
  %v48 = vld [vmem:[%s2 + $0x3c] sm:$0xf]
  %v49 = vld [vmem:[%s2 + $0x40] sm:$0xf]
  %v50 = vld [vmem:[%s2 + $0x44] sm:$0xf]
  %v51 = vld [vmem:[%s2 + $0x48] sm:$0xf]
  %v52 = vld [vmem:[%s2 + $0x4c] sm:$0xf]
  %v53 = vld [vmem:[%s2 + $0x50] sm:$0xf]
  %v54 = vld [vmem:[%s2 + $0x54] sm:$0xf]
  %v55 = vld [vmem:[%s2 + $0x58] sm:$0xf]
  %v56 = vld [vmem:[%s2 + $0x5c] sm:$0xf]
  %v57 = vld [vmem:[%s2 + $0x60] sm:$0xf]
  %v58 = vld [vmem:[%s2 + $0x64] sm:$0xf]
  %v59 = vld [vmem:[%s2 + $0x68] sm:$0xf]
  %v60 = vld [vmem:[%s2 + $0x6c] sm:$0xf]
  %v61 = vld [vmem:[%s2 + $0x70] sm:$0xf]
  %v62 = vld [vmem:[%s2 + $0x74] sm:$0xf]
  %v63 = vld [vmem:[%s2 + $0x78] sm:$0xf]
  %v64 = vld [vmem:[%s2 + $0x7c] sm:$0xf]
  %v65 = vld [vmem:[%s2 + $0x80] sm:$0xf]
  %v66 = vld [vmem:[%s2 + $0x84] sm:$0xf]
  %v67 = vld [vmem:[%s2 + $0x88] sm:$0xf]
  %v68 = vld [vmem:[%s2 + $0x8c] sm:$0xf]
  %v69 = vld [vmem:[%s3] sm:$0x1]
  %v71 = vlaneseq
  %v72 = vshrl.u32 %v71, 7
  %v73 = vsub.s32 0, %v72
  %v74 = vrot.slane %v69, %v73
  %v112 = vunpack.c.l.b16 %v33
  %v113 = vunpack.c.l.b16 %v34
  %v114 = vunpack.c.l.b16 %v35
  %v115 = vunpack.c.l.b16 %v36
  %v116 = vunpack.c.l.b16 %v37
  %v117 = vunpack.c.l.b16 %v38
  %v118 = vunpack.c.l.b16 %v39
  %v119 = vunpack.c.l.b16 %v40
  %v120 = vunpack.c.l.b16 %v41
  %v121 = vunpack.c.l.b16 %v42
  %v122 = vunpack.c.l.b16 %v43
  %v123 = vunpack.c.l.b16 %v44
  %v124 = vunpack.c.l.b16 %v45
  %v125 = vunpack.c.l.b16 %v46
  %v126 = vunpack.c.l.b16 %v47
  %v127 = vunpack.c.l.b16 %v48
  %v128 = vunpack.c.l.b16 %v49
  %v129 = vunpack.c.l.b16 %v50
  %v130 = vunpack.c.l.b16 %v51
  %v131 = vunpack.c.l.b16 %v52
  %v132 = vunpack.c.l.b16 %v53
  %v133 = vunpack.c.l.b16 %v54
  %v134 = vunpack.c.l.b16 %v55
  %v135 = vunpack.c.l.b16 %v56
  %v136 = vunpack.c.l.b16 %v57
  %v137 = vunpack.c.l.b16 %v58
  %v138 = vunpack.c.l.b16 %v59
  %v139 = vunpack.c.l.b16 %v60
  %v140 = vunpack.c.l.b16 %v61
  %v141 = vunpack.c.l.b16 %v62
  %v142 = vunpack.c.l.b16 %v63
  %v143 = vunpack.c.l.b16 %v64
  %v144 = vunpack.c.l.b16 %v65
  %v145 = vunpack.c.l.b16 %v66
  %v146 = vunpack.c.l.b16 %v67
  %v147 = vunpack.c.l.b16 %v68
  %v148 = vpack.c.b16 %v113, %v112
  %v149 = vpack.c.b16 %v115, %v114
  %v150 = vpack.c.b16 %v117, %v116
  %v151 = vpack.c.b16 %v119, %v118
  %v152 = vpack.c.b16 %v121, %v120
  %v153 = vpack.c.b16 %v123, %v122
  %v154 = vpack.c.b16 %v125, %v124
  %v155 = vpack.c.b16 %v127, %v126
  %v156 = vpack.c.b16 %v129, %v128
  %v157 = vpack.c.b16 %v131, %v130
  %v158 = vpack.c.b16 %v133, %v132
  %v159 = vpack.c.b16 %v135, %v134
  %v160 = vpack.c.b16 %v137, %v136
  %v161 = vpack.c.b16 %v139, %v138
  %v162 = vpack.c.b16 %v141, %v140
  %v163 = vpack.c.b16 %v143, %v142
  %v164 = vpack.c.b16 %v145, %v144
  %v165 = vpack.c.b16 %v147, %v146
  %vm184 = vcmask 261120
  %v186 = vsel %vm184, %v32, 0
  %188 = vmatprep.subr.bf16.mxu0 0
  %189 = vmatpush1.bf16.msra.mxu0 %v148
  %190 = vmatprep.subr.bf16.mxu0 0
  %191 = vmatpush1.bf16.msra.mxu0 %v149
  %192 = vmatprep.subr.bf16.mxu0 0
  %193 = vmatpush1.bf16.msra.mxu0 %v150
  %194 = vmatprep.subr.bf16.mxu0 0
  %195 = vmatpush1.bf16.msra.mxu0 %v151
  %196 = vmatprep.subr.bf16.mxu0 0
  %197 = vmatpush1.bf16.msra.mxu0 %v152
  %198 = vmatprep.subr.bf16.mxu0 0
  %199 = vmatpush1.bf16.msra.mxu0 %v153
  %200 = vmatprep.subr.bf16.mxu0 0
  %201 = vmatpush1.bf16.msra.mxu0 %v154
  %202 = vmatprep.subr.bf16.mxu0 0
  %203 = vmatpush1.bf16.msra.mxu0 %v155
  %204 = vmatprep.subr.bf16.mxu0 0
  %205 = vmatpush1.bf16.msra.mxu0 %v156
  %206 = vmatprep.subr.bf16.mxu0 0
  %207 = vmatpush1.bf16.msra.mxu0 %v157
  %208 = vmatprep.subr.bf16.mxu0 0
  %209 = vmatpush1.bf16.msra.mxu0 %v158
  %210 = vmatprep.subr.bf16.mxu0 0
  %211 = vmatpush1.bf16.msra.mxu0 %v159
  %212 = vmatprep.subr.bf16.mxu0 0
  %213 = vmatpush1.bf16.msra.mxu0 %v160
  %214 = vmatprep.subr.bf16.mxu0 0
  %215 = vmatpush1.bf16.msra.mxu0 %v161
  %216 = vmatprep.subr.bf16.mxu0 0
  %217 = vmatpush1.bf16.msra.mxu0 %v162
  %218 = vmatprep.subr.bf16.mxu0 0
  %219 = vmatpush1.bf16.msra.mxu0 %v163
  %220 = vmatprep.mubr.bf16.mxu0 %v31
  %221 = vmatmul.mubr.bf16.gmra.mrb[0].mxu0 %v30
  %v222 = vpop.f32.mrb[0].mxu0
  %v223 = vadd.f32 %v74, %v222
  %v224 = vpop.f32.mrb[0].mxu0
  %v225 = vpop.f32.mrb[0].mxu0
  %v226 = vpop.f32.mrb[0].mxu0
  %227 = vdwg.mxu0
  %228 = vmatprep.subr.bf16.mxu0 0
  %229 = vmatpush1.bf16.msra.mxu0 %v164
  %230 = vmatprep.subr.bf16.mxu0 0
  %231 = vmatpush1.bf16.msra.mxu0 %v165
  %232 = vmatprep.subr.bf16.mxu0 0
  %233 = vmatpush1.bf16.msra.mxu0 0
  %234 = vmatprep.subr.bf16.mxu0 0
  %235 = vmatpush1.bf16.msra.mxu0 0
  %236 = vmatprep.subr.bf16.mxu0 0
  %237 = vmatpush1.bf16.msra.mxu0 0
  %238 = vmatprep.subr.bf16.mxu0 0
  %239 = vmatpush1.bf16.msra.mxu0 0
  %240 = vmatprep.subr.bf16.mxu0 0
  %241 = vmatpush1.bf16.msra.mxu0 0
  %242 = vmatprep.subr.bf16.mxu0 0
  %243 = vmatpush1.bf16.msra.mxu0 0
  %244 = vmatprep.subr.bf16.mxu0 0
  %245 = vmatpush1.bf16.msra.mxu0 0
  %246 = vmatprep.subr.bf16.mxu0 0
  %247 = vmatpush1.bf16.msra.mxu0 0
  %248 = vmatprep.subr.bf16.mxu0 0
  %249 = vmatpush1.bf16.msra.mxu0 0
  %250 = vmatprep.subr.bf16.mxu0 0
  %251 = vmatpush1.bf16.msra.mxu0 0
  %252 = vmatprep.subr.bf16.mxu0 0
  %253 = vmatpush1.bf16.msra.mxu0 0
  %254 = vmatprep.subr.bf16.mxu0 0
  %255 = vmatpush1.bf16.msra.mxu0 0
  %256 = vmatprep.subr.bf16.mxu0 0
  %257 = vmatpush1.bf16.msra.mxu0 0
  %258 = vmatprep.subr.bf16.mxu0 0
  %259 = vmatpush1.bf16.msra.mxu0 0
  %260 = vmatprep.mubr.bf16.mxu0 0
  %261 = vmatmul.mubr.bf16.gmra.mrb[0].mxu0 %v186
  %v262 = vpop.f32.mrb[0].mxu0
  %v263 = vadd.f32 %v223, %v262
  %v264 = vpop.f32.mrb[0].mxu0
  %v265 = vpop.f32.mrb[0].mxu0
  %v266 = vpop.f32.mrb[0].mxu0
  %267 = vdwg.mxu0
  %v268 = vmax.f32 %v263, 0.0
  %v269 = vpack.c.bf16 %v268, %v268
  %v270 = vld [vmem:[%s4] sm:$0xf]
  %v271 = vld [vmem:[%s4 + $0x4] sm:$0xf]
  %v272 = vld [vmem:[%s5] sm:$0x1]
  %v274 = vlaneseq
  %v275 = vshrl.u32 %v274, 7
  %v276 = vsub.s32 0, %v275
  %v277 = vrot.slane %v272, %v276
  %v281 = vunpack.c.l.b16 %v270
  %v282 = vunpack.c.l.b16 %v271
  %v283 = vpack.c.b16 %v282, %v281
  %vm285 = vcmask 130048
  %v287 = vsel %vm285, %v269, 0
  %289 = vmatprep.subr.bf16.mxu0 0
  %290 = vmatpush1.bf16.msra.mxu0 %v283
  %291 = vmatprep.subr.bf16.mxu0 0
  %292 = vmatpush1.bf16.msra.mxu0 0
  %293 = vmatprep.subr.bf16.mxu0 0
  %294 = vmatpush1.bf16.msra.mxu0 0
  %295 = vmatprep.subr.bf16.mxu0 0
  %296 = vmatpush1.bf16.msra.mxu0 0
  %297 = vmatprep.subr.bf16.mxu0 0
  %298 = vmatpush1.bf16.msra.mxu0 0
  %299 = vmatprep.subr.bf16.mxu0 0
  %300 = vmatpush1.bf16.msra.mxu0 0
  %301 = vmatprep.subr.bf16.mxu0 0
  %302 = vmatpush1.bf16.msra.mxu0 0
  %303 = vmatprep.subr.bf16.mxu0 0
  %304 = vmatpush1.bf16.msra.mxu0 0
  %305 = vmatprep.subr.bf16.mxu0 0
  %306 = vmatpush1.bf16.msra.mxu0 0
  %307 = vmatprep.subr.bf16.mxu0 0
  %308 = vmatpush1.bf16.msra.mxu0 0
  %309 = vmatprep.subr.bf16.mxu0 0
  %310 = vmatpush1.bf16.msra.mxu0 0
  %311 = vmatprep.subr.bf16.mxu0 0
  %312 = vmatpush1.bf16.msra.mxu0 0
  %313 = vmatprep.subr.bf16.mxu0 0
  %314 = vmatpush1.bf16.msra.mxu0 0
  %315 = vmatprep.subr.bf16.mxu0 0
  %316 = vmatpush1.bf16.msra.mxu0 0
  %317 = vmatprep.subr.bf16.mxu0 0
  %318 = vmatpush1.bf16.msra.mxu0 0
  %319 = vmatprep.subr.bf16.mxu0 0
  %320 = vmatpush1.bf16.msra.mxu0 0
  %321 = vmatprep.mubr.bf16.mxu0 0
  %322 = vmatmul.mubr.bf16.gmra.mrb[0].mxu0 %v287
  %v323 = vpop.f32.mrb[0].mxu0
  %v324 = vadd.f32 %v277, %v323
  %v325 = vpop.f32.mrb[0].mxu0
  %v326 = vpop.f32.mrb[0].mxu0
  %v327 = vpop.f32.mrb[0].mxu0
  %328 = vdwg.mxu0
  %v329 = vld [vmem:[%s1] sm:$0xff]
  %v330 = vadd.f32 %v324, %v329
  %v331 = vmax.f32 %v330, 0.0
  %332 = vst.msk [vmem:[%s6] sm:$0xff] %vm184, %v331
  // Predicated region
  $region26: #{hvq_encoder_forward.24} parent=0 // pred_check
    _
  $region27: #{hvq_encoder_forward.24} parent=0 // pred_check_branch
    %334 = sbr.rel (0) target = $region29
  $region28: #{hvq_encoder_forward.24} parent=0 // pred_region
    _
  $region29: #{hvq_encoder_forward.24} parent=0 // pred_fallthru
    _
  // Predicated region
  $region30: #{hvq_encoder_forward.24} parent=0 // pred_check
    _
  $region31: #{hvq_encoder_forward.24} parent=0 // pred_check_branch
    %336 = sbr.rel (0) target = $region33
  $region32: #{hvq_encoder_forward.24} parent=0 // pred_region
    _
  $region33: #{hvq_encoder_forward.24} parent=0 // pred_fallthru
    _

// kernel: hvq_encoder_forward.23
$region0: #{hvq_encoder_forward.23}
  #allocation0 [shape = 'u32[]', space=smem, size = 0x4, offset = 0x4, fixed_abs, tag = 'smem constant byte address 0x4 - core index']
  #allocation1 [shape = 'u32[144,128]{1,0:T(1,128)}', space=vmem, size = 0x12000, scoped, tag = 'internal scratch']
  %s0 = inlined_call_operand.vmem [shape: f32[8,288], index: 0, kind: input, shape index: {}]
  %s1 = inlined_call_operand.vmem [shape: f32[8,32], index: 1, kind: input, shape index: {}, may-alias: {1,6}]
  %s2 = inlined_call_operand.vmem [shape: bf16[288,16], index: 2, kind: input, shape index: {}]
  %s3 = inlined_call_operand.vmem [shape: f32[1,16], index: 3, kind: input, shape index: {}]
  %s4 = inlined_call_operand.vmem [shape: bf16[16,32], index: 4, kind: input, shape index: {}]
  %s5 = inlined_call_operand.vmem [shape: f32[1,32], index: 5, kind: input, shape index: {}]
  %s6 = inlined_call_operand.vmem [shape: f32[8,32], index: 6, kind: output, shape index: {}, may-alias: {1,6}]
  %s7 = sld [smem:[#allocation0]]
  $region34: #{hvq_encoder_forward.23} parent=0
    _
  %s9 = ssub.s32 1, %s7
  %s10 = scalar_select 0, %s9, %s7
  // Predicated region
  $region2: #{hvq_encoder_forward.23} parent=0 // pred_check
    _
  $region3: #{hvq_encoder_forward.23} parent=0 // pred_check_branch
    %12 = sbr.rel (0) target = $region5
  $region4: #{hvq_encoder_forward.23} parent=0 // pred_region
    _
  $region5: #{hvq_encoder_forward.23} parent=0 // pred_fallthru
    _
  // Predicated region
  $region6: #{hvq_encoder_forward.23} parent=0 // pred_check
    _
  $region7: #{hvq_encoder_forward.23} parent=0 // pred_check_branch
    %14 = sbr.rel (0) target = $region9
  $region8: #{hvq_encoder_forward.23} parent=0 // pred_region
    _
  $region9: #{hvq_encoder_forward.23} parent=0 // pred_fallthru
    _
  // Predicated region
  $region10: #{hvq_encoder_forward.23} parent=0 // pred_check
    _
  $region11: #{hvq_encoder_forward.23} parent=0 // pred_check_branch
    %16 = sbr.rel (0) target = $region13
  $region12: #{hvq_encoder_forward.23} parent=0 // pred_region
    _
  $region13: #{hvq_encoder_forward.23} parent=0 // pred_fallthru
    _
  // Predicated region
  $region14: #{hvq_encoder_forward.23} parent=0 // pred_check
    _
  $region15: #{hvq_encoder_forward.23} parent=0 // pred_check_branch
    %18 = sbr.rel (0) target = $region17
  $region16: #{hvq_encoder_forward.23} parent=0 // pred_region
    _
  $region17: #{hvq_encoder_forward.23} parent=0 // pred_fallthru
    _
  // Predicated region
  $region18: #{hvq_encoder_forward.23} parent=0 // pred_check
    _
  $region19: #{hvq_encoder_forward.23} parent=0 // pred_check_branch
    %20 = sbr.rel (0) target = $region21
  $region20: #{hvq_encoder_forward.23} parent=0 // pred_region
    _
  $region21: #{hvq_encoder_forward.23} parent=0 // pred_fallthru
    _
  // Predicated region
  $region22: #{hvq_encoder_forward.23} parent=0 // pred_check
    _
  $region23: #{hvq_encoder_forward.23} parent=0 // pred_check_branch
    %22 = sbr.rel (0) target = $region25
  $region24: #{hvq_encoder_forward.23} parent=0 // pred_region
    _
  $region25: #{hvq_encoder_forward.23} parent=0 // pred_fallthru
    _
  %v24 = vld [vmem:[%s0] sm:$0xff]
  %v25 = vld [vmem:[%s0 + $0x8] sm:$0xff]
  %v26 = vld [vmem:[%s0 + $0x10] sm:$0xff]
  %v27 = vmax.f32 %v24, 0.0
  %v28 = vmax.f32 %v25, 0.0
  %v29 = vmax.f32 %v26, 0.0
  %v30 = vpack.c.bf16 %v27, %v27
  %v31 = vpack.c.bf16 %v28, %v28
  %v32 = vpack.c.bf16 %v29, %v29
  %v33 = vld [vmem:[%s2] sm:$0xf]
  %v34 = vld [vmem:[%s2 + $0x4] sm:$0xf]
  %v35 = vld [vmem:[%s2 + $0x8] sm:$0xf]
  %v36 = vld [vmem:[%s2 + $0xc] sm:$0xf]
  %v37 = vld [vmem:[%s2 + $0x10] sm:$0xf]
  %v38 = vld [vmem:[%s2 + $0x14] sm:$0xf]
  %v39 = vld [vmem:[%s2 + $0x18] sm:$0xf]
  %v40 = vld [vmem:[%s2 + $0x1c] sm:$0xf]
  %v41 = vld [vmem:[%s2 + $0x20] sm:$0xf]
  %v42 = vld [vmem:[%s2 + $0x24] sm:$0xf]
  %v43 = vld [vmem:[%s2 + $0x28] sm:$0xf]
  %v44 = vld [vmem:[%s2 + $0x2c] sm:$0xf]
  %v45 = vld [vmem:[%s2 + $0x30] sm:$0xf]
  %v46 = vld [vmem:[%s2 + $0x34] sm:$0xf]
  %v47 = vld [vmem:[%s2 + $0x38] sm:$0xf]
  %v48 = vld [vmem:[%s2 + $0x3c] sm:$0xf]
  %v49 = vld [vmem:[%s2 + $0x40] sm:$0xf]
  %v50 = vld [vmem:[%s2 + $0x44] sm:$0xf]
  %v51 = vld [vmem:[%s2 + $0x48] sm:$0xf]
  %v52 = vld [vmem:[%s2 + $0x4c] sm:$0xf]
  %v53 = vld [vmem:[%s2 + $0x50] sm:$0xf]
  %v54 = vld [vmem:[%s2 + $0x54] sm:$0xf]
  %v55 = vld [vmem:[%s2 + $0x58] sm:$0xf]
  %v56 = vld [vmem:[%s2 + $0x5c] sm:$0xf]
  %v57 = vld [vmem:[%s2 + $0x60] sm:$0xf]
  %v58 = vld [vmem:[%s2 + $0x64] sm:$0xf]
  %v59 = vld [vmem:[%s2 + $0x68] sm:$0xf]
  %v60 = vld [vmem:[%s2 + $0x6c] sm:$0xf]
  %v61 = vld [vmem:[%s2 + $0x70] sm:$0xf]
  %v62 = vld [vmem:[%s2 + $0x74] sm:$0xf]
  %v63 = vld [vmem:[%s2 + $0x78] sm:$0xf]
  %v64 = vld [vmem:[%s2 + $0x7c] sm:$0xf]
  %v65 = vld [vmem:[%s2 + $0x80] sm:$0xf]
  %v66 = vld [vmem:[%s2 + $0x84] sm:$0xf]
  %v67 = vld [vmem:[%s2 + $0x88] sm:$0xf]
  %v68 = vld [vmem:[%s2 + $0x8c] sm:$0xf]
  %v69 = vld [vmem:[%s3] sm:$0x1]
  %v71 = vlaneseq
  %v72 = vshrl.u32 %v71, 7
  %v73 = vsub.s32 0, %v72
  %v74 = vrot.slane %v69, %v73
  %v112 = vunpack.c.l.b16 %v33
  %v113 = vunpack.c.l.b16 %v34
  %v114 = vunpack.c.l.b16 %v35
  %v115 = vunpack.c.l.b16 %v36
  %v116 = vunpack.c.l.b16 %v37
  %v117 = vunpack.c.l.b16 %v38
  %v118 = vunpack.c.l.b16 %v39
  %v119 = vunpack.c.l.b16 %v40
  %v120 = vunpack.c.l.b16 %v41
  %v121 = vunpack.c.l.b16 %v42
  %v122 = vunpack.c.l.b16 %v43
  %v123 = vunpack.c.l.b16 %v44
  %v124 = vunpack.c.l.b16 %v45
  %v125 = vunpack.c.l.b16 %v46
  %v126 = vunpack.c.l.b16 %v47
  %v127 = vunpack.c.l.b16 %v48
  %v128 = vunpack.c.l.b16 %v49
  %v129 = vunpack.c.l.b16 %v50
  %v130 = vunpack.c.l.b16 %v51
  %v131 = vunpack.c.l.b16 %v52
  %v132 = vunpack.c.l.b16 %v53
  %v133 = vunpack.c.l.b16 %v54
  %v134 = vunpack.c.l.b16 %v55
  %v135 = vunpack.c.l.b16 %v56
  %v136 = vunpack.c.l.b16 %v57
  %v137 = vunpack.c.l.b16 %v58
  %v138 = vunpack.c.l.b16 %v59
  %v139 = vunpack.c.l.b16 %v60
  %v140 = vunpack.c.l.b16 %v61
  %v141 = vunpack.c.l.b16 %v62
  %v142 = vunpack.c.l.b16 %v63
  %v143 = vunpack.c.l.b16 %v64
  %v144 = vunpack.c.l.b16 %v65
  %v145 = vunpack.c.l.b16 %v66
  %v146 = vunpack.c.l.b16 %v67
  %v147 = vunpack.c.l.b16 %v68
  %v148 = vpack.c.b16 %v113, %v112
  %v149 = vpack.c.b16 %v115, %v114
  %v150 = vpack.c.b16 %v117, %v116
  %v151 = vpack.c.b16 %v119, %v118
  %v152 = vpack.c.b16 %v121, %v120
  %v153 = vpack.c.b16 %v123, %v122
  %v154 = vpack.c.b16 %v125, %v124
  %v155 = vpack.c.b16 %v127, %v126
  %v156 = vpack.c.b16 %v129, %v128
  %v157 = vpack.c.b16 %v131, %v130
  %v158 = vpack.c.b16 %v133, %v132
  %v159 = vpack.c.b16 %v135, %v134
  %v160 = vpack.c.b16 %v137, %v136
  %v161 = vpack.c.b16 %v139, %v138
  %v162 = vpack.c.b16 %v141, %v140
  %v163 = vpack.c.b16 %v143, %v142
  %v164 = vpack.c.b16 %v145, %v144
  %v165 = vpack.c.b16 %v147, %v146
  %vm184 = vcmask 261120
  %v186 = vsel %vm184, %v32, 0
  %188 = vmatprep.subr.bf16.mxu0 0
  %189 = vmatpush1.bf16.msra.mxu0 %v148
  %190 = vmatprep.subr.bf16.mxu0 0
  %191 = vmatpush1.bf16.msra.mxu0 %v149
  %192 = vmatprep.subr.bf16.mxu0 0
  %193 = vmatpush1.bf16.msra.mxu0 %v150
  %194 = vmatprep.subr.bf16.mxu0 0
  %195 = vmatpush1.bf16.msra.mxu0 %v151
  %196 = vmatprep.subr.bf16.mxu0 0
  %197 = vmatpush1.bf16.msra.mxu0 %v152
  %198 = vmatprep.subr.bf16.mxu0 0
  %199 = vmatpush1.bf16.msra.mxu0 %v153
  %200 = vmatprep.subr.bf16.mxu0 0
  %201 = vmatpush1.bf16.msra.mxu0 %v154
  %202 = vmatprep.subr.bf16.mxu0 0
  %203 = vmatpush1.bf16.msra.mxu0 %v155
  %204 = vmatprep.subr.bf16.mxu0 0
  %205 = vmatpush1.bf16.msra.mxu0 %v156
  %206 = vmatprep.subr.bf16.mxu0 0
  %207 = vmatpush1.bf16.msra.mxu0 %v157
  %208 = vmatprep.subr.bf16.mxu0 0
  %209 = vmatpush1.bf16.msra.mxu0 %v158
  %210 = vmatprep.subr.bf16.mxu0 0
  %211 = vmatpush1.bf16.msra.mxu0 %v159
  %212 = vmatprep.subr.bf16.mxu0 0
  %213 = vmatpush1.bf16.msra.mxu0 %v160
  %214 = vmatprep.subr.bf16.mxu0 0
  %215 = vmatpush1.bf16.msra.mxu0 %v161
  %216 = vmatprep.subr.bf16.mxu0 0
  %217 = vmatpush1.bf16.msra.mxu0 %v162
  %218 = vmatprep.subr.bf16.mxu0 0
  %219 = vmatpush1.bf16.msra.mxu0 %v163
  %220 = vmatprep.mubr.bf16.mxu0 %v31
  %221 = vmatmul.mubr.bf16.gmra.mrb[0].mxu0 %v30
  %v222 = vpop.f32.mrb[0].mxu0
  %v223 = vadd.f32 %v74, %v222
  %v224 = vpop.f32.mrb[0].mxu0
  %v225 = vpop.f32.mrb[0].mxu0
  %v226 = vpop.f32.mrb[0].mxu0
  %227 = vdwg.mxu0
  %228 = vmatprep.subr.bf16.mxu0 0
  %229 = vmatpush1.bf16.msra.mxu0 %v164
  %230 = vmatprep.subr.bf16.mxu0 0
  %231 = vmatpush1.bf16.msra.mxu0 %v165
  %232 = vmatprep.subr.bf16.mxu0 0
  %233 = vmatpush1.bf16.msra.mxu0 0
  %234 = vmatprep.subr.bf16.mxu0 0
  %235 = vmatpush1.bf16.msra.mxu0 0
  %236 = vmatprep.subr.bf16.mxu0 0
  %237 = vmatpush1.bf16.msra.mxu0 0
  %238 = vmatprep.subr.bf16.mxu0 0
  %239 = vmatpush1.bf16.msra.mxu0 0
  %240 = vmatprep.subr.bf16.mxu0 0
  %241 = vmatpush1.bf16.msra.mxu0 0
  %242 = vmatprep.subr.bf16.mxu0 0
  %243 = vmatpush1.bf16.msra.mxu0 0
  %244 = vmatprep.subr.bf16.mxu0 0
  %245 = vmatpush1.bf16.msra.mxu0 0
  %246 = vmatprep.subr.bf16.mxu0 0
  %247 = vmatpush1.bf16.msra.mxu0 0
  %248 = vmatprep.subr.bf16.mxu0 0
  %249 = vmatpush1.bf16.msra.mxu0 0
  %250 = vmatprep.subr.bf16.mxu0 0
  %251 = vmatpush1.bf16.msra.mxu0 0
  %252 = vmatprep.subr.bf16.mxu0 0
  %253 = vmatpush1.bf16.msra.mxu0 0
  %254 = vmatprep.subr.bf16.mxu0 0
  %255 = vmatpush1.bf16.msra.mxu0 0
  %256 = vmatprep.subr.bf16.mxu0 0
  %257 = vmatpush1.bf16.msra.mxu0 0
  %258 = vmatprep.subr.bf16.mxu0 0
  %259 = vmatpush1.bf16.msra.mxu0 0
  %260 = vmatprep.mubr.bf16.mxu0 0
  %261 = vmatmul.mubr.bf16.gmra.mrb[0].mxu0 %v186
  %v262 = vpop.f32.mrb[0].mxu0
  %v263 = vadd.f32 %v223, %v262
  %v264 = vpop.f32.mrb[0].mxu0
  %v265 = vpop.f32.mrb[0].mxu0
  %v266 = vpop.f32.mrb[0].mxu0
  %267 = vdwg.mxu0
  %v268 = vmax.f32 %v263, 0.0
  %v269 = vpack.c.bf16 %v268, %v268
  %v270 = vld [vmem:[%s4] sm:$0xf]
  %v271 = vld [vmem:[%s4 + $0x4] sm:$0xf]
  %v272 = vld [vmem:[%s5] sm:$0x1]
  %v274 = vlaneseq
  %v275 = vshrl.u32 %v274, 7
  %v276 = vsub.s32 0, %v275
  %v277 = vrot.slane %v272, %v276
  %v281 = vunpack.c.l.b16 %v270
  %v282 = vunpack.c.l.b16 %v271
  %v283 = vpack.c.b16 %v282, %v281
  %vm285 = vcmask 130048
  %v287 = vsel %vm285, %v269, 0
  %289 = vmatprep.subr.bf16.mxu0 0
  %290 = vmatpush1.bf16.msra.mxu0 %v283
  %291 = vmatprep.subr.bf16.mxu0 0
  %292 = vmatpush1.bf16.msra.mxu0 0
  %293 = vmatprep.subr.bf16.mxu0 0
  %294 = vmatpush1.bf16.msra.mxu0 0
  %295 = vmatprep.subr.bf16.mxu0 0
  %296 = vmatpush1.bf16.msra.mxu0 0
  %297 = vmatprep.subr.bf16.mxu0 0
  %298 = vmatpush1.bf16.msra.mxu0 0
  %299 = vmatprep.subr.bf16.mxu0 0
  %300 = vmatpush1.bf16.msra.mxu0 0
  %301 = vmatprep.subr.bf16.mxu0 0
  %302 = vmatpush1.bf16.msra.mxu0 0
  %303 = vmatprep.subr.bf16.mxu0 0
  %304 = vmatpush1.bf16.msra.mxu0 0
  %305 = vmatprep.subr.bf16.mxu0 0
  %306 = vmatpush1.bf16.msra.mxu0 0
  %307 = vmatprep.subr.bf16.mxu0 0
  %308 = vmatpush1.bf16.msra.mxu0 0
  %309 = vmatprep.subr.bf16.mxu0 0
  %310 = vmatpush1.bf16.msra.mxu0 0
  %311 = vmatprep.subr.bf16.mxu0 0
  %312 = vmatpush1.bf16.msra.mxu0 0
  %313 = vmatprep.subr.bf16.mxu0 0
  %314 = vmatpush1.bf16.msra.mxu0 0
  %315 = vmatprep.subr.bf16.mxu0 0
  %316 = vmatpush1.bf16.msra.mxu0 0
  %317 = vmatprep.subr.bf16.mxu0 0
  %318 = vmatpush1.bf16.msra.mxu0 0
  %319 = vmatprep.subr.bf16.mxu0 0
  %320 = vmatpush1.bf16.msra.mxu0 0
  %321 = vmatprep.mubr.bf16.mxu0 0
  %322 = vmatmul.mubr.bf16.gmra.mrb[0].mxu0 %v287
  %v323 = vpop.f32.mrb[0].mxu0
  %v324 = vadd.f32 %v277, %v323
  %v325 = vpop.f32.mrb[0].mxu0
  %v326 = vpop.f32.mrb[0].mxu0
  %v327 = vpop.f32.mrb[0].mxu0
  %328 = vdwg.mxu0
  %v329 = vld [vmem:[%s1] sm:$0xff]
  %v330 = vadd.f32 %v324, %v329
  %331 = vst.msk [vmem:[%s6] sm:$0xff] %vm184, %v330
  // Predicated region
  $region26: #{hvq_encoder_forward.23} parent=0 // pred_check
    _
  $region27: #{hvq_encoder_forward.23} parent=0 // pred_check_branch
    %333 = sbr.rel (0) target = $region29
  $region28: #{hvq_encoder_forward.23} parent=0 // pred_region
    _
  $region29: #{hvq_encoder_forward.23} parent=0 // pred_fallthru
    _
  // Predicated region
  $region30: #{hvq_encoder_forward.23} parent=0 // pred_check
    _
  $region31: #{hvq_encoder_forward.23} parent=0 // pred_check_branch
    %335 = sbr.rel (0) target = $region33
  $region32: #{hvq_encoder_forward.23} parent=0 // pred_region
    _
  $region33: #{hvq_encoder_forward.23} parent=0 // pred_fallthru
    _

// kernel: hvq_encoder_forward.26
$region0: #{hvq_encoder_forward.26}
  #allocation0 [shape = 'u32[]', space=smem, size = 0x4, offset = 0x4, fixed_abs, tag = 'smem constant byte address 0x4 - core index']
  #allocation1 [shape = 'u32[144,128]{1,0:T(1,128)}', space=vmem, size = 0x12000, scoped, tag = 'internal scratch']
  %s0 = inlined_call_operand.vmem [shape: f32[8,288], index: 0, kind: input, shape index: {}]
  %s1 = inlined_call_operand.vmem [shape: bf16[288,32], index: 1, kind: input, shape index: {}]
  %s2 = inlined_call_operand.vmem [shape: f32[1,32], index: 2, kind: input, shape index: {}]
  %s3 = inlined_call_operand.vmem [shape: f32[8,32], index: 3, kind: output, shape index: {}]
  %s4 = sld [smem:[#allocation0]]
  $region22: #{hvq_encoder_forward.26} parent=0
    _
  %s6 = ssub.s32 1, %s4
  %s7 = scalar_select 0, %s6, %s4
  // Predicated region
  $region2: #{hvq_encoder_forward.26} parent=0 // pred_check
    _
  $region3: #{hvq_encoder_forward.26} parent=0 // pred_check_branch
    %9 = sbr.rel (0) target = $region5
  $region4: #{hvq_encoder_forward.26} parent=0 // pred_region
    _
  $region5: #{hvq_encoder_forward.26} parent=0 // pred_fallthru
    _
  // Predicated region
  $region6: #{hvq_encoder_forward.26} parent=0 // pred_check
    _
  $region7: #{hvq_encoder_forward.26} parent=0 // pred_check_branch
    %11 = sbr.rel (0) target = $region9
  $region8: #{hvq_encoder_forward.26} parent=0 // pred_region
    _
  $region9: #{hvq_encoder_forward.26} parent=0 // pred_fallthru
    _
  // Predicated region
  $region10: #{hvq_encoder_forward.26} parent=0 // pred_check
    _
  $region11: #{hvq_encoder_forward.26} parent=0 // pred_check_branch
    %13 = sbr.rel (0) target = $region13
  $region12: #{hvq_encoder_forward.26} parent=0 // pred_region
    _
  $region13: #{hvq_encoder_forward.26} parent=0 // pred_fallthru
    _
  %v15 = vld [vmem:[%s0] sm:$0xff]
  %v16 = vld [vmem:[%s0 + $0x8] sm:$0xff]
  %v17 = vld [vmem:[%s0 + $0x10] sm:$0xff]
  %v18 = vpack.c.bf16 %v15, %v15
  %v19 = vpack.c.bf16 %v16, %v16
  %v20 = vpack.c.bf16 %v17, %v17
  %v21 = vld [vmem:[%s1] sm:$0xf]
  %v22 = vld [vmem:[%s1 + $0x4] sm:$0xf]
  %v23 = vld [vmem:[%s1 + $0x8] sm:$0xf]
  %v24 = vld [vmem:[%s1 + $0xc] sm:$0xf]
  %v25 = vld [vmem:[%s1 + $0x10] sm:$0xf]
  %v26 = vld [vmem:[%s1 + $0x14] sm:$0xf]
  %v27 = vld [vmem:[%s1 + $0x18] sm:$0xf]
  %v28 = vld [vmem:[%s1 + $0x1c] sm:$0xf]
  %v29 = vld [vmem:[%s1 + $0x20] sm:$0xf]
  %v30 = vld [vmem:[%s1 + $0x24] sm:$0xf]
  %v31 = vld [vmem:[%s1 + $0x28] sm:$0xf]
  %v32 = vld [vmem:[%s1 + $0x2c] sm:$0xf]
  %v33 = vld [vmem:[%s1 + $0x30] sm:$0xf]
  %v34 = vld [vmem:[%s1 + $0x34] sm:$0xf]
  %v35 = vld [vmem:[%s1 + $0x38] sm:$0xf]
  %v36 = vld [vmem:[%s1 + $0x3c] sm:$0xf]
  %v37 = vld [vmem:[%s1 + $0x40] sm:$0xf]
  %v38 = vld [vmem:[%s1 + $0x44] sm:$0xf]
  %v39 = vld [vmem:[%s1 + $0x48] sm:$0xf]
  %v40 = vld [vmem:[%s1 + $0x4c] sm:$0xf]
  %v41 = vld [vmem:[%s1 + $0x50] sm:$0xf]
  %v42 = vld [vmem:[%s1 + $0x54] sm:$0xf]
  %v43 = vld [vmem:[%s1 + $0x58] sm:$0xf]
  %v44 = vld [vmem:[%s1 + $0x5c] sm:$0xf]
  %v45 = vld [vmem:[%s1 + $0x60] sm:$0xf]
  %v46 = vld [vmem:[%s1 + $0x64] sm:$0xf]
  %v47 = vld [vmem:[%s1 + $0x68] sm:$0xf]
  %v48 = vld [vmem:[%s1 + $0x6c] sm:$0xf]
  %v49 = vld [vmem:[%s1 + $0x70] sm:$0xf]
  %v50 = vld [vmem:[%s1 + $0x74] sm:$0xf]
  %v51 = vld [vmem:[%s1 + $0x78] sm:$0xf]
  %v52 = vld [vmem:[%s1 + $0x7c] sm:$0xf]
  %v53 = vld [vmem:[%s1 + $0x80] sm:$0xf]
  %v54 = vld [vmem:[%s1 + $0x84] sm:$0xf]
  %v55 = vld [vmem:[%s1 + $0x88] sm:$0xf]
  %v56 = vld [vmem:[%s1 + $0x8c] sm:$0xf]
  %v57 = vld [vmem:[%s2] sm:$0x1]
  %v59 = vlaneseq
  %v60 = vshrl.u32 %v59, 7
  %v61 = vsub.s32 0, %v60
  %v62 = vrot.slane %v57, %v61
  %v100 = vunpack.c.l.b16 %v21
  %v101 = vunpack.c.l.b16 %v22
  %v102 = vunpack.c.l.b16 %v23
  %v103 = vunpack.c.l.b16 %v24
  %v104 = vunpack.c.l.b16 %v25
  %v105 = vunpack.c.l.b16 %v26
  %v106 = vunpack.c.l.b16 %v27
  %v107 = vunpack.c.l.b16 %v28
  %v108 = vunpack.c.l.b16 %v29
  %v109 = vunpack.c.l.b16 %v30
  %v110 = vunpack.c.l.b16 %v31
  %v111 = vunpack.c.l.b16 %v32
  %v112 = vunpack.c.l.b16 %v33
  %v113 = vunpack.c.l.b16 %v34
  %v114 = vunpack.c.l.b16 %v35
  %v115 = vunpack.c.l.b16 %v36
  %v116 = vunpack.c.l.b16 %v37
  %v117 = vunpack.c.l.b16 %v38
  %v118 = vunpack.c.l.b16 %v39
  %v119 = vunpack.c.l.b16 %v40
  %v120 = vunpack.c.l.b16 %v41
  %v121 = vunpack.c.l.b16 %v42
  %v122 = vunpack.c.l.b16 %v43
  %v123 = vunpack.c.l.b16 %v44
  %v124 = vunpack.c.l.b16 %v45
  %v125 = vunpack.c.l.b16 %v46
  %v126 = vunpack.c.l.b16 %v47
  %v127 = vunpack.c.l.b16 %v48
  %v128 = vunpack.c.l.b16 %v49
  %v129 = vunpack.c.l.b16 %v50
  %v130 = vunpack.c.l.b16 %v51
  %v131 = vunpack.c.l.b16 %v52
  %v132 = vunpack.c.l.b16 %v53
  %v133 = vunpack.c.l.b16 %v54
  %v134 = vunpack.c.l.b16 %v55
  %v135 = vunpack.c.l.b16 %v56
  %v136 = vpack.c.b16 %v101, %v100
  %v137 = vpack.c.b16 %v103, %v102
  %v138 = vpack.c.b16 %v105, %v104
  %v139 = vpack.c.b16 %v107, %v106
  %v140 = vpack.c.b16 %v109, %v108
  %v141 = vpack.c.b16 %v111, %v110
  %v142 = vpack.c.b16 %v113, %v112
  %v143 = vpack.c.b16 %v115, %v114
  %v144 = vpack.c.b16 %v117, %v116
  %v145 = vpack.c.b16 %v119, %v118
  %v146 = vpack.c.b16 %v121, %v120
  %v147 = vpack.c.b16 %v123, %v122
  %v148 = vpack.c.b16 %v125, %v124
  %v149 = vpack.c.b16 %v127, %v126
  %v150 = vpack.c.b16 %v129, %v128
  %v151 = vpack.c.b16 %v131, %v130
  %v152 = vpack.c.b16 %v133, %v132
  %v153 = vpack.c.b16 %v135, %v134
  %vm172 = vcmask 261120
  %v174 = vsel %vm172, %v20, 0
  %176 = vmatprep.subr.bf16.mxu0 0
  %177 = vmatpush1.bf16.msra.mxu0 %v136
  %178 = vmatprep.subr.bf16.mxu0 0
  %179 = vmatpush1.bf16.msra.mxu0 %v137
  %180 = vmatprep.subr.bf16.mxu0 0
  %181 = vmatpush1.bf16.msra.mxu0 %v138
  %182 = vmatprep.subr.bf16.mxu0 0
  %183 = vmatpush1.bf16.msra.mxu0 %v139
  %184 = vmatprep.subr.bf16.mxu0 0
  %185 = vmatpush1.bf16.msra.mxu0 %v140
  %186 = vmatprep.subr.bf16.mxu0 0
  %187 = vmatpush1.bf16.msra.mxu0 %v141
  %188 = vmatprep.subr.bf16.mxu0 0
  %189 = vmatpush1.bf16.msra.mxu0 %v142
  %190 = vmatprep.subr.bf16.mxu0 0
  %191 = vmatpush1.bf16.msra.mxu0 %v143
  %192 = vmatprep.subr.bf16.mxu0 0
  %193 = vmatpush1.bf16.msra.mxu0 %v144
  %194 = vmatprep.subr.bf16.mxu0 0
  %195 = vmatpush1.bf16.msra.mxu0 %v145
  %196 = vmatprep.subr.bf16.mxu0 0
  %197 = vmatpush1.bf16.msra.mxu0 %v146
  %198 = vmatprep.subr.bf16.mxu0 0
  %199 = vmatpush1.bf16.msra.mxu0 %v147
  %200 = vmatprep.subr.bf16.mxu0 0
  %201 = vmatpush1.bf16.msra.mxu0 %v148
  %202 = vmatprep.subr.bf16.mxu0 0
  %203 = vmatpush1.bf16.msra.mxu0 %v149
  %204 = vmatprep.subr.bf16.mxu0 0
  %205 = vmatpush1.bf16.msra.mxu0 %v150
  %206 = vmatprep.subr.bf16.mxu0 0
  %207 = vmatpush1.bf16.msra.mxu0 %v151
  %208 = vmatprep.mubr.bf16.mxu0 %v19
  %209 = vmatmul.mubr.bf16.gmra.mrb[0].mxu0 %v18
  %v210 = vpop.f32.mrb[0].mxu0
  %v211 = vadd.f32 %v62, %v210
  %v212 = vpop.f32.mrb[0].mxu0
  %v213 = vpop.f32.mrb[0].mxu0
  %v214 = vpop.f32.mrb[0].mxu0
  %215 = vdwg.mxu0
  %216 = vmatprep.subr.bf16.mxu0 0
  %217 = vmatpush1.bf16.msra.mxu0 %v152
  %218 = vmatprep.subr.bf16.mxu0 0
  %219 = vmatpush1.bf16.msra.mxu0 %v153
  %220 = vmatprep.subr.bf16.mxu0 0
  %221 = vmatpush1.bf16.msra.mxu0 0
  %222 = vmatprep.subr.bf16.mxu0 0
  %223 = vmatpush1.bf16.msra.mxu0 0
  %224 = vmatprep.subr.bf16.mxu0 0
  %225 = vmatpush1.bf16.msra.mxu0 0
  %226 = vmatprep.subr.bf16.mxu0 0
  %227 = vmatpush1.bf16.msra.mxu0 0
  %228 = vmatprep.subr.bf16.mxu0 0
  %229 = vmatpush1.bf16.msra.mxu0 0
  %230 = vmatprep.subr.bf16.mxu0 0
  %231 = vmatpush1.bf16.msra.mxu0 0
  %232 = vmatprep.subr.bf16.mxu0 0
  %233 = vmatpush1.bf16.msra.mxu0 0
  %234 = vmatprep.subr.bf16.mxu0 0
  %235 = vmatpush1.bf16.msra.mxu0 0
  %236 = vmatprep.subr.bf16.mxu0 0
  %237 = vmatpush1.bf16.msra.mxu0 0
  %238 = vmatprep.subr.bf16.mxu0 0
  %239 = vmatpush1.bf16.msra.mxu0 0
  %240 = vmatprep.subr.bf16.mxu0 0
  %241 = vmatpush1.bf16.msra.mxu0 0
  %242 = vmatprep.subr.bf16.mxu0 0
  %243 = vmatpush1.bf16.msra.mxu0 0
  %244 = vmatprep.subr.bf16.mxu0 0
  %245 = vmatpush1.bf16.msra.mxu0 0
  %246 = vmatprep.subr.bf16.mxu0 0
  %247 = vmatpush1.bf16.msra.mxu0 0
  %248 = vmatprep.mubr.bf16.mxu0 0
  %249 = vmatmul.mubr.bf16.gmra.mrb[0].mxu0 %v174
  %v250 = vpop.f32.mrb[0].mxu0
  %v251 = vadd.f32 %v211, %v250
  %v252 = vpop.f32.mrb[0].mxu0
  %v253 = vpop.f32.mrb[0].mxu0
  %v254 = vpop.f32.mrb[0].mxu0
  %255 = vdwg.mxu0
  %256 = vst.msk [vmem:[%s3] sm:$0xff] %vm172, %v251
  // Predicated region
  $region14: #{hvq_encoder_forward.26} parent=0 // pred_check
    _
  $region15: #{hvq_encoder_forward.26} parent=0 // pred_check_branch
    %258 = sbr.rel (0) target = $region17
  $region16: #{hvq_encoder_forward.26} parent=0 // pred_region
    _
  $region17: #{hvq_encoder_forward.26} parent=0 // pred_fallthru
    _
  // Predicated region
  $region18: #{hvq_encoder_forward.26} parent=0 // pred_check
    _
  $region19: #{hvq_encoder_forward.26} parent=0 // pred_check_branch
    %260 = sbr.rel (0) target = $region21
  $region20: #{hvq_encoder_forward.26} parent=0 // pred_region
    _
  $region21: #{hvq_encoder_forward.26} parent=0 // pred_fallthru
    _

// kernel: hvq_encoder_forward.29
$region0: #{hvq_encoder_forward.29}
  #allocation0 [shape = 'u32[]', space=smem, size = 0x4, offset = 0x4, fixed_abs, tag = 'smem constant byte address 0x4 - core index']
  #allocation1 [shape = 'u32[144,128]{1,0:T(1,128)}', space=vmem, size = 0x12000, scoped, tag = 'internal scratch']
  %s0 = inlined_call_operand.vmem [shape: f32[8,288], index: 0, kind: input, shape index: {}]
  %s1 = inlined_call_operand.vmem [shape: bf16[288,128], index: 1, kind: input, shape index: {}]
  %s2 = inlined_call_operand.vmem [shape: f32[1,128], index: 2, kind: input, shape index: {}]
  %s3 = inlined_call_operand.vmem [shape: f32[8,128], index: 3, kind: output, shape index: {}]
  %s4 = sld [smem:[#allocation0]]
  $region22: #{hvq_encoder_forward.29} parent=0
    _
  %s6 = ssub.s32 1, %s4
  %s7 = scalar_select 0, %s6, %s4
  // Predicated region
  $region2: #{hvq_encoder_forward.29} parent=0 // pred_check
    _
  $region3: #{hvq_encoder_forward.29} parent=0 // pred_check_branch
    %9 = sbr.rel (0) target = $region5
  $region4: #{hvq_encoder_forward.29} parent=0 // pred_region
    _
  $region5: #{hvq_encoder_forward.29} parent=0 // pred_fallthru
    _
  // Predicated region
  $region6: #{hvq_encoder_forward.29} parent=0 // pred_check
    _
  $region7: #{hvq_encoder_forward.29} parent=0 // pred_check_branch
    %11 = sbr.rel (0) target = $region9
  $region8: #{hvq_encoder_forward.29} parent=0 // pred_region
    _
  $region9: #{hvq_encoder_forward.29} parent=0 // pred_fallthru
    _
  // Predicated region
  $region10: #{hvq_encoder_forward.29} parent=0 // pred_check
    _
  $region11: #{hvq_encoder_forward.29} parent=0 // pred_check_branch
    %13 = sbr.rel (0) target = $region13
  $region12: #{hvq_encoder_forward.29} parent=0 // pred_region
    _
  $region13: #{hvq_encoder_forward.29} parent=0 // pred_fallthru
    _
  %v15 = vld [vmem:[%s0] sm:$0xff]
  %v16 = vld [vmem:[%s0 + $0x8] sm:$0xff]
  %v17 = vld [vmem:[%s0 + $0x10] sm:$0xff]
  %v18 = vpack.c.bf16 %v15, %v15
  %v19 = vpack.c.bf16 %v16, %v16
  %v20 = vpack.c.bf16 %v17, %v17
  %v21 = vld [vmem:[%s1] sm:$0xf]
  %v22 = vld [vmem:[%s1 + $0x4] sm:$0xf]
  %v23 = vld [vmem:[%s1 + $0x8] sm:$0xf]
  %v24 = vld [vmem:[%s1 + $0xc] sm:$0xf]
  %v25 = vld [vmem:[%s1 + $0x10] sm:$0xf]
  %v26 = vld [vmem:[%s1 + $0x14] sm:$0xf]
  %v27 = vld [vmem:[%s1 + $0x18] sm:$0xf]
  %v28 = vld [vmem:[%s1 + $0x1c] sm:$0xf]
  %v29 = vld [vmem:[%s1 + $0x20] sm:$0xf]
  %v30 = vld [vmem:[%s1 + $0x24] sm:$0xf]
  %v31 = vld [vmem:[%s1 + $0x28] sm:$0xf]
  %v32 = vld [vmem:[%s1 + $0x2c] sm:$0xf]
  %v33 = vld [vmem:[%s1 + $0x30] sm:$0xf]
  %v34 = vld [vmem:[%s1 + $0x34] sm:$0xf]
  %v35 = vld [vmem:[%s1 + $0x38] sm:$0xf]
  %v36 = vld [vmem:[%s1 + $0x3c] sm:$0xf]
  %v37 = vld [vmem:[%s1 + $0x40] sm:$0xf]
  %v38 = vld [vmem:[%s1 + $0x44] sm:$0xf]
  %v39 = vld [vmem:[%s1 + $0x48] sm:$0xf]
  %v40 = vld [vmem:[%s1 + $0x4c] sm:$0xf]
  %v41 = vld [vmem:[%s1 + $0x50] sm:$0xf]
  %v42 = vld [vmem:[%s1 + $0x54] sm:$0xf]
  %v43 = vld [vmem:[%s1 + $0x58] sm:$0xf]
  %v44 = vld [vmem:[%s1 + $0x5c] sm:$0xf]
  %v45 = vld [vmem:[%s1 + $0x60] sm:$0xf]
  %v46 = vld [vmem:[%s1 + $0x64] sm:$0xf]
  %v47 = vld [vmem:[%s1 + $0x68] sm:$0xf]
  %v48 = vld [vmem:[%s1 + $0x6c] sm:$0xf]
  %v49 = vld [vmem:[%s1 + $0x70] sm:$0xf]
  %v50 = vld [vmem:[%s1 + $0x74] sm:$0xf]
  %v51 = vld [vmem:[%s1 + $0x78] sm:$0xf]
  %v52 = vld [vmem:[%s1 + $0x7c] sm:$0xf]
  %v53 = vld [vmem:[%s1 + $0x80] sm:$0xf]
  %v54 = vld [vmem:[%s1 + $0x84] sm:$0xf]
  %v55 = vld [vmem:[%s1 + $0x88] sm:$0xf]
  %v56 = vld [vmem:[%s1 + $0x8c] sm:$0xf]
  %v57 = vld [vmem:[%s2] sm:$0x1]
  %v59 = vlaneseq
  %v60 = vshrl.u32 %v59, 7
  %v61 = vsub.s32 0, %v60
  %v62 = vrot.slane %v57, %v61
  %v100 = vunpack.c.l.b16 %v21
  %v101 = vunpack.c.l.b16 %v22
  %v102 = vunpack.c.l.b16 %v23
  %v103 = vunpack.c.l.b16 %v24
  %v104 = vunpack.c.l.b16 %v25
  %v105 = vunpack.c.l.b16 %v26
  %v106 = vunpack.c.l.b16 %v27
  %v107 = vunpack.c.l.b16 %v28
  %v108 = vunpack.c.l.b16 %v29
  %v109 = vunpack.c.l.b16 %v30
  %v110 = vunpack.c.l.b16 %v31
  %v111 = vunpack.c.l.b16 %v32
  %v112 = vunpack.c.l.b16 %v33
  %v113 = vunpack.c.l.b16 %v34
  %v114 = vunpack.c.l.b16 %v35
  %v115 = vunpack.c.l.b16 %v36
  %v116 = vunpack.c.l.b16 %v37
  %v117 = vunpack.c.l.b16 %v38
  %v118 = vunpack.c.l.b16 %v39
  %v119 = vunpack.c.l.b16 %v40
  %v120 = vunpack.c.l.b16 %v41
  %v121 = vunpack.c.l.b16 %v42
  %v122 = vunpack.c.l.b16 %v43
  %v123 = vunpack.c.l.b16 %v44
  %v124 = vunpack.c.l.b16 %v45
  %v125 = vunpack.c.l.b16 %v46
  %v126 = vunpack.c.l.b16 %v47
  %v127 = vunpack.c.l.b16 %v48
  %v128 = vunpack.c.l.b16 %v49
  %v129 = vunpack.c.l.b16 %v50
  %v130 = vunpack.c.l.b16 %v51
  %v131 = vunpack.c.l.b16 %v52
  %v132 = vunpack.c.l.b16 %v53
  %v133 = vunpack.c.l.b16 %v54
  %v134 = vunpack.c.l.b16 %v55
  %v135 = vunpack.c.l.b16 %v56
  %v136 = vpack.c.b16 %v101, %v100
  %v137 = vpack.c.b16 %v103, %v102
  %v138 = vpack.c.b16 %v105, %v104
  %v139 = vpack.c.b16 %v107, %v106
  %v140 = vpack.c.b16 %v109, %v108
  %v141 = vpack.c.b16 %v111, %v110
  %v142 = vpack.c.b16 %v113, %v112
  %v143 = vpack.c.b16 %v115, %v114
  %v144 = vpack.c.b16 %v117, %v116
  %v145 = vpack.c.b16 %v119, %v118
  %v146 = vpack.c.b16 %v121, %v120
  %v147 = vpack.c.b16 %v123, %v122
  %v148 = vpack.c.b16 %v125, %v124
  %v149 = vpack.c.b16 %v127, %v126
  %v150 = vpack.c.b16 %v129, %v128
  %v151 = vpack.c.b16 %v131, %v130
  %v152 = vpack.c.b16 %v133, %v132
  %v153 = vpack.c.b16 %v135, %v134
  %vm172 = vcmask 261120
  %v174 = vsel %vm172, %v20, 0
  %176 = vmatprep.subr.bf16.mxu0 0
  %177 = vmatpush1.bf16.msra.mxu0 %v136
  %178 = vmatprep.subr.bf16.mxu0 0
  %179 = vmatpush1.bf16.msra.mxu0 %v137
  %180 = vmatprep.subr.bf16.mxu0 0
  %181 = vmatpush1.bf16.msra.mxu0 %v138
  %182 = vmatprep.subr.bf16.mxu0 0
  %183 = vmatpush1.bf16.msra.mxu0 %v139
  %184 = vmatprep.subr.bf16.mxu0 0
  %185 = vmatpush1.bf16.msra.mxu0 %v140
  %186 = vmatprep.subr.bf16.mxu0 0
  %187 = vmatpush1.bf16.msra.mxu0 %v141
  %188 = vmatprep.subr.bf16.mxu0 0
  %189 = vmatpush1.bf16.msra.mxu0 %v142
  %190 = vmatprep.subr.bf16.mxu0 0
  %191 = vmatpush1.bf16.msra.mxu0 %v143
  %192 = vmatprep.subr.bf16.mxu0 0
  %193 = vmatpush1.bf16.msra.mxu0 %v144
  %194 = vmatprep.subr.bf16.mxu0 0
  %195 = vmatpush1.bf16.msra.mxu0 %v145
  %196 = vmatprep.subr.bf16.mxu0 0
  %197 = vmatpush1.bf16.msra.mxu0 %v146
  %198 = vmatprep.subr.bf16.mxu0 0
  %199 = vmatpush1.bf16.msra.mxu0 %v147
  %200 = vmatprep.subr.bf16.mxu0 0
  %201 = vmatpush1.bf16.msra.mxu0 %v148
  %202 = vmatprep.subr.bf16.mxu0 0
  %203 = vmatpush1.bf16.msra.mxu0 %v149
  %204 = vmatprep.subr.bf16.mxu0 0
  %205 = vmatpush1.bf16.msra.mxu0 %v150
  %206 = vmatprep.subr.bf16.mxu0 0
  %207 = vmatpush1.bf16.msra.mxu0 %v151
  %208 = vmatprep.mubr.bf16.mxu0 %v19
  %209 = vmatmul.mubr.bf16.gmra.mrb[0].mxu0 %v18
  %v210 = vpop.f32.mrb[0].mxu0
  %v211 = vadd.f32 %v62, %v210
  %v212 = vpop.f32.mrb[0].mxu0
  %v213 = vpop.f32.mrb[0].mxu0
  %v214 = vpop.f32.mrb[0].mxu0
  %215 = vdwg.mxu0
  %216 = vmatprep.subr.bf16.mxu0 0
  %217 = vmatpush1.bf16.msra.mxu0 %v152
  %218 = vmatprep.subr.bf16.mxu0 0
  %219 = vmatpush1.bf16.msra.mxu0 %v153
  %220 = vmatprep.subr.bf16.mxu0 0
  %221 = vmatpush1.bf16.msra.mxu0 0
  %222 = vmatprep.subr.bf16.mxu0 0
  %223 = vmatpush1.bf16.msra.mxu0 0
  %224 = vmatprep.subr.bf16.mxu0 0
  %225 = vmatpush1.bf16.msra.mxu0 0
  %226 = vmatprep.subr.bf16.mxu0 0
  %227 = vmatpush1.bf16.msra.mxu0 0
  %228 = vmatprep.subr.bf16.mxu0 0
  %229 = vmatpush1.bf16.msra.mxu0 0
  %230 = vmatprep.subr.bf16.mxu0 0
  %231 = vmatpush1.bf16.msra.mxu0 0
  %232 = vmatprep.subr.bf16.mxu0 0
  %233 = vmatpush1.bf16.msra.mxu0 0
  %234 = vmatprep.subr.bf16.mxu0 0
  %235 = vmatpush1.bf16.msra.mxu0 0
  %236 = vmatprep.subr.bf16.mxu0 0
  %237 = vmatpush1.bf16.msra.mxu0 0
  %238 = vmatprep.subr.bf16.mxu0 0
  %239 = vmatpush1.bf16.msra.mxu0 0
  %240 = vmatprep.subr.bf16.mxu0 0
  %241 = vmatpush1.bf16.msra.mxu0 0
  %242 = vmatprep.subr.bf16.mxu0 0
  %243 = vmatpush1.bf16.msra.mxu0 0
  %244 = vmatprep.subr.bf16.mxu0 0
  %245 = vmatpush1.bf16.msra.mxu0 0
  %246 = vmatprep.subr.bf16.mxu0 0
  %247 = vmatpush1.bf16.msra.mxu0 0
  %248 = vmatprep.mubr.bf16.mxu0 0
  %249 = vmatmul.mubr.bf16.gmra.mrb[0].mxu0 %v174
  %v250 = vpop.f32.mrb[0].mxu0
  %v251 = vadd.f32 %v211, %v250
  %v252 = vpop.f32.mrb[0].mxu0
  %v253 = vpop.f32.mrb[0].mxu0
  %v254 = vpop.f32.mrb[0].mxu0
  %255 = vdwg.mxu0
  %256 = vst [vmem:[%s3] sm:$0xff] %v251
  // Predicated region
  $region14: #{hvq_encoder_forward.29} parent=0 // pred_check
    _
  $region15: #{hvq_encoder_forward.29} parent=0 // pred_check_branch
    %258 = sbr.rel (0) target = $region17
  $region16: #{hvq_encoder_forward.29} parent=0 // pred_region
    _
  $region17: #{hvq_encoder_forward.29} parent=0 // pred_fallthru
    _
  // Predicated region
  $region18: #{hvq_encoder_forward.29} parent=0 // pred_check
    _
  $region19: #{hvq_encoder_forward.29} parent=0 // pred_check_branch
    %260 = sbr.rel (0) target = $region21
  $region20: #{hvq_encoder_forward.29} parent=0 // pred_region
    _
  $region21: #{hvq_encoder_forward.29} parent=0 // pred_fallthru
    _

// kernel: hvq_encoder_forward.30
$region0: #{hvq_encoder_forward.30}
  #allocation0 [shape = 'u32[]', space=smem, size = 0x4, offset = 0x4, fixed_abs, tag = 'smem constant byte address 0x4 - core index']
  #allocation1 [shape = 'u32[144,128]{1,0:T(1,128)}', space=vmem, size = 0x12000, scoped, tag = 'internal scratch']
  #allocation2 [shape = 'f32[1,1]{1,0:T(1,128)}', space=vmem, size = 0x200, scoped, tag = 'scratch operand']
  %s0 = inlined_call_operand.vmem [shape: f32[32,64], index: 0, kind: input, shape index: {}]
  %s1 = inlined_call_operand.vmem [shape: f32[64,32], index: 1, kind: input, shape index: {}]
  %s2 = inlined_call_operand.vmem [shape: f32[1,32], index: 2, kind: input, shape index: {}]
  %s3 = inlined_call_operand.vmem [shape: f32[32,64], index: 3, kind: input, shape index: {}]
  %s4 = inlined_call_operand.vmem [shape: f32[32,32], index: 4, kind: output, shape index: {0}]
  %s5 = inlined_call_operand.hbm [shape: f32[1,1], index: 5, kind: output, shape index: {1}]
  %6 = xla_tuple %s4, %s5
  %s7 = sld [smem:[#allocation0]]
  $region42: #{hvq_encoder_forward.30} parent=0
    _
  %s9 = ssub.s32 1, %s7
  %s10 = scalar_select 0, %s9, %s7
  $region1: #{hvq_encoder_forward.30} parent=0
    #allocation3 [shape = 'u8[512]{0}', space=vmem, size = 0x400, scoped, tag = 'output window, operand 1, single buffered']
    #allocation4 [shape = 's32[1]{0}', space=sflag, size = 0x4, scoped, tag = 'scoped memory for hvq_encoder_forward.30']
    %11 = vsyncpa [#allocation4], 0
    // Predicated region
    $region2: #{hvq_encoder_forward.30} parent=1 // pred_check
      _
    $region3: #{hvq_encoder_forward.30} parent=1 // pred_check_branch
      %13 = sbr.rel (0) target = $region5
    $region4: #{hvq_encoder_forward.30} parent=1 // pred_region
      _
    $region5: #{hvq_encoder_forward.30} parent=1 // pred_fallthru
      _
    // Predicated region
    $region6: #{hvq_encoder_forward.30} parent=1 // pred_check
      _
    $region7: #{hvq_encoder_forward.30} parent=1 // pred_check_branch
      %15 = sbr.rel (0) target = $region9
    $region8: #{hvq_encoder_forward.30} parent=1 // pred_region
      _
    $region9: #{hvq_encoder_forward.30} parent=1 // pred_fallthru
      _
    // Predicated region
    $region10: #{hvq_encoder_forward.30} parent=1 // pred_check
      _
    $region11: #{hvq_encoder_forward.30} parent=1 // pred_check_branch
      %17 = sbr.rel (0) target = $region13
    $region12: #{hvq_encoder_forward.30} parent=1 // pred_region
      _
    $region13: #{hvq_encoder_forward.30} parent=1 // pred_fallthru
      _
    // Predicated region
    $region14: #{hvq_encoder_forward.30} parent=1 // pred_check
      _
    $region15: #{hvq_encoder_forward.30} parent=1 // pred_check_branch
      %19 = sbr.rel (0) target = $region17
    $region16: #{hvq_encoder_forward.30} parent=1 // pred_region
      _
    $region17: #{hvq_encoder_forward.30} parent=1 // pred_fallthru
      _
    %p20 = scmp.eq.s32.totalorder 0, 0
    // Predicated region
    $region18: #{hvq_encoder_forward.30} parent=1 // pred_check
      %p21 = pneg %p20
    $region19: #{hvq_encoder_forward.30} parent=1 // pred_check_branch
      %23 = sbr.rel (%p21) target = $region21
    $region20: #{hvq_encoder_forward.30} parent=1 // pred_region
      %vm24 = vcmask 0
      %25 = vst.msk [vmem:[#allocation2] sm:$0x1] %vm24, 0.0
    $region21: #{hvq_encoder_forward.30} parent=1 // pred_fallthru
      _
    %v26 = vld [vmem:[%s0] sm:$0xff]
    %v27 = vld [vmem:[%s0 + $0x8] sm:$0xff]
    %v28 = vld [vmem:[%s0 + $0x10] sm:$0xff]
    %v29 = vld [vmem:[%s0 + $0x18] sm:$0xff]
    %v30 = vld [vmem:[%s1] sm:$0xff]
    %v31 = vld [vmem:[%s1 + $0x8] sm:$0xff]
    %v32 = vld [vmem:[%s1 + $0x10] sm:$0xff]
    %v33 = vld [vmem:[%s1 + $0x18] sm:$0xff]
    %v34 = vld [vmem:[%s1 + $0x20] sm:$0xff]
    %v35 = vld [vmem:[%s1 + $0x28] sm:$0xff]
    %v36 = vld [vmem:[%s1 + $0x30] sm:$0xff]
    %v37 = vld [vmem:[%s1 + $0x38] sm:$0xff]
    %v38 = vld [vmem:[%s2] sm:$0x1]
    %v40 = vlaneseq
    %v41 = vshrl.u32 %v40, 7
    %v42 = vsub.s32 0, %v41
    %v43 = vrot.slane %v38, %v42
    %vm45 = vcmask 523264
    %v47 = vsel %vm45, %v26, 0
    %v50 = vsel %vm45, %v27, 0
    %v53 = vsel %vm45, %v28, 0
    %v56 = vsel %vm45, %v29, 0
    %58 = vmatprep.subr.mxu0 0.0
    %59 = vmatpush1.msra.mxu0 %v30
    %60 = vmatprep.subr.mxu0 0.0
    %61 = vmatpush1.msra.mxu0 %v31
    %62 = vmatprep.subr.mxu0 0.0
    %63 = vmatpush1.msra.mxu0 %v32
    %64 = vmatprep.subr.mxu0 0.0
    %65 = vmatpush1.msra.mxu0 %v33
    %66 = vmatprep.subr.mxu0 0.0
    %67 = vmatpush1.msra.mxu0 %v34
    %68 = vmatprep.subr.mxu0 0.0
    %69 = vmatpush1.msra.mxu0 %v35
    %70 = vmatprep.subr.mxu0 0.0
    %71 = vmatpush1.msra.mxu0 %v36
    %72 = vmatprep.subr.mxu0 0.0
    %73 = vmatpush1.msra.mxu0 %v37
    %74 = vmatprep.subr.mxu0 0.0
    %75 = vmatpush1.msra.mxu0 0.0
    %76 = vmatprep.subr.mxu0 0.0
    %77 = vmatpush1.msra.mxu0 0.0
    %78 = vmatprep.subr.mxu0 0.0
    %79 = vmatpush1.msra.mxu0 0.0
    %80 = vmatprep.subr.mxu0 0.0
    %81 = vmatpush1.msra.mxu0 0.0
    %82 = vmatprep.subr.mxu0 0.0
    %83 = vmatpush1.msra.mxu0 0.0
    %84 = vmatprep.subr.mxu0 0.0
    %85 = vmatpush1.msra.mxu0 0.0
    %86 = vmatprep.subr.mxu0 0.0
    %87 = vmatpush1.msra.mxu0 0.0
    %88 = vmatprep.subr.mxu0 0.0
    %89 = vmatpush1.msra.mxu0 0.0
    %90 = vmatprep.subr.mxu0 0.0
    %91 = vmatpush1.msra.mxu0 0.0
    %92 = vmatprep.subr.mxu0 0.0
    %93 = vmatpush1.msra.mxu0 0.0
    %94 = vmatprep.subr.mxu0 0.0
    %95 = vmatpush1.msra.mxu0 0.0
    %96 = vmatprep.subr.mxu0 0.0
    %97 = vmatpush1.msra.mxu0 0.0
    %98 = vmatprep.subr.mxu0 0.0
    %99 = vmatpush1.msra.mxu0 0.0
    %100 = vmatprep.subr.mxu0 0.0
    %101 = vmatpush1.msra.mxu0 0.0
    %102 = vmatprep.subr.mxu0 0.0
    %103 = vmatpush1.msra.mxu0 0.0
    %104 = vmatprep.subr.mxu0 0.0
    %105 = vmatpush1.msra.mxu0 0.0
    %106 = vmatprep.subr.mxu0 0.0
    %107 = vmatpush1.msra.mxu0 0.0
    %108 = vmatprep.subr.mxu0 0.0
    %109 = vmatpush1.msra.mxu0 0.0
    %110 = vmatprep.subr.mxu0 0.0
    %111 = vmatpush1.msra.mxu0 0.0
    %112 = vmatprep.subr.mxu0 0.0
    %113 = vmatpush1.msra.mxu0 0.0
    %114 = vmatprep.subr.mxu0 0.0
    %115 = vmatpush1.msra.mxu0 0.0
    %116 = vmatprep.subr.mxu0 0.0
    %117 = vmatpush1.msra.mxu0 0.0
    %118 = vmatprep.subr.mxu0 0.0
    %119 = vmatpush1.msra.mxu0 0.0
    %120 = vmatprep.subr.mxu0 0.0
    %121 = vmatpush1.msra.mxu0 0.0
    %122 = vmatprep.mubr.f32.mxu0 0.0
    %123 = vmatmul.mubr.f32.gmra.mrb[0].mxu0 %v47
    %v124 = vpop.f32.mrb[0].mxu0
    %v125 = vadd.f32 %v43, %v124
    %v126 = vpop.f32.mrb[0].mxu0
    %127 = vmatprep.mubr.f32.mxu0 0.0
    %128 = vmatmul.mubr.f32.gmra.mrb[0].mxu0 %v50
    %v129 = vpop.f32.mrb[0].mxu0
    %v130 = vadd.f32 %v43, %v129
    %v131 = vpop.f32.mrb[0].mxu0
    %132 = vmatprep.mubr.f32.mxu0 0.0
    %133 = vmatmul.mubr.f32.gmra.mrb[0].mxu0 %v53
    %v134 = vpop.f32.mrb[0].mxu0
    %v135 = vadd.f32 %v43, %v134
    %v136 = vpop.f32.mrb[0].mxu0
    %137 = vmatprep.mubr.f32.mxu0 0.0
    %138 = vmatmul.mubr.f32.gmra.mrb[0].mxu0 %v56
    %v139 = vpop.f32.mrb[0].mxu0
    %v140 = vadd.f32 %v43, %v139
    %v141 = vpop.f32.mrb[0].mxu0
    %142 = vdwg.mxu0
    %v143 = vld [vmem:[%s3] sm:$0xff]
    %v144 = vld [vmem:[%s3 + $0x8] sm:$0xff]
    %v145 = vld [vmem:[%s3 + $0x10] sm:$0xff]
    %v146 = vld [vmem:[%s3 + $0x18] sm:$0xff]
    %v147 = vmul.f32 %v125, %v125
    %v148 = vmul.f32 %v130, %v130
    %v149 = vmul.f32 %v135, %v135
    %v150 = vmul.f32 %v140, %v140
    %vm151 = vcmask 261120
    %v152 = vsel %vm151, %v147, 0.0
    %153 = vadd.xlane.f32.xlu0 %v152
    %v154 = vpop.xlane.xlu0 %153
    %v155 = vsel %vm151, %v148, 0.0
    %156 = vadd.xlane.f32.xlu0 %v155
    %v157 = vpop.xlane.xlu0 %156
    %v158 = vsel %vm151, %v149, 0.0
    %159 = vadd.xlane.f32.xlu0 %v158
    %v160 = vpop.xlane.xlu0 %159
    %v161 = vsel %vm151, %v150, 0.0
    %162 = vadd.xlane.f32.xlu0 %v161
    %v163 = vpop.xlane.xlu0 %162
    %v164 = vmul.f32 %v143, %v143
    %v165 = vmul.f32 %v144, %v144
    %v166 = vmul.f32 %v145, %v145
    %v167 = vmul.f32 %v146, %v146
    %v168 = vsel %vm45, %v164, 0.0
    %v169 = vsel %vm45, %v165, 0.0
    %v170 = vadd.f32 %v168, %v169
    %v171 = vsel %vm45, %v166, 0.0
    %v172 = vadd.f32 %v170, %v171
    %v173 = vsel %vm45, %v167, 0.0
    %v174 = vadd.f32 %v172, %v173
    %v175 = vrot.slane %v174, 4
    %v176 = vadd.f32 %v174, %v175
    %v177 = vrot.slane %v176, 2
    %v178 = vadd.f32 %v176, %v177
    %v179 = vrot.slane %v178, 1
    %v180 = vadd.f32 %v178, %v179
    %v182 = vsel %vm151, %v125, 0
    %v185 = vsel %vm151, %v130, 0
    %v188 = vsel %vm151, %v135, 0
    %v191 = vsel %vm151, %v140, 0
    %193 = vmatprep.subr.mxu0 0.0
    %194 = vmatpush1.msra.mxu0 %v143
    %195 = vmatprep.subr.mxu0 0.0
    %196 = vmatpush1.msra.mxu0 %v144
    %197 = vmatprep.subr.mxu0 0.0
    %198 = vmatpush1.msra.mxu0 %v145
    %199 = vmatprep.subr.mxu0 0.0
    %200 = vmatpush1.msra.mxu0 %v146
    %201 = vmatprep.subr.mxu0 0.0
    %202 = vmatpush1.msra.mxu0 0.0
    %203 = vmatprep.subr.mxu0 0.0
    %204 = vmatpush1.msra.mxu0 0.0
    %205 = vmatprep.subr.mxu0 0.0
    %206 = vmatpush1.msra.mxu0 0.0
    %207 = vmatprep.subr.mxu0 0.0
    %208 = vmatpush1.msra.mxu0 0.0
    %209 = vmatprep.subr.mxu0 0.0
    %210 = vmatpush1.msra.mxu0 0.0
    %211 = vmatprep.subr.mxu0 0.0
    %212 = vmatpush1.msra.mxu0 0.0
    %213 = vmatprep.subr.mxu0 0.0
    %214 = vmatpush1.msra.mxu0 0.0
    %215 = vmatprep.subr.mxu0 0.0
    %216 = vmatpush1.msra.mxu0 0.0
    %217 = vmatprep.subr.mxu0 0.0
    %218 = vmatpush1.msra.mxu0 0.0
    %219 = vmatprep.subr.mxu0 0.0
    %220 = vmatpush1.msra.mxu0 0.0
    %221 = vmatprep.subr.mxu0 0.0
    %222 = vmatpush1.msra.mxu0 0.0
    %223 = vmatprep.subr.mxu0 0.0
    %224 = vmatpush1.msra.mxu0 0.0
    %225 = vmatprep.subr.mxu0 0.0
    %226 = vmatpush1.msra.mxu0 0.0
    %227 = vmatprep.subr.mxu0 0.0
    %228 = vmatpush1.msra.mxu0 0.0
    %229 = vmatprep.subr.mxu0 0.0
    %230 = vmatpush1.msra.mxu0 0.0
    %231 = vmatprep.subr.mxu0 0.0
    %232 = vmatpush1.msra.mxu0 0.0
    %233 = vmatprep.subr.mxu0 0.0
    %234 = vmatpush1.msra.mxu0 0.0
    %235 = vmatprep.subr.mxu0 0.0
    %236 = vmatpush1.msra.mxu0 0.0
    %237 = vmatprep.subr.mxu0 0.0
    %238 = vmatpush1.msra.mxu0 0.0
    %239 = vmatprep.subr.mxu0 0.0
    %240 = vmatpush1.msra.mxu0 0.0
    %241 = vmatprep.subr.mxu0 0.0
    %242 = vmatpush1.msra.mxu0 0.0
    %243 = vmatprep.subr.mxu0 0.0
    %244 = vmatpush1.msra.mxu0 0.0
    %245 = vmatprep.subr.mxu0 0.0
    %246 = vmatpush1.msra.mxu0 0.0
    %247 = vmatprep.subr.mxu0 0.0
    %248 = vmatpush1.msra.mxu0 0.0
    %249 = vmatprep.subr.mxu0 0.0
    %250 = vmatpush1.msra.mxu0 0.0
    %251 = vmatprep.subr.mxu0 0.0
    %252 = vmatpush1.msra.mxu0 0.0
    %253 = vmatprep.subr.mxu0 0.0
    %254 = vmatpush1.msra.mxu0 0.0
    %255 = vmatprep.subr.mxu0 0.0
    %256 = vmatpush1.msra.mxu0 0.0
    %257 = vmatprep.mubr.f32.mxu0 0.0
    %258 = vmatmul.mubr.f32.gmra.mrb[0].mxu0 %v182
    %v259 = vpop.f32.mrb[0].mxu0
    %v260 = vadd.f32 0.0, %v259
    %v261 = vpop.f32.mrb[0].mxu0
    %262 = vmatprep.mubr.f32.mxu0 0.0
    %263 = vmatmul.mubr.f32.gmra.mrb[0].mxu0 %v185
    %v264 = vpop.f32.mrb[0].mxu0
    %v265 = vadd.f32 0.0, %v264
    %v266 = vpop.f32.mrb[0].mxu0
    %267 = vmatprep.mubr.f32.mxu0 0.0
    %268 = vmatmul.mubr.f32.gmra.mrb[0].mxu0 %v188
    %v269 = vpop.f32.mrb[0].mxu0
    %v270 = vadd.f32 0.0, %v269
    %v271 = vpop.f32.mrb[0].mxu0
    %272 = vmatprep.mubr.f32.mxu0 0.0
    %273 = vmatmul.mubr.f32.gmra.mrb[0].mxu0 %v191
    %v274 = vpop.f32.mrb[0].mxu0
    %v275 = vadd.f32 0.0, %v274
    %v276 = vpop.f32.mrb[0].mxu0
    %277 = vdwg.mxu0
    %v278 = vmul.f32 %v260, 2.0
    %v279 = vmul.f32 %v265, 2.0
    %v280 = vmul.f32 %v270, 2.0
    %v281 = vmul.f32 %v275, 2.0
    %v282 = vsub.f32 %v154, %v278
    %v283 = vsub.f32 %v157, %v279
    %v284 = vsub.f32 %v160, %v280
    %v285 = vsub.f32 %v163, %v281
    %v286 = vadd.f32 %v282, %v180
    %v287 = vadd.f32 %v283, %v180
    %v288 = vadd.f32 %v284, %v180
    %v289 = vadd.f32 %v285, %v180
    %v290 = vsub.f32 0.0, %v286
    %v291 = vsub.f32 0.0, %v287
    %v292 = vsub.f32 0.0, %v288
    %v293 = vsub.f32 0.0, %v289
    %v294 = vsel %vm45, %v290, -inf
    %295 = vmax.xlane.f32.xlu0 %v294
    %v296 = vpop.xlane.xlu0 %295
    %v297 = vsel %vm45, %v291, -inf
    %298 = vmax.xlane.f32.xlu0 %v297
    %v299 = vpop.xlane.xlu0 %298
    %v300 = vsel %vm45, %v292, -inf
    %301 = vmax.xlane.f32.xlu0 %v300
    %v302 = vpop.xlane.xlu0 %301
    %v303 = vsel %vm45, %v293, -inf
    %304 = vmax.xlane.f32.xlu0 %v303
    %v305 = vpop.xlane.xlu0 %304
    %v306 = vlaneseq
    %v307 = vand.u32 %v306, 127
    %vm308 = vcmp.ge.f32.partialorder %v290, %v296
    %vm309 = vcmp.ge.f32.partialorder %v291, %v299
    %vm310 = vcmp.ge.f32.partialorder %v292, %v302
    %vm311 = vcmp.ge.f32.partialorder %v293, %v305
    %v312 = vsel %vm308, %v307, 64
    %v313 = vsel %vm309, %v307, 64
    %v314 = vsel %vm310, %v307, 64
    %v315 = vsel %vm311, %v307, 64
    %v316 = vsel %vm45, %v312, 2147483647
    %v317 = vand.u32 %v316, 65535
    %v318 = vshra.s32 %v316, 16
    %v319 = vcvt.s32.f32 %v317
    %v320 = vcvt.s32.f32 %v318
    %321 = vmin.xlane.f32.xlu0 %v320
    %v322 = vpop.xlane.xlu0 %321
    %vm323 = vcmp.eq.f32.partialorder %v320, %v322
    %v324 = vsel %vm323, %v319, inf
    %325 = vmin.xlane.f32.xlu0 %v324
    %v326 = vpop.xlane.xlu0 %325
    %v327 = vcvt.f32.s32 %v326
    %v328 = vcvt.f32.s32 %v322
    %v329 = vshll.u32 %v328, 16
    %v330 = vadd.s32 %v329, %v327
    %v331 = vsel %vm45, %v313, 2147483647
    %v332 = vand.u32 %v331, 65535
    %v333 = vshra.s32 %v331, 16
    %v334 = vcvt.s32.f32 %v332
    %v335 = vcvt.s32.f32 %v333
    %336 = vmin.xlane.f32.xlu0 %v335
    %v337 = vpop.xlane.xlu0 %336
    %vm338 = vcmp.eq.f32.partialorder %v335, %v337
    %v339 = vsel %vm338, %v334, inf
    %340 = vmin.xlane.f32.xlu0 %v339
    %v341 = vpop.xlane.xlu0 %340
    %v342 = vcvt.f32.s32 %v341
    %v343 = vcvt.f32.s32 %v337
    %v344 = vshll.u32 %v343, 16
    %v345 = vadd.s32 %v344, %v342
    %v346 = vsel %vm45, %v314, 2147483647
    %v347 = vand.u32 %v346, 65535
    %v348 = vshra.s32 %v346, 16
    %v349 = vcvt.s32.f32 %v347
    %v350 = vcvt.s32.f32 %v348
    %351 = vmin.xlane.f32.xlu0 %v350
    %v352 = vpop.xlane.xlu0 %351
    %vm353 = vcmp.eq.f32.partialorder %v350, %v352
    %v354 = vsel %vm353, %v349, inf
    %355 = vmin.xlane.f32.xlu0 %v354
    %v356 = vpop.xlane.xlu0 %355
    %v357 = vcvt.f32.s32 %v356
    %v358 = vcvt.f32.s32 %v352
    %v359 = vshll.u32 %v358, 16
    %v360 = vadd.s32 %v359, %v357
    %v361 = vsel %vm45, %v315, 2147483647
    %v362 = vand.u32 %v361, 65535
    %v363 = vshra.s32 %v361, 16
    %v364 = vcvt.s32.f32 %v362
    %v365 = vcvt.s32.f32 %v363
    %366 = vmin.xlane.f32.xlu0 %v365
    %v367 = vpop.xlane.xlu0 %366
    %vm368 = vcmp.eq.f32.partialorder %v365, %v367
    %v369 = vsel %vm368, %v364, inf
    %370 = vmin.xlane.f32.xlu0 %v369
    %v371 = vpop.xlane.xlu0 %370
    %v372 = vcvt.f32.s32 %v371
    %v373 = vcvt.f32.s32 %v367
    %v374 = vshll.u32 %v373, 16
    %v375 = vadd.s32 %v374, %v372
    %vm376 = vcmp.eq.s32.totalorder %v307, %v330
    %vm377 = vcmp.eq.s32.totalorder %v307, %v345
    %vm378 = vcmp.eq.s32.totalorder %v307, %v360
    %vm379 = vcmp.eq.s32.totalorder %v307, %v375
    %v380 = vsel %vm376, 1, 0
    %v381 = vsel %vm377, 1, 0
    %v382 = vsel %vm378, 1, 0
    %v383 = vsel %vm379, 1, 0
    %v384 = vcvt.s32.f32 %v380
    %v385 = vcvt.s32.f32 %v381
    %v386 = vcvt.s32.f32 %v382
    %v387 = vcvt.s32.f32 %v383
    %v389 = vsel %vm45, %v384, 0
    %v392 = vsel %vm45, %v385, 0
    %v395 = vsel %vm45, %v386, 0
    %v398 = vsel %vm45, %v387, 0
    %v401 = vsel %vm45, %v143, 0
    %v404 = vsel %vm45, %v144, 0
    %v407 = vsel %vm45, %v145, 0
    %v410 = vsel %vm45, %v146, 0
    %412 = vmatprep.subr.mxu0 0.0
    %413 = vmatpush1.xpose.msra.mxu0 %v401
    %414 = vmatprep.subr.mxu0 0.0
    %415 = vmatpush1.xpose.msra.mxu0 %v404
    %416 = vmatprep.subr.mxu0 0.0
    %417 = vmatpush1.xpose.msra.mxu0 %v407
    %418 = vmatprep.subr.mxu0 0.0
    %419 = vmatpush1.xpose.msra.mxu0 %v410
    %420 = vmatprep.subr.mxu0 0.0
    %421 = vmatpush1.xpose.msra.mxu0 0.0
    %422 = vmatprep.subr.mxu0 0.0
    %423 = vmatpush1.xpose.msra.mxu0 0.0
    %424 = vmatprep.subr.mxu0 0.0
    %425 = vmatpush1.xpose.msra.mxu0 0.0
    %426 = vmatprep.subr.mxu0 0.0
    %427 = vmatpush1.xpose.msra.mxu0 0.0
    %428 = vmatprep.subr.mxu0 0.0
    %429 = vmatpush1.xpose.msra.mxu0 0.0
    %430 = vmatprep.subr.mxu0 0.0
    %431 = vmatpush1.xpose.msra.mxu0 0.0
    %432 = vmatprep.subr.mxu0 0.0
    %433 = vmatpush1.xpose.msra.mxu0 0.0
    %434 = vmatprep.subr.mxu0 0.0
    %435 = vmatpush1.xpose.msra.mxu0 0.0
    %436 = vmatprep.subr.mxu0 0.0
    %437 = vmatpush1.xpose.msra.mxu0 0.0
    %438 = vmatprep.subr.mxu0 0.0
    %439 = vmatpush1.xpose.msra.mxu0 0.0
    %440 = vmatprep.subr.mxu0 0.0
    %441 = vmatpush1.xpose.msra.mxu0 0.0
    %442 = vmatprep.subr.mxu0 0.0
    %443 = vmatpush1.xpose.msra.mxu0 0.0
    %444 = vmatprep.subr.mxu0 0.0
    %445 = vmatpush1.xpose.msra.mxu0 0.0
    %446 = vmatprep.subr.mxu0 0.0
    %447 = vmatpush1.xpose.msra.mxu0 0.0
    %448 = vmatprep.subr.mxu0 0.0
    %449 = vmatpush1.xpose.msra.mxu0 0.0
    %450 = vmatprep.subr.mxu0 0.0
    %451 = vmatpush1.xpose.msra.mxu0 0.0
    %452 = vmatprep.subr.mxu0 0.0
    %453 = vmatpush1.xpose.msra.mxu0 0.0
    %454 = vmatprep.subr.mxu0 0.0
    %455 = vmatpush1.xpose.msra.mxu0 0.0
    %456 = vmatprep.subr.mxu0 0.0
    %457 = vmatpush1.xpose.msra.mxu0 0.0
    %458 = vmatprep.subr.mxu0 0.0
    %459 = vmatpush1.xpose.msra.mxu0 0.0
    %460 = vmatprep.subr.mxu0 0.0
    %461 = vmatpush1.xpose.msra.mxu0 0.0
    %462 = vmatprep.subr.mxu0 0.0
    %463 = vmatpush1.xpose.msra.mxu0 0.0
    %464 = vmatprep.subr.mxu0 0.0
    %465 = vmatpush1.xpose.msra.mxu0 0.0
    %466 = vmatprep.subr.mxu0 0.0
    %467 = vmatpush1.xpose.msra.mxu0 0.0
    %468 = vmatprep.subr.mxu0 0.0
    %469 = vmatpush1.xpose.msra.mxu0 0.0
    %470 = vmatprep.subr.mxu0 0.0
    %471 = vmatpush1.xpose.msra.mxu0 0.0
    %472 = vmatprep.subr.mxu0 0.0
    %473 = vmatpush1.xpose.msra.mxu0 0.0
    %474 = vmatprep.subr.mxu0 0.0
    %475 = vmatpush1.xpose.msra.mxu0 0.0
    %476 = vmatprep.mubr.f32.mxu0 0.0
    %477 = vmatmul.mubr.f32.gmra.mrb[0].mxu0 %v389
    %v478 = vpop.f32.mrb[0].mxu0
    %v479 = vadd.f32 0.0, %v478
    %v480 = vpop.f32.mrb[0].mxu0
    %481 = vmatprep.mubr.f32.mxu0 0.0
    %482 = vmatmul.mubr.f32.gmra.mrb[0].mxu0 %v392
    %v483 = vpop.f32.mrb[0].mxu0
    %v484 = vadd.f32 0.0, %v483
    %v485 = vpop.f32.mrb[0].mxu0
    %486 = vmatprep.mubr.f32.mxu0 0.0
    %487 = vmatmul.mubr.f32.gmra.mrb[0].mxu0 %v395
    %v488 = vpop.f32.mrb[0].mxu0
    %v489 = vadd.f32 0.0, %v488
    %v490 = vpop.f32.mrb[0].mxu0
    %491 = vmatprep.mubr.f32.mxu0 0.0
    %492 = vmatmul.mubr.f32.gmra.mrb[0].mxu0 %v398
    %v493 = vpop.f32.mrb[0].mxu0
    %v494 = vadd.f32 0.0, %v493
    %v495 = vpop.f32.mrb[0].mxu0
    %496 = vdwg.mxu0
    %497 = vst.msk [vmem:[%s4] sm:$0xff] %vm151, %v479
    %498 = vst.msk [vmem:[%s4 + $0x8] sm:$0xff] %vm151, %v484
    %499 = vst.msk [vmem:[%s4 + $0x10] sm:$0xff] %vm151, %v489
    %500 = vst.msk [vmem:[%s4 + $0x18] sm:$0xff] %vm151, %v494
    %v501 = vsub.f32 %v479, %v125
    %v502 = vsub.f32 %v484, %v130
    %v503 = vsub.f32 %v489, %v135
    %v504 = vsub.f32 %v494, %v140
    %s505 = smul.u32 0, 32
    %v506 = vlaneseq
    %v507 = vshrl.u32 %v506, 7
    %v508 = vadd.s32 %v507, 8
    %v509 = vadd.s32 %v507, 16
    %v510 = vadd.s32 %v507, 24
    %v511 = vstv %s505
    %v512 = vadd.s32 %v511, %v507
    %v513 = vadd.s32 %v511, %v508
    %v514 = vadd.s32 %v511, %v509
    %v515 = vadd.s32 %v511, %v510
    %vm516 = vcmp.lt.s32.totalorder %v512, 32
    %vm517 = vcmp.lt.s32.totalorder %v513, 32
    %vm518 = vcmp.lt.s32.totalorder %v514, 32
    %vm519 = vcmp.lt.s32.totalorder %v515, 32
    %v520 = vsel %vm516, 1, 0
    %v521 = vsel %vm517, 1, 0
    %v522 = vsel %vm518, 1, 0
    %v523 = vsel %vm519, 1, 0
    %v524 = vcvt.s32.f32 %v520
    %v525 = vcvt.s32.f32 %v521
    %v526 = vcvt.s32.f32 %v522
    %v527 = vcvt.s32.f32 %v523
    %v528 = vld [vmem:[#allocation2] sm:$0x1]
    %v529 = vmul.f32 %v501, %v501
    %v530 = vmul.f32 %v502, %v502
    %v531 = vmul.f32 %v503, %v503
    %v532 = vmul.f32 %v504, %v504
    %v533 = vmul.f32 %v529, %v524
    %v534 = vmul.f32 %v530, %v525
    %v535 = vmul.f32 %v531, %v526
    %v536 = vmul.f32 %v532, %v527
    %v537 = vsel %vm151, %v533, 0.0
    %v538 = vsel %vm151, %v534, 0.0
    %v539 = vadd.f32 %v537, %v538
    %v540 = vsel %vm151, %v535, 0.0
    %v541 = vadd.f32 %v539, %v540
    %v542 = vsel %vm151, %v536, 0.0
    %v543 = vadd.f32 %v541, %v542
    %544 = vadd.xlane.f32.xlu0 %v543
    %v545 = vpop.xlane.xlu0 %544
    %v546 = vrot.slane %v545, 4
    %v547 = vadd.f32 %v545, %v546
    %v548 = vrot.slane %v547, 2
    %v549 = vadd.f32 %v547, %v548
    %v550 = vrot.slane %v549, 1
    %v551 = vadd.f32 %v549, %v550
    %s552 = vtos %v551
    %v553 = vstv %s552
    %v554 = vadd.f32 %v528, %v553
    %vm555 = vcmask 0
    %556 = vst.msk [vmem:[#allocation2] sm:$0x1] %vm555, %v554
    // Predicated region
    $region22: #{hvq_encoder_forward.30} parent=1 // pred_check
      %p557 = pneg %p20
    $region23: #{hvq_encoder_forward.30} parent=1 // pred_check_branch
      %559 = sbr.rel (%p557) target = $region25
    $region24: #{hvq_encoder_forward.30} parent=1 // pred_region
      %v560 = vld [vmem:[#allocation2] sm:$0x1]
      %v561 = vmul.f32 %v560, 0.0009765625
      %562 = vst.msk [vmem:[#allocation3] sm:$0x1] %vm555, %v561
    $region25: #{hvq_encoder_forward.30} parent=1 // pred_fallthru
      _
    // Predicated region
    $region26: #{hvq_encoder_forward.30} parent=1 // pred_check
      _
    $region27: #{hvq_encoder_forward.30} parent=1 // pred_check_branch
      %564 = sbr.rel (0) target = $region29
    $region28: #{hvq_encoder_forward.30} parent=1 // pred_region
      _
    $region29: #{hvq_encoder_forward.30} parent=1 // pred_fallthru
      _
    // Predicated region
    $region30: #{hvq_encoder_forward.30} parent=1 // pred_check
      _
    $region31: #{hvq_encoder_forward.30} parent=1 // pred_check_branch
      %566 = sbr.rel (0) target = $region33
    $region32: #{hvq_encoder_forward.30} parent=1 // pred_region
      %s568 = ssub.s32 16, 16
      %569 = vsyncadd [#allocation4], %s568
      %s571 = sshll.u32 [#allocation3], 4
      %s572 = int_to_ptr.vmem [resolvable:$true] %s571
      %574 = dma.vmem_to_hbm [thread:$0]  %s572, 16, %s5, [#allocation4]
    $region33: #{hvq_encoder_forward.30} parent=1 // pred_fallthru
      _
    // Predicated region
    $region34: #{hvq_encoder_forward.30} parent=1 // pred_check
      _
    $region35: #{hvq_encoder_forward.30} parent=1 // pred_check_branch
      %576 = sbr.rel (0) target = $region37
    $region36: #{hvq_encoder_forward.30} parent=1 // pred_region
      _
    $region37: #{hvq_encoder_forward.30} parent=1 // pred_fallthru
      _
    // Predicated region
    $region38: #{hvq_encoder_forward.30} parent=1 // pred_check
      _
    $region39: #{hvq_encoder_forward.30} parent=1 // pred_check_branch
      %578 = sbr.rel (0) target = $region41
    $region40: #{hvq_encoder_forward.30} parent=1 // pred_region
      %579 = dma.done [#allocation4], 16
    $region41: #{hvq_encoder_forward.30} parent=1 // pred_fallthru
      _
    %580 = vsyncpa [#allocation4], 1

</llo_original>
